<compile_context>
chip_gen: v6e
topology: v6e:2x2x1
jax: 0.10.0
libtpu: 0.0.40
codegen_flags: <defaults>
</compile_context>

<pallas_src>
import functools

import jax
import jax.numpy as jnp
from jax.experimental import pallas as pl
from jax.experimental.pallas import tpu as pltpu


# -----------------------------------------------------------------------------
# Fused Pallas kernel (pnt_layer + max-pool + conv_net stand-in + pool_layer +
# weighted avg pool + L2 normalizations)
# -----------------------------------------------------------------------------
def mini_spin_kernel(
    pts_ref,      # (3, rad_n*S, K*HW)  VMEM: pts[i, r*S+s, k*HW+hw]
    wb_pnt_ref,   # (4, 16)             SMEM: rows 0..2 = fused 3->16 weight, row 3 = bias
    w_cnet_ref,   # (32, Cin)           VMEM: conv_net stand-in weight (out x in), Cin=rad_n*16
    w_pool1_ref,  # (16, 32)            VMEM: pool_layer conv1 weight (out x in)
    aux_ref,      # (32, 4)             VMEM: [:,0]=b_cnet, [:16,1]=b_pool1, [:16,2]=w_pool2, [0,3]=b_pool2
    equi_ref,     # (32, K*HW)          out (lane-dense channels-first slab)
    desc_ref,     # (32, K)             out
    feat_scr,     # (Cin, K*HW)         VMEM scratch
    *, rad_n, S, K, HW,
):
    KHW = K * HW

    # ---- Stage 1: pnt_layer (1x1 conv 3->16, BN folded, ReLU) + max over voxel samples.
    # Scalar weights come from SMEM; each (c, r) pair works on a lane-dense (S, K*HW)
    # plane and reduces over the voxel-sample axis (sublanes).
    # NOTE: like the reference, the max-pool runs over *all* voxel samples, including
    # zero-padded out-of-radius points produced by the sphere_query stand-in.
    for r in range(rad_n):
        x0 = pts_ref[0, r * S:(r + 1) * S, :]            # (S, KHW)
        x1 = pts_ref[1, r * S:(r + 1) * S, :]
        x2 = pts_ref[2, r * S:(r + 1) * S, :]
        for c in range(16):
            h = jnp.maximum(
                wb_pnt_ref[0, c] * x0
                + wb_pnt_ref[1, c] * x1
                + wb_pnt_ref[2, c] * x2
                + wb_pnt_ref[3, c], 0.0)                 # (S, KHW)
            row = r * 16 + c                             # channel order matches torch view: r*16+c
            feat_scr[row:row + 1, :] = jnp.max(h, axis=0, keepdims=True)

    # ---- Stage 2: head, batched over all K*HW keypoint-bins in one shot.
    x = feat_scr[...]                                    # (Cin, KHW)
    b_cnet = aux_ref[:, 0:1]                             # (32, 1)
    b_pool1 = aux_ref[0:16, 1:2]                         # (16, 1)
    w_pool2 = aux_ref[0:16, 2:3]                         # (16, 1)
    b_pool2 = aux_ref[0:1, 3:4]                          # (1, 1)

    # TODO(synk): pn.Cylindrical_Net source unavailable; stand-in is a fused 1x1 conv
    # (rad_n*16 -> 32) + ReLU preserving the (K, 32, ele_n, azi_n) output contract.
    h = jnp.maximum(
        jnp.dot(w_cnet_ref[...], x, preferred_element_type=jnp.float32) + b_cnet, 0.0)     # (32, KHW)
    # pool_layer: conv 32->16 (+BN+ReLU) then conv 16->1 (+BN+ReLU)
    g = jnp.maximum(
        jnp.dot(w_pool1_ref[...], h, preferred_element_type=jnp.float32) + b_pool1, 0.0)   # (16, KHW)
    wgt = jnp.maximum(jnp.sum(g * w_pool2, axis=0, keepdims=True) + b_pool2, 0.0)          # (1, KHW)

    # equi = F.normalize(h, p=2, dim=channel); channel axis is the sublane axis here.
    ssq = jnp.sum(h * h, axis=0, keepdims=True)                                            # (1, KHW)
    equi_ref[...] = h * jax.lax.rsqrt(jnp.maximum(ssq, 1e-24))

    # desc: avg_pool2d(h * w) over the HW bins of each keypoint, as one MXU matmul
    # against a block-diagonal averaging matrix, then per-keypoint L2 normalize.
    n_idx = jax.lax.broadcasted_iota(jnp.int32, (KHW, K), 0)
    k_idx = jax.lax.broadcasted_iota(jnp.int32, (KHW, K), 1)
    pool = jnp.where((n_idx >= k_idx * HW) & (n_idx < (k_idx + 1) * HW),
                     1.0 / HW, 0.0).astype(jnp.float32)                                    # (KHW, K)
    f = jnp.dot(h * wgt, pool, preferred_element_type=jnp.float32)                         # (32, K)
    fsq = jnp.sum(f * f, axis=0, keepdims=True)                                            # (1, K)
    desc_ref[...] = f * jax.lax.rsqrt(jnp.maximum(fsq, 1e-24))


def mini_spin_fused_pallas(pts_cl, wb_pnt, w_cnet_t, w_pool1_t, aux, *, rad_n, S, K, HW):
    KHW = K * HW
    Cin = rad_n * 16
    kernel = functools.partial(mini_spin_kernel, rad_n=rad_n, S=S, K=K, HW=HW)
    return pl.pallas_call(
        kernel,
        out_shape=(jax.ShapeDtypeStruct((32, KHW), jnp.float32),   # equi (channels-first slab)
                   jax.ShapeDtypeStruct((32, K), jnp.float32)),    # desc
        in_specs=[
            pl.BlockSpec(memory_space=pltpu.MemorySpace.VMEM),     # points slab
            pl.BlockSpec(memory_space=pltpu.MemorySpace.SMEM),     # pnt-layer weights (scalars)
            pl.BlockSpec(memory_space=pltpu.MemorySpace.VMEM),     # conv_net stand-in weight
            pl.BlockSpec(memory_space=pltpu.MemorySpace.VMEM),     # pool_layer conv1 weight
            pl.BlockSpec(memory_space=pltpu.MemorySpace.VMEM),     # packed small vectors
        ],
        out_specs=(pl.BlockSpec(memory_space=pltpu.MemorySpace.VMEM),
                   pl.BlockSpec(memory_space=pltpu.MemorySpace.VMEM)),
        scratch_shapes=[pltpu.VMEM((Cin, KHW), jnp.float32)],
    )(pts_cl, wb_pnt, w_cnet_t, w_pool1_t, aux)


# -----------------------------------------------------------------------------
# Plain-JAX glue (preprocessing / parameter setup)
# -----------------------------------------------------------------------------
def fuse_conv_bn(w, b, gamma, beta, mean, var, eps=1e-5):
    """Fold eval-mode BatchNorm into a (Cin, Cout) 1x1-conv weight/bias."""
    scale = gamma / jnp.sqrt(var + eps)
    return w * scale[None, :], b * scale + (beta - mean * scale)


def init_params(key, rad_n):
    ks = jax.random.split(key, 4)
    bn = lambda c: (jnp.ones(c, jnp.float32), jnp.zeros(c, jnp.float32),
                    jnp.zeros(c, jnp.float32), jnp.ones(c, jnp.float32))
    p = {}
    p["w_pnt"] = 0.1 * jax.random.normal(ks[0], (3, 16), jnp.float32)
    p["b_pnt"] = jnp.zeros((16,), jnp.float32)
    p["bn_pnt"] = bn(16)
    p["w_cnet"] = 0.1 * jax.random.normal(ks[1], (16 * rad_n, 32), jnp.float32)
    p["b_cnet"] = jnp.zeros((32,), jnp.float32)
    p["w_pool1"] = 0.1 * jax.random.normal(ks[2], (32, 16), jnp.float32)
    p["b_pool1"] = jnp.zeros((16,), jnp.float32)
    p["bn_pool1"] = bn(16)
    p["w_pool2"] = 0.1 * jax.random.normal(ks[3], (16, 1), jnp.float32)
    p["b_pool2"] = jnp.zeros((1,), jnp.float32)
    p["bn_pool2"] = bn(1)
    return p


def select_patches(pts, kpts, vicinity, patch_sample):
    """Simplified ball-query + grouping (pnt2.ball_query / grouping_operation stand-in)."""
    # TODO(synk): pnt2.ball_query/grouping_operation are CUDA extensions; approximated
    # with a nearest-neighbor gather + radius mask in plain JAX (data-dependent gather).
    B, N, _ = pts.shape
    K = kpts.shape[1]
    d2 = jnp.sum((kpts[:, :, None, :] - pts[:, None, :, :]) ** 2, axis=-1)   # (B, K, N)
    neg, idx = jax.lax.top_k(-d2, patch_sample)                              # (B, K, P)
    pts_b = jnp.broadcast_to(pts[:, None, :, :], (B, K, N, 3))
    idx_b = jnp.broadcast_to(idx[..., None], (B, K, patch_sample, 3))
    gathered = jnp.take_along_axis(pts_b, idx_b, axis=2)                     # (B, K, P, 3)
    inside = (-neg) <= vicinity * vicinity
    kp = jnp.broadcast_to(kpts[:, :, None, :], gathered.shape)
    patches = jnp.where(inside[..., None], gathered, kp)
    # reference code forces the last slot to be the keypoint itself (used as the center)
    patches = patches.at[:, :, -1, :].set(kpts)
    return patches


def get_voxel_coordinate(radius, rad_n, azi_n, ele_n):
    # TODO(synk): utils.common.get_voxel_coordinate not available; reasonable spherical grid.
    r = (jnp.arange(rad_n, dtype=jnp.float32) + 0.5) / rad_n * radius
    ele = (jnp.arange(ele_n, dtype=jnp.float32) + 0.5) / ele_n * jnp.pi - jnp.pi / 2
    azi = jnp.arange(azi_n, dtype=jnp.float32) / azi_n * 2.0 * jnp.pi
    R, E, A = jnp.meshgrid(r, ele, azi, indexing="ij")
    xyz = jnp.stack([R * jnp.cos(E) * jnp.cos(A),
                     R * jnp.cos(E) * jnp.sin(A),
                     R * jnp.sin(E)], axis=-1)
    return xyz.reshape(-1, 3)                                                # (rad*ele*azi, 3)


def sphere_query(delta_x, centers, radius, nsample):
    """For each voxel center, gather up to nsample relative points within radius."""
    # TODO(synk): utils.common.sphere_query unavailable; top-k nearest + radius mask, and
    # the gather itself is still plain JAX (could be pulled into the Pallas kernel via
    # PrefetchScalarGridSpec-prefetched indices to avoid materializing (K,V,S,3) in HBM).
    K, P, _ = delta_x.shape
    V = centers.shape[0]
    diff = delta_x[:, None, :, :] - centers[None, :, None, :]                # (K, V, P, 3)
    d2 = jnp.sum(diff * diff, axis=-1)                                       # (K, V, P)
    neg, idx = jax.lax.top_k(-d2, nsample)                                   # (K, V, ns)
    idx_b = jnp.broadcast_to(idx[..., None], (K, V, nsample, 3))
    sel = jnp.take_along_axis(diff, idx_b, axis=2)                           # (K, V, ns, 3)
    inside = ((-neg) <= radius * radius).astype(sel.dtype)
    return sel * inside[..., None]


def mini_spin_net_forward(params, pts, kpts, des_r, cfg):
    rad_n, ele_n, azi_n = cfg["rad_n"], cfg["ele_n"], cfg["azi_n"]
    patch_sample, voxel_sample, delta = cfg["patch_sample"], cfg["voxel_sample"], cfg["delta"]
    HW = ele_n * azi_n
    S = voxel_sample

    # ---- preprocessing glue (select_patches / axis_align / normalize / SPT) ----
    init_patch = select_patches(pts, kpts, des_r, patch_sample)[0]           # (K, P, 3)
    K = init_patch.shape[0]
    # axis_align: is_aligned_to_global_z=True branch (R = I, rand_axis = e_x)
    center = init_patch[:, -1, :3]
    patches = init_patch - center[:, None, :]
    rand_axis = jnp.tile(jnp.array([[1.0, 0.0, 0.0]], jnp.float32), (K, 1))
    R = jnp.tile(jnp.eye(3, dtype=jnp.float32)[None], (K, 1, 1))
    patches = patches / des_r                                                # normalize()
    aug_rotation = jnp.tile(jnp.eye(3, dtype=jnp.float32)[None], (K, 1, 1))  # is_aug=False
    patches = patches @ jnp.transpose(aug_rotation, (0, 2, 1))
    rand_axis = jnp.squeeze(rand_axis[:, None, :] @ jnp.transpose(aug_rotation, (0, 2, 1)), 1)
    # SPT
    centers = get_voxel_coordinate(1.0, rad_n, azi_n, ele_n)
    new_points = sphere_query(patches, centers, delta / rad_n, voxel_sample) # (K, V, S, 3)
    # TODO(synk): utils.common.var_to_invar (azimuthal re-alignment) not available; identity.

    # ---- layout plumbing: channels-planar, lane-dense slab for the fused kernel ----
    # pts_cl[i, r*S + s, k*HW + hw] = new_points[k, r*HW + hw, s, i]
    pts_cl = new_points.reshape(K, rad_n, HW, S, 3)
    pts_cl = jnp.transpose(pts_cl, (4, 1, 3, 0, 2)).reshape(3, rad_n * S, K * HW)

    # ---- BN-folded / packed weights ----
    w1, b1 = fuse_conv_bn(params["w_pnt"], params["b_pnt"], *params["bn_pnt"])
    wb_pnt = jnp.concatenate([w1, b1[None, :]], axis=0)                      # (4, 16) SMEM slab
    wa, ba = fuse_conv_bn(params["w_pool1"], params["b_pool1"], *params["bn_pool1"])
    wc, bc = fuse_conv_bn(params["w_pool2"], params["b_pool2"], *params["bn_pool2"])
    w_cnet_t = params["w_cnet"].T                                            # (32, rad_n*16)
    w_pool1_t = wa.T                                                         # (16, 32)
    aux = jnp.zeros((32, 4), jnp.float32)
    aux = aux.at[:, 0].set(params["b_cnet"])
    aux = aux.at[:16, 1].set(ba)
    aux = aux.at[:16, 2].set(wc[:, 0])
    aux = aux.at[0, 3].set(bc[0])

    # ---- fused Pallas hot path (single grid step, everything stays in VMEM) ----
    equi_cl, desc_cl = mini_spin_fused_pallas(
        pts_cl, wb_pnt, w_cnet_t, w_pool1_t, aux, rad_n=rad_n, S=S, K=K, HW=HW)

    desc = desc_cl.T                                                         # (K, 32)
    equi = jnp.transpose(equi_cl.reshape(32, K, ele_n, azi_n), (1, 0, 2, 3)) # NCHW like torch

    return {"desc": desc, "equi": equi, "rand_axis": rand_axis, "R": R,
            "patches": patches, "aug_rotation": aug_rotation}


# -----------------------------------------------------------------------------
if __name__ == "__main__":
    key = jax.random.PRNGKey(0)
    k_pts, k_param = jax.random.split(key)

    cfg = dict(rad_n=2, ele_n=4, azi_n=8, patch_sample=64, voxel_sample=16, delta=0.8)
    pts = jax.random.uniform(k_pts, (1, 256, 3), jnp.float32, minval=-1.0, maxval=1.0)
    kpts = pts[:, :8, :]                       # 8 keypoints taken from the cloud
    params = init_params(k_param, cfg["rad_n"])

    fwd = jax.jit(functools.partial(mini_spin_net_forward, des_r=1.0, cfg=cfg))
    out = fwd(params, pts, kpts)
    jax.block_until_ready(out)

    assert out["desc"].shape == (8, 32)
    assert out["equi"].shape == (8, 32, cfg["ele_n"], cfg["azi_n"])
    print("KERNEL_OK")
</pallas_src>

<mosaic_0001>
module attributes {stable_mosaic.version = 11 : i64} {
  func.func @mini_spin_kernel(%arg0: memref<3x32x256xf32, #tpu.memory_space<vmem>>, %arg1: memref<4x16xf32, #tpu.memory_space<smem>>, %arg2: memref<32x32xf32, #tpu.memory_space<vmem>>, %arg3: memref<16x32xf32, #tpu.memory_space<vmem>>, %arg4: memref<32x4xf32, #tpu.memory_space<vmem>>, %arg5: memref<32x256xf32, #tpu.memory_space<vmem>>, %arg6: memref<32x8xf32, #tpu.memory_space<vmem>>, %arg7: memref<32x256xf32, #tpu.memory_space<vmem>>) attributes {dimension_semantics = [], scalar_prefetch = 0 : i64, scratch_operands = 1 : i64, tpu.core_type = #tpu.core_type<tc>} {
    %c0 = arith.constant 0 : index
    %c0_0 = arith.constant 0 : index
    %c0_1 = arith.constant 0 : index
    %0 = vector.load %arg0[%c0, %c0_0, %c0_1] : memref<3x32x256xf32, #tpu.memory_space<vmem>>, vector<1x16x256xf32>
    %1 = vector.shape_cast %0 : vector<1x16x256xf32> to vector<16x256xf32>
    %c1 = arith.constant 1 : index
    %c0_2 = arith.constant 0 : index
    %c0_3 = arith.constant 0 : index
    %2 = vector.load %arg0[%c1, %c0_2, %c0_3] : memref<3x32x256xf32, #tpu.memory_space<vmem>>, vector<1x16x256xf32>
    %3 = vector.shape_cast %2 : vector<1x16x256xf32> to vector<16x256xf32>
    %c2 = arith.constant 2 : index
    %c0_4 = arith.constant 0 : index
    %c0_5 = arith.constant 0 : index
    %4 = vector.load %arg0[%c2, %c0_4, %c0_5] : memref<3x32x256xf32, #tpu.memory_space<vmem>>, vector<1x16x256xf32>
    %5 = vector.shape_cast %4 : vector<1x16x256xf32> to vector<16x256xf32>
    %c0_6 = arith.constant 0 : index
    %c0_7 = arith.constant 0 : index
    %6 = memref.load %arg1[%c0_6, %c0_7] : memref<4x16xf32, #tpu.memory_space<smem>>
    %7 = vector.broadcast %6 : f32 to vector<16x256xf32>
    %8 = arith.mulf %7, %1 : vector<16x256xf32>
    %c1_8 = arith.constant 1 : index
    %c0_9 = arith.constant 0 : index
    %9 = memref.load %arg1[%c1_8, %c0_9] : memref<4x16xf32, #tpu.memory_space<smem>>
    %10 = vector.broadcast %9 : f32 to vector<16x256xf32>
    %11 = arith.mulf %10, %3 : vector<16x256xf32>
    %12 = arith.addf %8, %11 : vector<16x256xf32>
    %c2_10 = arith.constant 2 : index
    %c0_11 = arith.constant 0 : index
    %13 = memref.load %arg1[%c2_10, %c0_11] : memref<4x16xf32, #tpu.memory_space<smem>>
    %14 = vector.broadcast %13 : f32 to vector<16x256xf32>
    %15 = arith.mulf %14, %5 : vector<16x256xf32>
    %16 = arith.addf %12, %15 : vector<16x256xf32>
    %c3 = arith.constant 3 : index
    %c0_12 = arith.constant 0 : index
    %17 = memref.load %arg1[%c3, %c0_12] : memref<4x16xf32, #tpu.memory_space<smem>>
    %18 = vector.broadcast %17 : f32 to vector<16x256xf32>
    %19 = arith.addf %16, %18 : vector<16x256xf32>
    %cst = arith.constant 0.000000e+00 : f32
    %20 = vector.broadcast %cst : f32 to vector<16x256xf32>
    %21 = arith.maximumf %19, %20 : vector<16x256xf32>
    %cst_13 = arith.constant dense<0xFF800000> : vector<256xf32>
    %22 = vector.multi_reduction <maximumf>, %21, %cst_13 [0] : vector<16x256xf32> to vector<256xf32>
    %23 = vector.shape_cast %22 : vector<256xf32> to vector<1x256xf32>
    %c0_14 = arith.constant 0 : index
    %c0_15 = arith.constant 0 : index
    %24 = vector.load %arg7[%c0_14, %c0_15] : memref<32x256xf32, #tpu.memory_space<vmem>>, vector<1x256xf32>
    tpu.vector_store %arg7[%c0_14, %c0_15], %23 {strides = array<i32>} : memref<32x256xf32, #tpu.memory_space<vmem>>, vector<1x256xf32>,
    %c0_16 = arith.constant 0 : index
    %c1_17 = arith.constant 1 : index
    %25 = memref.load %arg1[%c0_16, %c1_17] : memref<4x16xf32, #tpu.memory_space<smem>>
    %26 = vector.broadcast %25 : f32 to vector<16x256xf32>
    %27 = arith.mulf %26, %1 : vector<16x256xf32>
    %c1_18 = arith.constant 1 : index
    %c1_19 = arith.constant 1 : index
    %28 = memref.load %arg1[%c1_18, %c1_19] : memref<4x16xf32, #tpu.memory_space<smem>>
    %29 = vector.broadcast %28 : f32 to vector<16x256xf32>
    %30 = arith.mulf %29, %3 : vector<16x256xf32>
    %31 = arith.addf %27, %30 : vector<16x256xf32>
    %c2_20 = arith.constant 2 : index
    %c1_21 = arith.constant 1 : index
    %32 = memref.load %arg1[%c2_20, %c1_21] : memref<4x16xf32, #tpu.memory_space<smem>>
    %33 = vector.broadcast %32 : f32 to vector<16x256xf32>
    %34 = arith.mulf %33, %5 : vector<16x256xf32>
    %35 = arith.addf %31, %34 : vector<16x256xf32>
    %c3_22 = arith.constant 3 : index
    %c1_23 = arith.constant 1 : index
    %36 = memref.load %arg1[%c3_22, %c1_23] : memref<4x16xf32, #tpu.memory_space<smem>>
    %37 = vector.broadcast %36 : f32 to vector<16x256xf32>
    %38 = arith.addf %35, %37 : vector<16x256xf32>
    %cst_24 = arith.constant 0.000000e+00 : f32
    %39 = vector.broadcast %cst_24 : f32 to vector<16x256xf32>
    %40 = arith.maximumf %38, %39 : vector<16x256xf32>
    %cst_25 = arith.constant dense<0xFF800000> : vector<256xf32>
    %41 = vector.multi_reduction <maximumf>, %40, %cst_25 [0] : vector<16x256xf32> to vector<256xf32>
    %42 = vector.shape_cast %41 : vector<256xf32> to vector<1x256xf32>
    %c1_26 = arith.constant 1 : index
    %c0_27 = arith.constant 0 : index
    %43 = vector.load %arg7[%c1_26, %c0_27] : memref<32x256xf32, #tpu.memory_space<vmem>>, vector<1x256xf32>
    tpu.vector_store %arg7[%c1_26, %c0_27], %42 {strides = array<i32>} : memref<32x256xf32, #tpu.memory_space<vmem>>, vector<1x256xf32>,
    %c0_28 = arith.constant 0 : index
    %c2_29 = arith.constant 2 : index
    %44 = memref.load %arg1[%c0_28, %c2_29] : memref<4x16xf32, #tpu.memory_space<smem>>
    %45 = vector.broadcast %44 : f32 to vector<16x256xf32>
    %46 = arith.mulf %45, %1 : vector<16x256xf32>
    %c1_30 = arith.constant 1 : index
    %c2_31 = arith.constant 2 : index
    %47 = memref.load %arg1[%c1_30, %c2_31] : memref<4x16xf32, #tpu.memory_space<smem>>
    %48 = vector.broadcast %47 : f32 to vector<16x256xf32>
    %49 = arith.mulf %48, %3 : vector<16x256xf32>
    %50 = arith.addf %46, %49 : vector<16x256xf32>
    %c2_32 = arith.constant 2 : index
    %c2_33 = arith.constant 2 : index
    %51 = memref.load %arg1[%c2_32, %c2_33] : memref<4x16xf32, #tpu.memory_space<smem>>
    %52 = vector.broadcast %51 : f32 to vector<16x256xf32>
    %53 = arith.mulf %52, %5 : vector<16x256xf32>
    %54 = arith.addf %50, %53 : vector<16x256xf32>
    %c3_34 = arith.constant 3 : index
    %c2_35 = arith.constant 2 : index
    %55 = memref.load %arg1[%c3_34, %c2_35] : memref<4x16xf32, #tpu.memory_space<smem>>
    %56 = vector.broadcast %55 : f32 to vector<16x256xf32>
    %57 = arith.addf %54, %56 : vector<16x256xf32>
    %cst_36 = arith.constant 0.000000e+00 : f32
    %58 = vector.broadcast %cst_36 : f32 to vector<16x256xf32>
    %59 = arith.maximumf %57, %58 : vector<16x256xf32>
    %cst_37 = arith.constant dense<0xFF800000> : vector<256xf32>
    %60 = vector.multi_reduction <maximumf>, %59, %cst_37 [0] : vector<16x256xf32> to vector<256xf32>
    %61 = vector.shape_cast %60 : vector<256xf32> to vector<1x256xf32>
    %c2_38 = arith.constant 2 : index
    %c0_39 = arith.constant 0 : index
    %62 = vector.load %arg7[%c2_38, %c0_39] : memref<32x256xf32, #tpu.memory_space<vmem>>, vector<1x256xf32>
    tpu.vector_store %arg7[%c2_38, %c0_39], %61 {strides = array<i32>} : memref<32x256xf32, #tpu.memory_space<vmem>>, vector<1x256xf32>,
    %c0_40 = arith.constant 0 : index
    %c3_41 = arith.constant 3 : index
    %63 = memref.load %arg1[%c0_40, %c3_41] : memref<4x16xf32, #tpu.memory_space<smem>>
    %64 = vector.broadcast %63 : f32 to vector<16x256xf32>
    %65 = arith.mulf %64, %1 : vector<16x256xf32>
    %c1_42 = arith.constant 1 : index
    %c3_43 = arith.constant 3 : index
    %66 = memref.load %arg1[%c1_42, %c3_43] : memref<4x16xf32, #tpu.memory_space<smem>>
    %67 = vector.broadcast %66 : f32 to vector<16x256xf32>
    %68 = arith.mulf %67, %3 : vector<16x256xf32>
    %69 = arith.addf %65, %68 : vector<16x256xf32>
    %c2_44 = arith.constant 2 : index
    %c3_45 = arith.constant 3 : index
    %70 = memref.load %arg1[%c2_44, %c3_45] : memref<4x16xf32, #tpu.memory_space<smem>>
    %71 = vector.broadcast %70 : f32 to vector<16x256xf32>
    %72 = arith.mulf %71, %5 : vector<16x256xf32>
    %73 = arith.addf %69, %72 : vector<16x256xf32>
    %c3_46 = arith.constant 3 : index
    %c3_47 = arith.constant 3 : index
    %74 = memref.load %arg1[%c3_46, %c3_47] : memref<4x16xf32, #tpu.memory_space<smem>>
    %75 = vector.broadcast %74 : f32 to vector<16x256xf32>
    %76 = arith.addf %73, %75 : vector<16x256xf32>
    %cst_48 = arith.constant 0.000000e+00 : f32
    %77 = vector.broadcast %cst_48 : f32 to vector<16x256xf32>
    %78 = arith.maximumf %76, %77 : vector<16x256xf32>
    %cst_49 = arith.constant dense<0xFF800000> : vector<256xf32>
    %79 = vector.multi_reduction <maximumf>, %78, %cst_49 [0] : vector<16x256xf32> to vector<256xf32>
    %80 = vector.shape_cast %79 : vector<256xf32> to vector<1x256xf32>
    %c3_50 = arith.constant 3 : index
    %c0_51 = arith.constant 0 : index
    %81 = vector.load %arg7[%c3_50, %c0_51] : memref<32x256xf32, #tpu.memory_space<vmem>>, vector<1x256xf32>
    tpu.vector_store %arg7[%c3_50, %c0_51], %80 {strides = array<i32>} : memref<32x256xf32, #tpu.memory_space<vmem>>, vector<1x256xf32>,
    %c0_52 = arith.constant 0 : index
    %c4 = arith.constant 4 : index
    %82 = memref.load %arg1[%c0_52, %c4] : memref<4x16xf32, #tpu.memory_space<smem>>
    %83 = vector.broadcast %82 : f32 to vector<16x256xf32>
    %84 = arith.mulf %83, %1 : vector<16x256xf32>
    %c1_53 = arith.constant 1 : index
    %c4_54 = arith.constant 4 : index
    %85 = memref.load %arg1[%c1_53, %c4_54] : memref<4x16xf32, #tpu.memory_space<smem>>
    %86 = vector.broadcast %85 : f32 to vector<16x256xf32>
    %87 = arith.mulf %86, %3 : vector<16x256xf32>
    %88 = arith.addf %84, %87 : vector<16x256xf32>
    %c2_55 = arith.constant 2 : index
    %c4_56 = arith.constant 4 : index
    %89 = memref.load %arg1[%c2_55, %c4_56] : memref<4x16xf32, #tpu.memory_space<smem>>
    %90 = vector.broadcast %89 : f32 to vector<16x256xf32>
    %91 = arith.mulf %90, %5 : vector<16x256xf32>
    %92 = arith.addf %88, %91 : vector<16x256xf32>
    %c3_57 = arith.constant 3 : index
    %c4_58 = arith.constant 4 : index
    %93 = memref.load %arg1[%c3_57, %c4_58] : memref<4x16xf32, #tpu.memory_space<smem>>
    %94 = vector.broadcast %93 : f32 to vector<16x256xf32>
    %95 = arith.addf %92, %94 : vector<16x256xf32>
    %cst_59 = arith.constant 0.000000e+00 : f32
    %96 = vector.broadcast %cst_59 : f32 to vector<16x256xf32>
    %97 = arith.maximumf %95, %96 : vector<16x256xf32>
    %cst_60 = arith.constant dense<0xFF800000> : vector<256xf32>
    %98 = vector.multi_reduction <maximumf>, %97, %cst_60 [0] : vector<16x256xf32> to vector<256xf32>
    %99 = vector.shape_cast %98 : vector<256xf32> to vector<1x256xf32>
    %c4_61 = arith.constant 4 : index
    %c0_62 = arith.constant 0 : index
    %100 = vector.load %arg7[%c4_61, %c0_62] : memref<32x256xf32, #tpu.memory_space<vmem>>, vector<1x256xf32>
    tpu.vector_store %arg7[%c4_61, %c0_62], %99 {strides = array<i32>} : memref<32x256xf32, #tpu.memory_space<vmem>>, vector<1x256xf32>,
    %c0_63 = arith.constant 0 : index
    %c5 = arith.constant 5 : index
    %101 = memref.load %arg1[%c0_63, %c5] : memref<4x16xf32, #tpu.memory_space<smem>>
    %102 = vector.broadcast %101 : f32 to vector<16x256xf32>
    %103 = arith.mulf %102, %1 : vector<16x256xf32>
    %c1_64 = arith.constant 1 : index
    %c5_65 = arith.constant 5 : index
    %104 = memref.load %arg1[%c1_64, %c5_65] : memref<4x16xf32, #tpu.memory_space<smem>>
    %105 = vector.broadcast %104 : f32 to vector<16x256xf32>
    %106 = arith.mulf %105, %3 : vector<16x256xf32>
    %107 = arith.addf %103, %106 : vector<16x256xf32>
    %c2_66 = arith.constant 2 : index
    %c5_67 = arith.constant 5 : index
    %108 = memref.load %arg1[%c2_66, %c5_67] : memref<4x16xf32, #tpu.memory_space<smem>>
    %109 = vector.broadcast %108 : f32 to vector<16x256xf32>
    %110 = arith.mulf %109, %5 : vector<16x256xf32>
    %111 = arith.addf %107, %110 : vector<16x256xf32>
    %c3_68 = arith.constant 3 : index
    %c5_69 = arith.constant 5 : index
    %112 = memref.load %arg1[%c3_68, %c5_69] : memref<4x16xf32, #tpu.memory_space<smem>>
    %113 = vector.broadcast %112 : f32 to vector<16x256xf32>
    %114 = arith.addf %111, %113 : vector<16x256xf32>
    %cst_70 = arith.constant 0.000000e+00 : f32
    %115 = vector.broadcast %cst_70 : f32 to vector<16x256xf32>
    %116 = arith.maximumf %114, %115 : vector<16x256xf32>
    %cst_71 = arith.constant dense<0xFF800000> : vector<256xf32>
    %117 = vector.multi_reduction <maximumf>, %116, %cst_71 [0] : vector<16x256xf32> to vector<256xf32>
    %118 = vector.shape_cast %117 : vector<256xf32> to vector<1x256xf32>
    %c5_72 = arith.constant 5 : index
    %c0_73 = arith.constant 0 : index
    %119 = vector.load %arg7[%c5_72, %c0_73] : memref<32x256xf32, #tpu.memory_space<vmem>>, vector<1x256xf32>
    tpu.vector_store %arg7[%c5_72, %c0_73], %118 {strides = array<i32>} : memref<32x256xf32, #tpu.memory_space<vmem>>, vector<1x256xf32>,
    %c0_74 = arith.constant 0 : index
    %c6 = arith.constant 6 : index
    %120 = memref.load %arg1[%c0_74, %c6] : memref<4x16xf32, #tpu.memory_space<smem>>
    %121 = vector.broadcast %120 : f32 to vector<16x256xf32>
    %122 = arith.mulf %121, %1 : vector<16x256xf32>
    %c1_75 = arith.constant 1 : index
    %c6_76 = arith.constant 6 : index
    %123 = memref.load %arg1[%c1_75, %c6_76] : memref<4x16xf32, #tpu.memory_space<smem>>
    %124 = vector.broadcast %123 : f32 to vector<16x256xf32>
    %125 = arith.mulf %124, %3 : vector<16x256xf32>
    %126 = arith.addf %122, %125 : vector<16x256xf32>
    %c2_77 = arith.constant 2 : index
    %c6_78 = arith.constant 6 : index
    %127 = memref.load %arg1[%c2_77, %c6_78] : memref<4x16xf32, #tpu.memory_space<smem>>
    %128 = vector.broadcast %127 : f32 to vector<16x256xf32>
    %129 = arith.mulf %128, %5 : vector<16x256xf32>
    %130 = arith.addf %126, %129 : vector<16x256xf32>
    %c3_79 = arith.constant 3 : index
    %c6_80 = arith.constant 6 : index
    %131 = memref.load %arg1[%c3_79, %c6_80] : memref<4x16xf32, #tpu.memory_space<smem>>
    %132 = vector.broadcast %131 : f32 to vector<16x256xf32>
    %133 = arith.addf %130, %132 : vector<16x256xf32>
    %cst_81 = arith.constant 0.000000e+00 : f32
    %134 = vector.broadcast %cst_81 : f32 to vector<16x256xf32>
    %135 = arith.maximumf %133, %134 : vector<16x256xf32>
    %cst_82 = arith.constant dense<0xFF800000> : vector<256xf32>
    %136 = vector.multi_reduction <maximumf>, %135, %cst_82 [0] : vector<16x256xf32> to vector<256xf32>
    %137 = vector.shape_cast %136 : vector<256xf32> to vector<1x256xf32>
    %c6_83 = arith.constant 6 : index
    %c0_84 = arith.constant 0 : index
    %138 = vector.load %arg7[%c6_83, %c0_84] : memref<32x256xf32, #tpu.memory_space<vmem>>, vector<1x256xf32>
    tpu.vector_store %arg7[%c6_83, %c0_84], %137 {strides = array<i32>} : memref<32x256xf32, #tpu.memory_space<vmem>>, vector<1x256xf32>,
    %c0_85 = arith.constant 0 : index
    %c7 = arith.constant 7 : index
    %139 = memref.load %arg1[%c0_85, %c7] : memref<4x16xf32, #tpu.memory_space<smem>>
    %140 = vector.broadcast %139 : f32 to vector<16x256xf32>
    %141 = arith.mulf %140, %1 : vector<16x256xf32>
    %c1_86 = arith.constant 1 : index
    %c7_87 = arith.constant 7 : index
    %142 = memref.load %arg1[%c1_86, %c7_87] : memref<4x16xf32, #tpu.memory_space<smem>>
    %143 = vector.broadcast %142 : f32 to vector<16x256xf32>
    %144 = arith.mulf %143, %3 : vector<16x256xf32>
    %145 = arith.addf %141, %144 : vector<16x256xf32>
    %c2_88 = arith.constant 2 : index
    %c7_89 = arith.constant 7 : index
    %146 = memref.load %arg1[%c2_88, %c7_89] : memref<4x16xf32, #tpu.memory_space<smem>>
    %147 = vector.broadcast %146 : f32 to vector<16x256xf32>
    %148 = arith.mulf %147, %5 : vector<16x256xf32>
    %149 = arith.addf %145, %148 : vector<16x256xf32>
    %c3_90 = arith.constant 3 : index
    %c7_91 = arith.constant 7 : index
    %150 = memref.load %arg1[%c3_90, %c7_91] : memref<4x16xf32, #tpu.memory_space<smem>>
    %151 = vector.broadcast %150 : f32 to vector<16x256xf32>
    %152 = arith.addf %149, %151 : vector<16x256xf32>
    %cst_92 = arith.constant 0.000000e+00 : f32
    %153 = vector.broadcast %cst_92 : f32 to vector<16x256xf32>
    %154 = arith.maximumf %152, %153 : vector<16x256xf32>
    %cst_93 = arith.constant dense<0xFF800000> : vector<256xf32>
    %155 = vector.multi_reduction <maximumf>, %154, %cst_93 [0] : vector<16x256xf32> to vector<256xf32>
    %156 = vector.shape_cast %155 : vector<256xf32> to vector<1x256xf32>
    %c7_94 = arith.constant 7 : index
    %c0_95 = arith.constant 0 : index
    %157 = vector.load %arg7[%c7_94, %c0_95] : memref<32x256xf32, #tpu.memory_space<vmem>>, vector<1x256xf32>
    tpu.vector_store %arg7[%c7_94, %c0_95], %156 {strides = array<i32>} : memref<32x256xf32, #tpu.memory_space<vmem>>, vector<1x256xf32>,
    %c0_96 = arith.constant 0 : index
    %c8 = arith.constant 8 : index
    %158 = memref.load %arg1[%c0_96, %c8] : memref<4x16xf32, #tpu.memory_space<smem>>
    %159 = vector.broadcast %158 : f32 to vector<16x256xf32>
    %160 = arith.mulf %159, %1 : vector<16x256xf32>
    %c1_97 = arith.constant 1 : index
    %c8_98 = arith.constant 8 : index
    %161 = memref.load %arg1[%c1_97, %c8_98] : memref<4x16xf32, #tpu.memory_space<smem>>
    %162 = vector.broadcast %161 : f32 to vector<16x256xf32>
    %163 = arith.mulf %162, %3 : vector<16x256xf32>
    %164 = arith.addf %160, %163 : vector<16x256xf32>
    %c2_99 = arith.constant 2 : index
    %c8_100 = arith.constant 8 : index
    %165 = memref.load %arg1[%c2_99, %c8_100] : memref<4x16xf32, #tpu.memory_space<smem>>
    %166 = vector.broadcast %165 : f32 to vector<16x256xf32>
    %167 = arith.mulf %166, %5 : vector<16x256xf32>
    %168 = arith.addf %164, %167 : vector<16x256xf32>
    %c3_101 = arith.constant 3 : index
    %c8_102 = arith.constant 8 : index
    %169 = memref.load %arg1[%c3_101, %c8_102] : memref<4x16xf32, #tpu.memory_space<smem>>
    %170 = vector.broadcast %169 : f32 to vector<16x256xf32>
    %171 = arith.addf %168, %170 : vector<16x256xf32>
    %cst_103 = arith.constant 0.000000e+00 : f32
    %172 = vector.broadcast %cst_103 : f32 to vector<16x256xf32>
    %173 = arith.maximumf %171, %172 : vector<16x256xf32>
    %cst_104 = arith.constant dense<0xFF800000> : vector<256xf32>
    %174 = vector.multi_reduction <maximumf>, %173, %cst_104 [0] : vector<16x256xf32> to vector<256xf32>
    %175 = vector.shape_cast %174 : vector<256xf32> to vector<1x256xf32>
    %c8_105 = arith.constant 8 : index
    %c0_106 = arith.constant 0 : index
    %176 = vector.load %arg7[%c8_105, %c0_106] : memref<32x256xf32, #tpu.memory_space<vmem>>, vector<1x256xf32>
    tpu.vector_store %arg7[%c8_105, %c0_106], %175 {strides = array<i32>} : memref<32x256xf32, #tpu.memory_space<vmem>>, vector<1x256xf32>,
    %c0_107 = arith.constant 0 : index
    %c9 = arith.constant 9 : index
    %177 = memref.load %arg1[%c0_107, %c9] : memref<4x16xf32, #tpu.memory_space<smem>>
    %178 = vector.broadcast %177 : f32 to vector<16x256xf32>
    %179 = arith.mulf %178, %1 : vector<16x256xf32>
    %c1_108 = arith.constant 1 : index
    %c9_109 = arith.constant 9 : index
    %180 = memref.load %arg1[%c1_108, %c9_109] : memref<4x16xf32, #tpu.memory_space<smem>>
    %181 = vector.broadcast %180 : f32 to vector<16x256xf32>
    %182 = arith.mulf %181, %3 : vector<16x256xf32>
    %183 = arith.addf %179, %182 : vector<16x256xf32>
    %c2_110 = arith.constant 2 : index
    %c9_111 = arith.constant 9 : index
    %184 = memref.load %arg1[%c2_110, %c9_111] : memref<4x16xf32, #tpu.memory_space<smem>>
    %185 = vector.broadcast %184 : f32 to vector<16x256xf32>
    %186 = arith.mulf %185, %5 : vector<16x256xf32>
    %187 = arith.addf %183, %186 : vector<16x256xf32>
    %c3_112 = arith.constant 3 : index
    %c9_113 = arith.constant 9 : index
    %188 = memref.load %arg1[%c3_112, %c9_113] : memref<4x16xf32, #tpu.memory_space<smem>>
    %189 = vector.broadcast %188 : f32 to vector<16x256xf32>
    %190 = arith.addf %187, %189 : vector<16x256xf32>
    %cst_114 = arith.constant 0.000000e+00 : f32
    %191 = vector.broadcast %cst_114 : f32 to vector<16x256xf32>
    %192 = arith.maximumf %190, %191 : vector<16x256xf32>
    %cst_115 = arith.constant dense<0xFF800000> : vector<256xf32>
    %193 = vector.multi_reduction <maximumf>, %192, %cst_115 [0] : vector<16x256xf32> to vector<256xf32>
    %194 = vector.shape_cast %193 : vector<256xf32> to vector<1x256xf32>
    %c9_116 = arith.constant 9 : index
    %c0_117 = arith.constant 0 : index
    %195 = vector.load %arg7[%c9_116, %c0_117] : memref<32x256xf32, #tpu.memory_space<vmem>>, vector<1x256xf32>
    tpu.vector_store %arg7[%c9_116, %c0_117], %194 {strides = array<i32>} : memref<32x256xf32, #tpu.memory_space<vmem>>, vector<1x256xf32>,
    %c0_118 = arith.constant 0 : index
    %c10 = arith.constant 10 : index
    %196 = memref.load %arg1[%c0_118, %c10] : memref<4x16xf32, #tpu.memory_space<smem>>
    %197 = vector.broadcast %196 : f32 to vector<16x256xf32>
    %198 = arith.mulf %197, %1 : vector<16x256xf32>
    %c1_119 = arith.constant 1 : index
    %c10_120 = arith.constant 10 : index
    %199 = memref.load %arg1[%c1_119, %c10_120] : memref<4x16xf32, #tpu.memory_space<smem>>
    %200 = vector.broadcast %199 : f32 to vector<16x256xf32>
    %201 = arith.mulf %200, %3 : vector<16x256xf32>
    %202 = arith.addf %198, %201 : vector<16x256xf32>
    %c2_121 = arith.constant 2 : index
    %c10_122 = arith.constant 10 : index
    %203 = memref.load %arg1[%c2_121, %c10_122] : memref<4x16xf32, #tpu.memory_space<smem>>
    %204 = vector.broadcast %203 : f32 to vector<16x256xf32>
    %205 = arith.mulf %204, %5 : vector<16x256xf32>
    %206 = arith.addf %202, %205 : vector<16x256xf32>
    %c3_123 = arith.constant 3 : index
    %c10_124 = arith.constant 10 : index
    %207 = memref.load %arg1[%c3_123, %c10_124] : memref<4x16xf32, #tpu.memory_space<smem>>
    %208 = vector.broadcast %207 : f32 to vector<16x256xf32>
    %209 = arith.addf %206, %208 : vector<16x256xf32>
    %cst_125 = arith.constant 0.000000e+00 : f32
    %210 = vector.broadcast %cst_125 : f32 to vector<16x256xf32>
    %211 = arith.maximumf %209, %210 : vector<16x256xf32>
    %cst_126 = arith.constant dense<0xFF800000> : vector<256xf32>
    %212 = vector.multi_reduction <maximumf>, %211, %cst_126 [0] : vector<16x256xf32> to vector<256xf32>
    %213 = vector.shape_cast %212 : vector<256xf32> to vector<1x256xf32>
    %c10_127 = arith.constant 10 : index
    %c0_128 = arith.constant 0 : index
    %214 = vector.load %arg7[%c10_127, %c0_128] : memref<32x256xf32, #tpu.memory_space<vmem>>, vector<1x256xf32>
    tpu.vector_store %arg7[%c10_127, %c0_128], %213 {strides = array<i32>} : memref<32x256xf32, #tpu.memory_space<vmem>>, vector<1x256xf32>,
    %c0_129 = arith.constant 0 : index
    %c11 = arith.constant 11 : index
    %215 = memref.load %arg1[%c0_129, %c11] : memref<4x16xf32, #tpu.memory_space<smem>>
    %216 = vector.broadcast %215 : f32 to vector<16x256xf32>
    %217 = arith.mulf %216, %1 : vector<16x256xf32>
    %c1_130 = arith.constant 1 : index
    %c11_131 = arith.constant 11 : index
    %218 = memref.load %arg1[%c1_130, %c11_131] : memref<4x16xf32, #tpu.memory_space<smem>>
    %219 = vector.broadcast %218 : f32 to vector<16x256xf32>
    %220 = arith.mulf %219, %3 : vector<16x256xf32>
    %221 = arith.addf %217, %220 : vector<16x256xf32>
    %c2_132 = arith.constant 2 : index
    %c11_133 = arith.constant 11 : index
    %222 = memref.load %arg1[%c2_132, %c11_133] : memref<4x16xf32, #tpu.memory_space<smem>>
    %223 = vector.broadcast %222 : f32 to vector<16x256xf32>
    %224 = arith.mulf %223, %5 : vector<16x256xf32>
    %225 = arith.addf %221, %224 : vector<16x256xf32>
    %c3_134 = arith.constant 3 : index
    %c11_135 = arith.constant 11 : index
    %226 = memref.load %arg1[%c3_134, %c11_135] : memref<4x16xf32, #tpu.memory_space<smem>>
    %227 = vector.broadcast %226 : f32 to vector<16x256xf32>
    %228 = arith.addf %225, %227 : vector<16x256xf32>
    %cst_136 = arith.constant 0.000000e+00 : f32
    %229 = vector.broadcast %cst_136 : f32 to vector<16x256xf32>
    %230 = arith.maximumf %228, %229 : vector<16x256xf32>
    %cst_137 = arith.constant dense<0xFF800000> : vector<256xf32>
    %231 = vector.multi_reduction <maximumf>, %230, %cst_137 [0] : vector<16x256xf32> to vector<256xf32>
    %232 = vector.shape_cast %231 : vector<256xf32> to vector<1x256xf32>
    %c11_138 = arith.constant 11 : index
    %c0_139 = arith.constant 0 : index
    %233 = vector.load %arg7[%c11_138, %c0_139] : memref<32x256xf32, #tpu.memory_space<vmem>>, vector<1x256xf32>
    tpu.vector_store %arg7[%c11_138, %c0_139], %232 {strides = array<i32>} : memref<32x256xf32, #tpu.memory_space<vmem>>, vector<1x256xf32>,
    %c0_140 = arith.constant 0 : index
    %c12 = arith.constant 12 : index
    %234 = memref.load %arg1[%c0_140, %c12] : memref<4x16xf32, #tpu.memory_space<smem>>
    %235 = vector.broadcast %234 : f32 to vector<16x256xf32>
    %236 = arith.mulf %235, %1 : vector<16x256xf32>
    %c1_141 = arith.constant 1 : index
    %c12_142 = arith.constant 12 : index
    %237 = memref.load %arg1[%c1_141, %c12_142] : memref<4x16xf32, #tpu.memory_space<smem>>
    %238 = vector.broadcast %237 : f32 to vector<16x256xf32>
    %239 = arith.mulf %238, %3 : vector<16x256xf32>
    %240 = arith.addf %236, %239 : vector<16x256xf32>
    %c2_143 = arith.constant 2 : index
    %c12_144 = arith.constant 12 : index
    %241 = memref.load %arg1[%c2_143, %c12_144] : memref<4x16xf32, #tpu.memory_space<smem>>
    %242 = vector.broadcast %241 : f32 to vector<16x256xf32>
    %243 = arith.mulf %242, %5 : vector<16x256xf32>
    %244 = arith.addf %240, %243 : vector<16x256xf32>
    %c3_145 = arith.constant 3 : index
    %c12_146 = arith.constant 12 : index
    %245 = memref.load %arg1[%c3_145, %c12_146] : memref<4x16xf32, #tpu.memory_space<smem>>
    %246 = vector.broadcast %245 : f32 to vector<16x256xf32>
    %247 = arith.addf %244, %246 : vector<16x256xf32>
    %cst_147 = arith.constant 0.000000e+00 : f32
    %248 = vector.broadcast %cst_147 : f32 to vector<16x256xf32>
    %249 = arith.maximumf %247, %248 : vector<16x256xf32>
    %cst_148 = arith.constant dense<0xFF800000> : vector<256xf32>
    %250 = vector.multi_reduction <maximumf>, %249, %cst_148 [0] : vector<16x256xf32> to vector<256xf32>
    %251 = vector.shape_cast %250 : vector<256xf32> to vector<1x256xf32>
    %c12_149 = arith.constant 12 : index
    %c0_150 = arith.constant 0 : index
    %252 = vector.load %arg7[%c12_149, %c0_150] : memref<32x256xf32, #tpu.memory_space<vmem>>, vector<1x256xf32>
    tpu.vector_store %arg7[%c12_149, %c0_150], %251 {strides = array<i32>} : memref<32x256xf32, #tpu.memory_space<vmem>>, vector<1x256xf32>,
    %c0_151 = arith.constant 0 : index
    %c13 = arith.constant 13 : index
    %253 = memref.load %arg1[%c0_151, %c13] : memref<4x16xf32, #tpu.memory_space<smem>>
    %254 = vector.broadcast %253 : f32 to vector<16x256xf32>
    %255 = arith.mulf %254, %1 : vector<16x256xf32>
    %c1_152 = arith.constant 1 : index
    %c13_153 = arith.constant 13 : index
    %256 = memref.load %arg1[%c1_152, %c13_153] : memref<4x16xf32, #tpu.memory_space<smem>>
    %257 = vector.broadcast %256 : f32 to vector<16x256xf32>
    %258 = arith.mulf %257, %3 : vector<16x256xf32>
    %259 = arith.addf %255, %258 : vector<16x256xf32>
    %c2_154 = arith.constant 2 : index
    %c13_155 = arith.constant 13 : index
    %260 = memref.load %arg1[%c2_154, %c13_155] : memref<4x16xf32, #tpu.memory_space<smem>>
    %261 = vector.broadcast %260 : f32 to vector<16x256xf32>
    %262 = arith.mulf %261, %5 : vector<16x256xf32>
    %263 = arith.addf %259, %262 : vector<16x256xf32>
    %c3_156 = arith.constant 3 : index
    %c13_157 = arith.constant 13 : index
    %264 = memref.load %arg1[%c3_156, %c13_157] : memref<4x16xf32, #tpu.memory_space<smem>>
    %265 = vector.broadcast %264 : f32 to vector<16x256xf32>
    %266 = arith.addf %263, %265 : vector<16x256xf32>
    %cst_158 = arith.constant 0.000000e+00 : f32
    %267 = vector.broadcast %cst_158 : f32 to vector<16x256xf32>
    %268 = arith.maximumf %266, %267 : vector<16x256xf32>
    %cst_159 = arith.constant dense<0xFF800000> : vector<256xf32>
    %269 = vector.multi_reduction <maximumf>, %268, %cst_159 [0] : vector<16x256xf32> to vector<256xf32>
    %270 = vector.shape_cast %269 : vector<256xf32> to vector<1x256xf32>
    %c13_160 = arith.constant 13 : index
    %c0_161 = arith.constant 0 : index
    %271 = vector.load %arg7[%c13_160, %c0_161] : memref<32x256xf32, #tpu.memory_space<vmem>>, vector<1x256xf32>
    tpu.vector_store %arg7[%c13_160, %c0_161], %270 {strides = array<i32>} : memref<32x256xf32, #tpu.memory_space<vmem>>, vector<1x256xf32>,
    %c0_162 = arith.constant 0 : index
    %c14 = arith.constant 14 : index
    %272 = memref.load %arg1[%c0_162, %c14] : memref<4x16xf32, #tpu.memory_space<smem>>
    %273 = vector.broadcast %272 : f32 to vector<16x256xf32>
    %274 = arith.mulf %273, %1 : vector<16x256xf32>
    %c1_163 = arith.constant 1 : index
    %c14_164 = arith.constant 14 : index
    %275 = memref.load %arg1[%c1_163, %c14_164] : memref<4x16xf32, #tpu.memory_space<smem>>
    %276 = vector.broadcast %275 : f32 to vector<16x256xf32>
    %277 = arith.mulf %276, %3 : vector<16x256xf32>
    %278 = arith.addf %274, %277 : vector<16x256xf32>
    %c2_165 = arith.constant 2 : index
    %c14_166 = arith.constant 14 : index
    %279 = memref.load %arg1[%c2_165, %c14_166] : memref<4x16xf32, #tpu.memory_space<smem>>
    %280 = vector.broadcast %279 : f32 to vector<16x256xf32>
    %281 = arith.mulf %280, %5 : vector<16x256xf32>
    %282 = arith.addf %278, %281 : vector<16x256xf32>
    %c3_167 = arith.constant 3 : index
    %c14_168 = arith.constant 14 : index
    %283 = memref.load %arg1[%c3_167, %c14_168] : memref<4x16xf32, #tpu.memory_space<smem>>
    %284 = vector.broadcast %283 : f32 to vector<16x256xf32>
    %285 = arith.addf %282, %284 : vector<16x256xf32>
    %cst_169 = arith.constant 0.000000e+00 : f32
    %286 = vector.broadcast %cst_169 : f32 to vector<16x256xf32>
    %287 = arith.maximumf %285, %286 : vector<16x256xf32>
    %cst_170 = arith.constant dense<0xFF800000> : vector<256xf32>
    %288 = vector.multi_reduction <maximumf>, %287, %cst_170 [0] : vector<16x256xf32> to vector<256xf32>
    %289 = vector.shape_cast %288 : vector<256xf32> to vector<1x256xf32>
    %c14_171 = arith.constant 14 : index
    %c0_172 = arith.constant 0 : index
    %290 = vector.load %arg7[%c14_171, %c0_172] : memref<32x256xf32, #tpu.memory_space<vmem>>, vector<1x256xf32>
    tpu.vector_store %arg7[%c14_171, %c0_172], %289 {strides = array<i32>} : memref<32x256xf32, #tpu.memory_space<vmem>>, vector<1x256xf32>,
    %c0_173 = arith.constant 0 : index
    %c15 = arith.constant 15 : index
    %291 = memref.load %arg1[%c0_173, %c15] : memref<4x16xf32, #tpu.memory_space<smem>>
    %292 = vector.broadcast %291 : f32 to vector<16x256xf32>
    %293 = arith.mulf %292, %1 : vector<16x256xf32>
    %c1_174 = arith.constant 1 : index
    %c15_175 = arith.constant 15 : index
    %294 = memref.load %arg1[%c1_174, %c15_175] : memref<4x16xf32, #tpu.memory_space<smem>>
    %295 = vector.broadcast %294 : f32 to vector<16x256xf32>
    %296 = arith.mulf %295, %3 : vector<16x256xf32>
    %297 = arith.addf %293, %296 : vector<16x256xf32>
    %c2_176 = arith.constant 2 : index
    %c15_177 = arith.constant 15 : index
    %298 = memref.load %arg1[%c2_176, %c15_177] : memref<4x16xf32, #tpu.memory_space<smem>>
    %299 = vector.broadcast %298 : f32 to vector<16x256xf32>
    %300 = arith.mulf %299, %5 : vector<16x256xf32>
    %301 = arith.addf %297, %300 : vector<16x256xf32>
    %c3_178 = arith.constant 3 : index
    %c15_179 = arith.constant 15 : index
    %302 = memref.load %arg1[%c3_178, %c15_179] : memref<4x16xf32, #tpu.memory_space<smem>>
    %303 = vector.broadcast %302 : f32 to vector<16x256xf32>
    %304 = arith.addf %301, %303 : vector<16x256xf32>
    %cst_180 = arith.constant 0.000000e+00 : f32
    %305 = vector.broadcast %cst_180 : f32 to vector<16x256xf32>
    %306 = arith.maximumf %304, %305 : vector<16x256xf32>
    %cst_181 = arith.constant dense<0xFF800000> : vector<256xf32>
    %307 = vector.multi_reduction <maximumf>, %306, %cst_181 [0] : vector<16x256xf32> to vector<256xf32>
    %308 = vector.shape_cast %307 : vector<256xf32> to vector<1x256xf32>
    %c15_182 = arith.constant 15 : index
    %c0_183 = arith.constant 0 : index
    %309 = vector.load %arg7[%c15_182, %c0_183] : memref<32x256xf32, #tpu.memory_space<vmem>>, vector<1x256xf32>
    tpu.vector_store %arg7[%c15_182, %c0_183], %308 {strides = array<i32>} : memref<32x256xf32, #tpu.memory_space<vmem>>, vector<1x256xf32>,
    %c0_184 = arith.constant 0 : index
    %c16 = arith.constant 16 : index
    %c0_185 = arith.constant 0 : index
    %310 = vector.load %arg0[%c0_184, %c16, %c0_185] : memref<3x32x256xf32, #tpu.memory_space<vmem>>, vector<1x16x256xf32>
    %311 = vector.shape_cast %310 : vector<1x16x256xf32> to vector<16x256xf32>
    %c1_186 = arith.constant 1 : index
    %c16_187 = arith.constant 16 : index
    %c0_188 = arith.constant 0 : index
    %312 = vector.load %arg0[%c1_186, %c16_187, %c0_188] : memref<3x32x256xf32, #tpu.memory_space<vmem>>, vector<1x16x256xf32>
    %313 = vector.shape_cast %312 : vector<1x16x256xf32> to vector<16x256xf32>
    %c2_189 = arith.constant 2 : index
    %c16_190 = arith.constant 16 : index
    %c0_191 = arith.constant 0 : index
    %314 = vector.load %arg0[%c2_189, %c16_190, %c0_191] : memref<3x32x256xf32, #tpu.memory_space<vmem>>, vector<1x16x256xf32>
    %315 = vector.shape_cast %314 : vector<1x16x256xf32> to vector<16x256xf32>
    %c0_192 = arith.constant 0 : index
    %c0_193 = arith.constant 0 : index
    %316 = memref.load %arg1[%c0_192, %c0_193] : memref<4x16xf32, #tpu.memory_space<smem>>
    %317 = vector.broadcast %316 : f32 to vector<16x256xf32>
    %318 = arith.mulf %317, %311 : vector<16x256xf32>
    %c1_194 = arith.constant 1 : index
    %c0_195 = arith.constant 0 : index
    %319 = memref.load %arg1[%c1_194, %c0_195] : memref<4x16xf32, #tpu.memory_space<smem>>
    %320 = vector.broadcast %319 : f32 to vector<16x256xf32>
    %321 = arith.mulf %320, %313 : vector<16x256xf32>
    %322 = arith.addf %318, %321 : vector<16x256xf32>
    %c2_196 = arith.constant 2 : index
    %c0_197 = arith.constant 0 : index
    %323 = memref.load %arg1[%c2_196, %c0_197] : memref<4x16xf32, #tpu.memory_space<smem>>
    %324 = vector.broadcast %323 : f32 to vector<16x256xf32>
    %325 = arith.mulf %324, %315 : vector<16x256xf32>
    %326 = arith.addf %322, %325 : vector<16x256xf32>
    %c3_198 = arith.constant 3 : index
    %c0_199 = arith.constant 0 : index
    %327 = memref.load %arg1[%c3_198, %c0_199] : memref<4x16xf32, #tpu.memory_space<smem>>
    %328 = vector.broadcast %327 : f32 to vector<16x256xf32>
    %329 = arith.addf %326, %328 : vector<16x256xf32>
    %cst_200 = arith.constant 0.000000e+00 : f32
    %330 = vector.broadcast %cst_200 : f32 to vector<16x256xf32>
    %331 = arith.maximumf %329, %330 : vector<16x256xf32>
    %cst_201 = arith.constant dense<0xFF800000> : vector<256xf32>
    %332 = vector.multi_reduction <maximumf>, %331, %cst_201 [0] : vector<16x256xf32> to vector<256xf32>
    %333 = vector.shape_cast %332 : vector<256xf32> to vector<1x256xf32>
    %c16_202 = arith.constant 16 : index
    %c0_203 = arith.constant 0 : index
    %334 = vector.load %arg7[%c16_202, %c0_203] : memref<32x256xf32, #tpu.memory_space<vmem>>, vector<1x256xf32>
    tpu.vector_store %arg7[%c16_202, %c0_203], %333 {strides = array<i32>} : memref<32x256xf32, #tpu.memory_space<vmem>>, vector<1x256xf32>,
    %c0_204 = arith.constant 0 : index
    %c1_205 = arith.constant 1 : index
    %335 = memref.load %arg1[%c0_204, %c1_205] : memref<4x16xf32, #tpu.memory_space<smem>>
    %336 = vector.broadcast %335 : f32 to vector<16x256xf32>
    %337 = arith.mulf %336, %311 : vector<16x256xf32>
    %c1_206 = arith.constant 1 : index
    %c1_207 = arith.constant 1 : index
    %338 = memref.load %arg1[%c1_206, %c1_207] : memref<4x16xf32, #tpu.memory_space<smem>>
    %339 = vector.broadcast %338 : f32 to vector<16x256xf32>
    %340 = arith.mulf %339, %313 : vector<16x256xf32>
    %341 = arith.addf %337, %340 : vector<16x256xf32>
    %c2_208 = arith.constant 2 : index
    %c1_209 = arith.constant 1 : index
    %342 = memref.load %arg1[%c2_208, %c1_209] : memref<4x16xf32, #tpu.memory_space<smem>>
    %343 = vector.broadcast %342 : f32 to vector<16x256xf32>
    %344 = arith.mulf %343, %315 : vector<16x256xf32>
    %345 = arith.addf %341, %344 : vector<16x256xf32>
    %c3_210 = arith.constant 3 : index
    %c1_211 = arith.constant 1 : index
    %346 = memref.load %arg1[%c3_210, %c1_211] : memref<4x16xf32, #tpu.memory_space<smem>>
    %347 = vector.broadcast %346 : f32 to vector<16x256xf32>
    %348 = arith.addf %345, %347 : vector<16x256xf32>
    %cst_212 = arith.constant 0.000000e+00 : f32
    %349 = vector.broadcast %cst_212 : f32 to vector<16x256xf32>
    %350 = arith.maximumf %348, %349 : vector<16x256xf32>
    %cst_213 = arith.constant dense<0xFF800000> : vector<256xf32>
    %351 = vector.multi_reduction <maximumf>, %350, %cst_213 [0] : vector<16x256xf32> to vector<256xf32>
    %352 = vector.shape_cast %351 : vector<256xf32> to vector<1x256xf32>
    %c17 = arith.constant 17 : index
    %c0_214 = arith.constant 0 : index
    %353 = vector.load %arg7[%c17, %c0_214] : memref<32x256xf32, #tpu.memory_space<vmem>>, vector<1x256xf32>
    tpu.vector_store %arg7[%c17, %c0_214], %352 {strides = array<i32>} : memref<32x256xf32, #tpu.memory_space<vmem>>, vector<1x256xf32>,
    %c0_215 = arith.constant 0 : index
    %c2_216 = arith.constant 2 : index
    %354 = memref.load %arg1[%c0_215, %c2_216] : memref<4x16xf32, #tpu.memory_space<smem>>
    %355 = vector.broadcast %354 : f32 to vector<16x256xf32>
    %356 = arith.mulf %355, %311 : vector<16x256xf32>
    %c1_217 = arith.constant 1 : index
    %c2_218 = arith.constant 2 : index
    %357 = memref.load %arg1[%c1_217, %c2_218] : memref<4x16xf32, #tpu.memory_space<smem>>
    %358 = vector.broadcast %357 : f32 to vector<16x256xf32>
    %359 = arith.mulf %358, %313 : vector<16x256xf32>
    %360 = arith.addf %356, %359 : vector<16x256xf32>
    %c2_219 = arith.constant 2 : index
    %c2_220 = arith.constant 2 : index
    %361 = memref.load %arg1[%c2_219, %c2_220] : memref<4x16xf32, #tpu.memory_space<smem>>
    %362 = vector.broadcast %361 : f32 to vector<16x256xf32>
    %363 = arith.mulf %362, %315 : vector<16x256xf32>
    %364 = arith.addf %360, %363 : vector<16x256xf32>
    %c3_221 = arith.constant 3 : index
    %c2_222 = arith.constant 2 : index
    %365 = memref.load %arg1[%c3_221, %c2_222] : memref<4x16xf32, #tpu.memory_space<smem>>
    %366 = vector.broadcast %365 : f32 to vector<16x256xf32>
    %367 = arith.addf %364, %366 : vector<16x256xf32>
    %cst_223 = arith.constant 0.000000e+00 : f32
    %368 = vector.broadcast %cst_223 : f32 to vector<16x256xf32>
    %369 = arith.maximumf %367, %368 : vector<16x256xf32>
    %cst_224 = arith.constant dense<0xFF800000> : vector<256xf32>
    %370 = vector.multi_reduction <maximumf>, %369, %cst_224 [0] : vector<16x256xf32> to vector<256xf32>
    %371 = vector.shape_cast %370 : vector<256xf32> to vector<1x256xf32>
    %c18 = arith.constant 18 : index
    %c0_225 = arith.constant 0 : index
    %372 = vector.load %arg7[%c18, %c0_225] : memref<32x256xf32, #tpu.memory_space<vmem>>, vector<1x256xf32>
    tpu.vector_store %arg7[%c18, %c0_225], %371 {strides = array<i32>} : memref<32x256xf32, #tpu.memory_space<vmem>>, vector<1x256xf32>,
    %c0_226 = arith.constant 0 : index
    %c3_227 = arith.constant 3 : index
    %373 = memref.load %arg1[%c0_226, %c3_227] : memref<4x16xf32, #tpu.memory_space<smem>>
    %374 = vector.broadcast %373 : f32 to vector<16x256xf32>
    %375 = arith.mulf %374, %311 : vector<16x256xf32>
    %c1_228 = arith.constant 1 : index
    %c3_229 = arith.constant 3 : index
    %376 = memref.load %arg1[%c1_228, %c3_229] : memref<4x16xf32, #tpu.memory_space<smem>>
    %377 = vector.broadcast %376 : f32 to vector<16x256xf32>
    %378 = arith.mulf %377, %313 : vector<16x256xf32>
    %379 = arith.addf %375, %378 : vector<16x256xf32>
    %c2_230 = arith.constant 2 : index
    %c3_231 = arith.constant 3 : index
    %380 = memref.load %arg1[%c2_230, %c3_231] : memref<4x16xf32, #tpu.memory_space<smem>>
    %381 = vector.broadcast %380 : f32 to vector<16x256xf32>
    %382 = arith.mulf %381, %315 : vector<16x256xf32>
    %383 = arith.addf %379, %382 : vector<16x256xf32>
    %c3_232 = arith.constant 3 : index
    %c3_233 = arith.constant 3 : index
    %384 = memref.load %arg1[%c3_232, %c3_233] : memref<4x16xf32, #tpu.memory_space<smem>>
    %385 = vector.broadcast %384 : f32 to vector<16x256xf32>
    %386 = arith.addf %383, %385 : vector<16x256xf32>
    %cst_234 = arith.constant 0.000000e+00 : f32
    %387 = vector.broadcast %cst_234 : f32 to vector<16x256xf32>
    %388 = arith.maximumf %386, %387 : vector<16x256xf32>
    %cst_235 = arith.constant dense<0xFF800000> : vector<256xf32>
    %389 = vector.multi_reduction <maximumf>, %388, %cst_235 [0] : vector<16x256xf32> to vector<256xf32>
    %390 = vector.shape_cast %389 : vector<256xf32> to vector<1x256xf32>
    %c19 = arith.constant 19 : index
    %c0_236 = arith.constant 0 : index
    %391 = vector.load %arg7[%c19, %c0_236] : memref<32x256xf32, #tpu.memory_space<vmem>>, vector<1x256xf32>
    tpu.vector_store %arg7[%c19, %c0_236], %390 {strides = array<i32>} : memref<32x256xf32, #tpu.memory_space<vmem>>, vector<1x256xf32>,
    %c0_237 = arith.constant 0 : index
    %c4_238 = arith.constant 4 : index
    %392 = memref.load %arg1[%c0_237, %c4_238] : memref<4x16xf32, #tpu.memory_space<smem>>
    %393 = vector.broadcast %392 : f32 to vector<16x256xf32>
    %394 = arith.mulf %393, %311 : vector<16x256xf32>
    %c1_239 = arith.constant 1 : index
    %c4_240 = arith.constant 4 : index
    %395 = memref.load %arg1[%c1_239, %c4_240] : memref<4x16xf32, #tpu.memory_space<smem>>
    %396 = vector.broadcast %395 : f32 to vector<16x256xf32>
    %397 = arith.mulf %396, %313 : vector<16x256xf32>
    %398 = arith.addf %394, %397 : vector<16x256xf32>
    %c2_241 = arith.constant 2 : index
    %c4_242 = arith.constant 4 : index
    %399 = memref.load %arg1[%c2_241, %c4_242] : memref<4x16xf32, #tpu.memory_space<smem>>
    %400 = vector.broadcast %399 : f32 to vector<16x256xf32>
    %401 = arith.mulf %400, %315 : vector<16x256xf32>
    %402 = arith.addf %398, %401 : vector<16x256xf32>
    %c3_243 = arith.constant 3 : index
    %c4_244 = arith.constant 4 : index
    %403 = memref.load %arg1[%c3_243, %c4_244] : memref<4x16xf32, #tpu.memory_space<smem>>
    %404 = vector.broadcast %403 : f32 to vector<16x256xf32>
    %405 = arith.addf %402, %404 : vector<16x256xf32>
    %cst_245 = arith.constant 0.000000e+00 : f32
    %406 = vector.broadcast %cst_245 : f32 to vector<16x256xf32>
    %407 = arith.maximumf %405, %406 : vector<16x256xf32>
    %cst_246 = arith.constant dense<0xFF800000> : vector<256xf32>
    %408 = vector.multi_reduction <maximumf>, %407, %cst_246 [0] : vector<16x256xf32> to vector<256xf32>
    %409 = vector.shape_cast %408 : vector<256xf32> to vector<1x256xf32>
    %c20 = arith.constant 20 : index
    %c0_247 = arith.constant 0 : index
    %410 = vector.load %arg7[%c20, %c0_247] : memref<32x256xf32, #tpu.memory_space<vmem>>, vector<1x256xf32>
    tpu.vector_store %arg7[%c20, %c0_247], %409 {strides = array<i32>} : memref<32x256xf32, #tpu.memory_space<vmem>>, vector<1x256xf32>,
    %c0_248 = arith.constant 0 : index
    %c5_249 = arith.constant 5 : index
    %411 = memref.load %arg1[%c0_248, %c5_249] : memref<4x16xf32, #tpu.memory_space<smem>>
    %412 = vector.broadcast %411 : f32 to vector<16x256xf32>
    %413 = arith.mulf %412, %311 : vector<16x256xf32>
    %c1_250 = arith.constant 1 : index
    %c5_251 = arith.constant 5 : index
    %414 = memref.load %arg1[%c1_250, %c5_251] : memref<4x16xf32, #tpu.memory_space<smem>>
    %415 = vector.broadcast %414 : f32 to vector<16x256xf32>
    %416 = arith.mulf %415, %313 : vector<16x256xf32>
    %417 = arith.addf %413, %416 : vector<16x256xf32>
    %c2_252 = arith.constant 2 : index
    %c5_253 = arith.constant 5 : index
    %418 = memref.load %arg1[%c2_252, %c5_253] : memref<4x16xf32, #tpu.memory_space<smem>>
    %419 = vector.broadcast %418 : f32 to vector<16x256xf32>
    %420 = arith.mulf %419, %315 : vector<16x256xf32>
    %421 = arith.addf %417, %420 : vector<16x256xf32>
    %c3_254 = arith.constant 3 : index
    %c5_255 = arith.constant 5 : index
    %422 = memref.load %arg1[%c3_254, %c5_255] : memref<4x16xf32, #tpu.memory_space<smem>>
    %423 = vector.broadcast %422 : f32 to vector<16x256xf32>
    %424 = arith.addf %421, %423 : vector<16x256xf32>
    %cst_256 = arith.constant 0.000000e+00 : f32
    %425 = vector.broadcast %cst_256 : f32 to vector<16x256xf32>
    %426 = arith.maximumf %424, %425 : vector<16x256xf32>
    %cst_257 = arith.constant dense<0xFF800000> : vector<256xf32>
    %427 = vector.multi_reduction <maximumf>, %426, %cst_257 [0] : vector<16x256xf32> to vector<256xf32>
    %428 = vector.shape_cast %427 : vector<256xf32> to vector<1x256xf32>
    %c21 = arith.constant 21 : index
    %c0_258 = arith.constant 0 : index
    %429 = vector.load %arg7[%c21, %c0_258] : memref<32x256xf32, #tpu.memory_space<vmem>>, vector<1x256xf32>
    tpu.vector_store %arg7[%c21, %c0_258], %428 {strides = array<i32>} : memref<32x256xf32, #tpu.memory_space<vmem>>, vector<1x256xf32>,
    %c0_259 = arith.constant 0 : index
    %c6_260 = arith.constant 6 : index
    %430 = memref.load %arg1[%c0_259, %c6_260] : memref<4x16xf32, #tpu.memory_space<smem>>
    %431 = vector.broadcast %430 : f32 to vector<16x256xf32>
    %432 = arith.mulf %431, %311 : vector<16x256xf32>
    %c1_261 = arith.constant 1 : index
    %c6_262 = arith.constant 6 : index
    %433 = memref.load %arg1[%c1_261, %c6_262] : memref<4x16xf32, #tpu.memory_space<smem>>
    %434 = vector.broadcast %433 : f32 to vector<16x256xf32>
    %435 = arith.mulf %434, %313 : vector<16x256xf32>
    %436 = arith.addf %432, %435 : vector<16x256xf32>
    %c2_263 = arith.constant 2 : index
    %c6_264 = arith.constant 6 : index
    %437 = memref.load %arg1[%c2_263, %c6_264] : memref<4x16xf32, #tpu.memory_space<smem>>
    %438 = vector.broadcast %437 : f32 to vector<16x256xf32>
    %439 = arith.mulf %438, %315 : vector<16x256xf32>
    %440 = arith.addf %436, %439 : vector<16x256xf32>
    %c3_265 = arith.constant 3 : index
    %c6_266 = arith.constant 6 : index
    %441 = memref.load %arg1[%c3_265, %c6_266] : memref<4x16xf32, #tpu.memory_space<smem>>
    %442 = vector.broadcast %441 : f32 to vector<16x256xf32>
    %443 = arith.addf %440, %442 : vector<16x256xf32>
    %cst_267 = arith.constant 0.000000e+00 : f32
    %444 = vector.broadcast %cst_267 : f32 to vector<16x256xf32>
    %445 = arith.maximumf %443, %444 : vector<16x256xf32>
    %cst_268 = arith.constant dense<0xFF800000> : vector<256xf32>
    %446 = vector.multi_reduction <maximumf>, %445, %cst_268 [0] : vector<16x256xf32> to vector<256xf32>
    %447 = vector.shape_cast %446 : vector<256xf32> to vector<1x256xf32>
    %c22 = arith.constant 22 : index
    %c0_269 = arith.constant 0 : index
    %448 = vector.load %arg7[%c22, %c0_269] : memref<32x256xf32, #tpu.memory_space<vmem>>, vector<1x256xf32>
    tpu.vector_store %arg7[%c22, %c0_269], %447 {strides = array<i32>} : memref<32x256xf32, #tpu.memory_space<vmem>>, vector<1x256xf32>,
    %c0_270 = arith.constant 0 : index
    %c7_271 = arith.constant 7 : index
    %449 = memref.load %arg1[%c0_270, %c7_271] : memref<4x16xf32, #tpu.memory_space<smem>>
    %450 = vector.broadcast %449 : f32 to vector<16x256xf32>
    %451 = arith.mulf %450, %311 : vector<16x256xf32>
    %c1_272 = arith.constant 1 : index
    %c7_273 = arith.constant 7 : index
    %452 = memref.load %arg1[%c1_272, %c7_273] : memref<4x16xf32, #tpu.memory_space<smem>>
    %453 = vector.broadcast %452 : f32 to vector<16x256xf32>
    %454 = arith.mulf %453, %313 : vector<16x256xf32>
    %455 = arith.addf %451, %454 : vector<16x256xf32>
    %c2_274 = arith.constant 2 : index
    %c7_275 = arith.constant 7 : index
    %456 = memref.load %arg1[%c2_274, %c7_275] : memref<4x16xf32, #tpu.memory_space<smem>>
    %457 = vector.broadcast %456 : f32 to vector<16x256xf32>
    %458 = arith.mulf %457, %315 : vector<16x256xf32>
    %459 = arith.addf %455, %458 : vector<16x256xf32>
    %c3_276 = arith.constant 3 : index
    %c7_277 = arith.constant 7 : index
    %460 = memref.load %arg1[%c3_276, %c7_277] : memref<4x16xf32, #tpu.memory_space<smem>>
    %461 = vector.broadcast %460 : f32 to vector<16x256xf32>
    %462 = arith.addf %459, %461 : vector<16x256xf32>
    %cst_278 = arith.constant 0.000000e+00 : f32
    %463 = vector.broadcast %cst_278 : f32 to vector<16x256xf32>
    %464 = arith.maximumf %462, %463 : vector<16x256xf32>
    %cst_279 = arith.constant dense<0xFF800000> : vector<256xf32>
    %465 = vector.multi_reduction <maximumf>, %464, %cst_279 [0] : vector<16x256xf32> to vector<256xf32>
    %466 = vector.shape_cast %465 : vector<256xf32> to vector<1x256xf32>
    %c23 = arith.constant 23 : index
    %c0_280 = arith.constant 0 : index
    %467 = vector.load %arg7[%c23, %c0_280] : memref<32x256xf32, #tpu.memory_space<vmem>>, vector<1x256xf32>
    tpu.vector_store %arg7[%c23, %c0_280], %466 {strides = array<i32>} : memref<32x256xf32, #tpu.memory_space<vmem>>, vector<1x256xf32>,
    %c0_281 = arith.constant 0 : index
    %c8_282 = arith.constant 8 : index
    %468 = memref.load %arg1[%c0_281, %c8_282] : memref<4x16xf32, #tpu.memory_space<smem>>
    %469 = vector.broadcast %468 : f32 to vector<16x256xf32>
    %470 = arith.mulf %469, %311 : vector<16x256xf32>
    %c1_283 = arith.constant 1 : index
    %c8_284 = arith.constant 8 : index
    %471 = memref.load %arg1[%c1_283, %c8_284] : memref<4x16xf32, #tpu.memory_space<smem>>
    %472 = vector.broadcast %471 : f32 to vector<16x256xf32>
    %473 = arith.mulf %472, %313 : vector<16x256xf32>
    %474 = arith.addf %470, %473 : vector<16x256xf32>
    %c2_285 = arith.constant 2 : index
    %c8_286 = arith.constant 8 : index
    %475 = memref.load %arg1[%c2_285, %c8_286] : memref<4x16xf32, #tpu.memory_space<smem>>
    %476 = vector.broadcast %475 : f32 to vector<16x256xf32>
    %477 = arith.mulf %476, %315 : vector<16x256xf32>
    %478 = arith.addf %474, %477 : vector<16x256xf32>
    %c3_287 = arith.constant 3 : index
    %c8_288 = arith.constant 8 : index
    %479 = memref.load %arg1[%c3_287, %c8_288] : memref<4x16xf32, #tpu.memory_space<smem>>
    %480 = vector.broadcast %479 : f32 to vector<16x256xf32>
    %481 = arith.addf %478, %480 : vector<16x256xf32>
    %cst_289 = arith.constant 0.000000e+00 : f32
    %482 = vector.broadcast %cst_289 : f32 to vector<16x256xf32>
    %483 = arith.maximumf %481, %482 : vector<16x256xf32>
    %cst_290 = arith.constant dense<0xFF800000> : vector<256xf32>
    %484 = vector.multi_reduction <maximumf>, %483, %cst_290 [0] : vector<16x256xf32> to vector<256xf32>
    %485 = vector.shape_cast %484 : vector<256xf32> to vector<1x256xf32>
    %c24 = arith.constant 24 : index
    %c0_291 = arith.constant 0 : index
    %486 = vector.load %arg7[%c24, %c0_291] : memref<32x256xf32, #tpu.memory_space<vmem>>, vector<1x256xf32>
    tpu.vector_store %arg7[%c24, %c0_291], %485 {strides = array<i32>} : memref<32x256xf32, #tpu.memory_space<vmem>>, vector<1x256xf32>,
    %c0_292 = arith.constant 0 : index
    %c9_293 = arith.constant 9 : index
    %487 = memref.load %arg1[%c0_292, %c9_293] : memref<4x16xf32, #tpu.memory_space<smem>>
    %488 = vector.broadcast %487 : f32 to vector<16x256xf32>
    %489 = arith.mulf %488, %311 : vector<16x256xf32>
    %c1_294 = arith.constant 1 : index
    %c9_295 = arith.constant 9 : index
    %490 = memref.load %arg1[%c1_294, %c9_295] : memref<4x16xf32, #tpu.memory_space<smem>>
    %491 = vector.broadcast %490 : f32 to vector<16x256xf32>
    %492 = arith.mulf %491, %313 : vector<16x256xf32>
    %493 = arith.addf %489, %492 : vector<16x256xf32>
    %c2_296 = arith.constant 2 : index
    %c9_297 = arith.constant 9 : index
    %494 = memref.load %arg1[%c2_296, %c9_297] : memref<4x16xf32, #tpu.memory_space<smem>>
    %495 = vector.broadcast %494 : f32 to vector<16x256xf32>
    %496 = arith.mulf %495, %315 : vector<16x256xf32>
    %497 = arith.addf %493, %496 : vector<16x256xf32>
    %c3_298 = arith.constant 3 : index
    %c9_299 = arith.constant 9 : index
    %498 = memref.load %arg1[%c3_298, %c9_299] : memref<4x16xf32, #tpu.memory_space<smem>>
    %499 = vector.broadcast %498 : f32 to vector<16x256xf32>
    %500 = arith.addf %497, %499 : vector<16x256xf32>
    %cst_300 = arith.constant 0.000000e+00 : f32
    %501 = vector.broadcast %cst_300 : f32 to vector<16x256xf32>
    %502 = arith.maximumf %500, %501 : vector<16x256xf32>
    %cst_301 = arith.constant dense<0xFF800000> : vector<256xf32>
    %503 = vector.multi_reduction <maximumf>, %502, %cst_301 [0] : vector<16x256xf32> to vector<256xf32>
    %504 = vector.shape_cast %503 : vector<256xf32> to vector<1x256xf32>
    %c25 = arith.constant 25 : index
    %c0_302 = arith.constant 0 : index
    %505 = vector.load %arg7[%c25, %c0_302] : memref<32x256xf32, #tpu.memory_space<vmem>>, vector<1x256xf32>
    tpu.vector_store %arg7[%c25, %c0_302], %504 {strides = array<i32>} : memref<32x256xf32, #tpu.memory_space<vmem>>, vector<1x256xf32>,
    %c0_303 = arith.constant 0 : index
    %c10_304 = arith.constant 10 : index
    %506 = memref.load %arg1[%c0_303, %c10_304] : memref<4x16xf32, #tpu.memory_space<smem>>
    %507 = vector.broadcast %506 : f32 to vector<16x256xf32>
    %508 = arith.mulf %507, %311 : vector<16x256xf32>
    %c1_305 = arith.constant 1 : index
    %c10_306 = arith.constant 10 : index
    %509 = memref.load %arg1[%c1_305, %c10_306] : memref<4x16xf32, #tpu.memory_space<smem>>
    %510 = vector.broadcast %509 : f32 to vector<16x256xf32>
    %511 = arith.mulf %510, %313 : vector<16x256xf32>
    %512 = arith.addf %508, %511 : vector<16x256xf32>
    %c2_307 = arith.constant 2 : index
    %c10_308 = arith.constant 10 : index
    %513 = memref.load %arg1[%c2_307, %c10_308] : memref<4x16xf32, #tpu.memory_space<smem>>
    %514 = vector.broadcast %513 : f32 to vector<16x256xf32>
    %515 = arith.mulf %514, %315 : vector<16x256xf32>
    %516 = arith.addf %512, %515 : vector<16x256xf32>
    %c3_309 = arith.constant 3 : index
    %c10_310 = arith.constant 10 : index
    %517 = memref.load %arg1[%c3_309, %c10_310] : memref<4x16xf32, #tpu.memory_space<smem>>
    %518 = vector.broadcast %517 : f32 to vector<16x256xf32>
    %519 = arith.addf %516, %518 : vector<16x256xf32>
    %cst_311 = arith.constant 0.000000e+00 : f32
    %520 = vector.broadcast %cst_311 : f32 to vector<16x256xf32>
    %521 = arith.maximumf %519, %520 : vector<16x256xf32>
    %cst_312 = arith.constant dense<0xFF800000> : vector<256xf32>
    %522 = vector.multi_reduction <maximumf>, %521, %cst_312 [0] : vector<16x256xf32> to vector<256xf32>
    %523 = vector.shape_cast %522 : vector<256xf32> to vector<1x256xf32>
    %c26 = arith.constant 26 : index
    %c0_313 = arith.constant 0 : index
    %524 = vector.load %arg7[%c26, %c0_313] : memref<32x256xf32, #tpu.memory_space<vmem>>, vector<1x256xf32>
    tpu.vector_store %arg7[%c26, %c0_313], %523 {strides = array<i32>} : memref<32x256xf32, #tpu.memory_space<vmem>>, vector<1x256xf32>,
    %c0_314 = arith.constant 0 : index
    %c11_315 = arith.constant 11 : index
    %525 = memref.load %arg1[%c0_314, %c11_315] : memref<4x16xf32, #tpu.memory_space<smem>>
    %526 = vector.broadcast %525 : f32 to vector<16x256xf32>
    %527 = arith.mulf %526, %311 : vector<16x256xf32>
    %c1_316 = arith.constant 1 : index
    %c11_317 = arith.constant 11 : index
    %528 = memref.load %arg1[%c1_316, %c11_317] : memref<4x16xf32, #tpu.memory_space<smem>>
    %529 = vector.broadcast %528 : f32 to vector<16x256xf32>
    %530 = arith.mulf %529, %313 : vector<16x256xf32>
    %531 = arith.addf %527, %530 : vector<16x256xf32>
    %c2_318 = arith.constant 2 : index
    %c11_319 = arith.constant 11 : index
    %532 = memref.load %arg1[%c2_318, %c11_319] : memref<4x16xf32, #tpu.memory_space<smem>>
    %533 = vector.broadcast %532 : f32 to vector<16x256xf32>
    %534 = arith.mulf %533, %315 : vector<16x256xf32>
    %535 = arith.addf %531, %534 : vector<16x256xf32>
    %c3_320 = arith.constant 3 : index
    %c11_321 = arith.constant 11 : index
    %536 = memref.load %arg1[%c3_320, %c11_321] : memref<4x16xf32, #tpu.memory_space<smem>>
    %537 = vector.broadcast %536 : f32 to vector<16x256xf32>
    %538 = arith.addf %535, %537 : vector<16x256xf32>
    %cst_322 = arith.constant 0.000000e+00 : f32
    %539 = vector.broadcast %cst_322 : f32 to vector<16x256xf32>
    %540 = arith.maximumf %538, %539 : vector<16x256xf32>
    %cst_323 = arith.constant dense<0xFF800000> : vector<256xf32>
    %541 = vector.multi_reduction <maximumf>, %540, %cst_323 [0] : vector<16x256xf32> to vector<256xf32>
    %542 = vector.shape_cast %541 : vector<256xf32> to vector<1x256xf32>
    %c27 = arith.constant 27 : index
    %c0_324 = arith.constant 0 : index
    %543 = vector.load %arg7[%c27, %c0_324] : memref<32x256xf32, #tpu.memory_space<vmem>>, vector<1x256xf32>
    tpu.vector_store %arg7[%c27, %c0_324], %542 {strides = array<i32>} : memref<32x256xf32, #tpu.memory_space<vmem>>, vector<1x256xf32>,
    %c0_325 = arith.constant 0 : index
    %c12_326 = arith.constant 12 : index
    %544 = memref.load %arg1[%c0_325, %c12_326] : memref<4x16xf32, #tpu.memory_space<smem>>
    %545 = vector.broadcast %544 : f32 to vector<16x256xf32>
    %546 = arith.mulf %545, %311 : vector<16x256xf32>
    %c1_327 = arith.constant 1 : index
    %c12_328 = arith.constant 12 : index
    %547 = memref.load %arg1[%c1_327, %c12_328] : memref<4x16xf32, #tpu.memory_space<smem>>
    %548 = vector.broadcast %547 : f32 to vector<16x256xf32>
    %549 = arith.mulf %548, %313 : vector<16x256xf32>
    %550 = arith.addf %546, %549 : vector<16x256xf32>
    %c2_329 = arith.constant 2 : index
    %c12_330 = arith.constant 12 : index
    %551 = memref.load %arg1[%c2_329, %c12_330] : memref<4x16xf32, #tpu.memory_space<smem>>
    %552 = vector.broadcast %551 : f32 to vector<16x256xf32>
    %553 = arith.mulf %552, %315 : vector<16x256xf32>
    %554 = arith.addf %550, %553 : vector<16x256xf32>
    %c3_331 = arith.constant 3 : index
    %c12_332 = arith.constant 12 : index
    %555 = memref.load %arg1[%c3_331, %c12_332] : memref<4x16xf32, #tpu.memory_space<smem>>
    %556 = vector.broadcast %555 : f32 to vector<16x256xf32>
    %557 = arith.addf %554, %556 : vector<16x256xf32>
    %cst_333 = arith.constant 0.000000e+00 : f32
    %558 = vector.broadcast %cst_333 : f32 to vector<16x256xf32>
    %559 = arith.maximumf %557, %558 : vector<16x256xf32>
    %cst_334 = arith.constant dense<0xFF800000> : vector<256xf32>
    %560 = vector.multi_reduction <maximumf>, %559, %cst_334 [0] : vector<16x256xf32> to vector<256xf32>
    %561 = vector.shape_cast %560 : vector<256xf32> to vector<1x256xf32>
    %c28 = arith.constant 28 : index
    %c0_335 = arith.constant 0 : index
    %562 = vector.load %arg7[%c28, %c0_335] : memref<32x256xf32, #tpu.memory_space<vmem>>, vector<1x256xf32>
    tpu.vector_store %arg7[%c28, %c0_335], %561 {strides = array<i32>} : memref<32x256xf32, #tpu.memory_space<vmem>>, vector<1x256xf32>,
    %c0_336 = arith.constant 0 : index
    %c13_337 = arith.constant 13 : index
    %563 = memref.load %arg1[%c0_336, %c13_337] : memref<4x16xf32, #tpu.memory_space<smem>>
    %564 = vector.broadcast %563 : f32 to vector<16x256xf32>
    %565 = arith.mulf %564, %311 : vector<16x256xf32>
    %c1_338 = arith.constant 1 : index
    %c13_339 = arith.constant 13 : index
    %566 = memref.load %arg1[%c1_338, %c13_339] : memref<4x16xf32, #tpu.memory_space<smem>>
    %567 = vector.broadcast %566 : f32 to vector<16x256xf32>
    %568 = arith.mulf %567, %313 : vector<16x256xf32>
    %569 = arith.addf %565, %568 : vector<16x256xf32>
    %c2_340 = arith.constant 2 : index
    %c13_341 = arith.constant 13 : index
    %570 = memref.load %arg1[%c2_340, %c13_341] : memref<4x16xf32, #tpu.memory_space<smem>>
    %571 = vector.broadcast %570 : f32 to vector<16x256xf32>
    %572 = arith.mulf %571, %315 : vector<16x256xf32>
    %573 = arith.addf %569, %572 : vector<16x256xf32>
    %c3_342 = arith.constant 3 : index
    %c13_343 = arith.constant 13 : index
    %574 = memref.load %arg1[%c3_342, %c13_343] : memref<4x16xf32, #tpu.memory_space<smem>>
    %575 = vector.broadcast %574 : f32 to vector<16x256xf32>
    %576 = arith.addf %573, %575 : vector<16x256xf32>
    %cst_344 = arith.constant 0.000000e+00 : f32
    %577 = vector.broadcast %cst_344 : f32 to vector<16x256xf32>
    %578 = arith.maximumf %576, %577 : vector<16x256xf32>
    %cst_345 = arith.constant dense<0xFF800000> : vector<256xf32>
    %579 = vector.multi_reduction <maximumf>, %578, %cst_345 [0] : vector<16x256xf32> to vector<256xf32>
    %580 = vector.shape_cast %579 : vector<256xf32> to vector<1x256xf32>
    %c29 = arith.constant 29 : index
    %c0_346 = arith.constant 0 : index
    %581 = vector.load %arg7[%c29, %c0_346] : memref<32x256xf32, #tpu.memory_space<vmem>>, vector<1x256xf32>
    tpu.vector_store %arg7[%c29, %c0_346], %580 {strides = array<i32>} : memref<32x256xf32, #tpu.memory_space<vmem>>, vector<1x256xf32>,
    %c0_347 = arith.constant 0 : index
    %c14_348 = arith.constant 14 : index
    %582 = memref.load %arg1[%c0_347, %c14_348] : memref<4x16xf32, #tpu.memory_space<smem>>
    %583 = vector.broadcast %582 : f32 to vector<16x256xf32>
    %584 = arith.mulf %583, %311 : vector<16x256xf32>
    %c1_349 = arith.constant 1 : index
    %c14_350 = arith.constant 14 : index
    %585 = memref.load %arg1[%c1_349, %c14_350] : memref<4x16xf32, #tpu.memory_space<smem>>
    %586 = vector.broadcast %585 : f32 to vector<16x256xf32>
    %587 = arith.mulf %586, %313 : vector<16x256xf32>
    %588 = arith.addf %584, %587 : vector<16x256xf32>
    %c2_351 = arith.constant 2 : index
    %c14_352 = arith.constant 14 : index
    %589 = memref.load %arg1[%c2_351, %c14_352] : memref<4x16xf32, #tpu.memory_space<smem>>
    %590 = vector.broadcast %589 : f32 to vector<16x256xf32>
    %591 = arith.mulf %590, %315 : vector<16x256xf32>
    %592 = arith.addf %588, %591 : vector<16x256xf32>
    %c3_353 = arith.constant 3 : index
    %c14_354 = arith.constant 14 : index
    %593 = memref.load %arg1[%c3_353, %c14_354] : memref<4x16xf32, #tpu.memory_space<smem>>
    %594 = vector.broadcast %593 : f32 to vector<16x256xf32>
    %595 = arith.addf %592, %594 : vector<16x256xf32>
    %cst_355 = arith.constant 0.000000e+00 : f32
    %596 = vector.broadcast %cst_355 : f32 to vector<16x256xf32>
    %597 = arith.maximumf %595, %596 : vector<16x256xf32>
    %cst_356 = arith.constant dense<0xFF800000> : vector<256xf32>
    %598 = vector.multi_reduction <maximumf>, %597, %cst_356 [0] : vector<16x256xf32> to vector<256xf32>
    %599 = vector.shape_cast %598 : vector<256xf32> to vector<1x256xf32>
    %c30 = arith.constant 30 : index
    %c0_357 = arith.constant 0 : index
    %600 = vector.load %arg7[%c30, %c0_357] : memref<32x256xf32, #tpu.memory_space<vmem>>, vector<1x256xf32>
    tpu.vector_store %arg7[%c30, %c0_357], %599 {strides = array<i32>} : memref<32x256xf32, #tpu.memory_space<vmem>>, vector<1x256xf32>,
    %c0_358 = arith.constant 0 : index
    %c15_359 = arith.constant 15 : index
    %601 = memref.load %arg1[%c0_358, %c15_359] : memref<4x16xf32, #tpu.memory_space<smem>>
    %602 = vector.broadcast %601 : f32 to vector<16x256xf32>
    %603 = arith.mulf %602, %311 : vector<16x256xf32>
    %c1_360 = arith.constant 1 : index
    %c15_361 = arith.constant 15 : index
    %604 = memref.load %arg1[%c1_360, %c15_361] : memref<4x16xf32, #tpu.memory_space<smem>>
    %605 = vector.broadcast %604 : f32 to vector<16x256xf32>
    %606 = arith.mulf %605, %313 : vector<16x256xf32>
    %607 = arith.addf %603, %606 : vector<16x256xf32>
    %c2_362 = arith.constant 2 : index
    %c15_363 = arith.constant 15 : index
    %608 = memref.load %arg1[%c2_362, %c15_363] : memref<4x16xf32, #tpu.memory_space<smem>>
    %609 = vector.broadcast %608 : f32 to vector<16x256xf32>
    %610 = arith.mulf %609, %315 : vector<16x256xf32>
    %611 = arith.addf %607, %610 : vector<16x256xf32>
    %c3_364 = arith.constant 3 : index
    %c15_365 = arith.constant 15 : index
    %612 = memref.load %arg1[%c3_364, %c15_365] : memref<4x16xf32, #tpu.memory_space<smem>>
    %613 = vector.broadcast %612 : f32 to vector<16x256xf32>
    %614 = arith.addf %611, %613 : vector<16x256xf32>
    %cst_366 = arith.constant 0.000000e+00 : f32
    %615 = vector.broadcast %cst_366 : f32 to vector<16x256xf32>
    %616 = arith.maximumf %614, %615 : vector<16x256xf32>
    %cst_367 = arith.constant dense<0xFF800000> : vector<256xf32>
    %617 = vector.multi_reduction <maximumf>, %616, %cst_367 [0] : vector<16x256xf32> to vector<256xf32>
    %618 = vector.shape_cast %617 : vector<256xf32> to vector<1x256xf32>
    %c31 = arith.constant 31 : index
    %c0_368 = arith.constant 0 : index
    %619 = vector.load %arg7[%c31, %c0_368] : memref<32x256xf32, #tpu.memory_space<vmem>>, vector<1x256xf32>
    tpu.vector_store %arg7[%c31, %c0_368], %618 {strides = array<i32>} : memref<32x256xf32, #tpu.memory_space<vmem>>, vector<1x256xf32>,
    %c0_369 = arith.constant 0 : index
    %c0_370 = arith.constant 0 : index
    %620 = vector.load %arg7[%c0_369, %c0_370] : memref<32x256xf32, #tpu.memory_space<vmem>>, vector<32x256xf32>
    %c0_371 = arith.constant 0 : index
    %c0_372 = arith.constant 0 : index
    %621 = vector.load %arg4[%c0_371, %c0_372] : memref<32x4xf32, #tpu.memory_space<vmem>>, vector<32x1xf32>
    %c0_373 = arith.constant 0 : index
    %c1_374 = arith.constant 1 : index
    %622 = vector.load %arg4[%c0_373, %c1_374] : memref<32x4xf32, #tpu.memory_space<vmem>>, vector<16x1xf32>
    %c0_375 = arith.constant 0 : index
    %c2_376 = arith.constant 2 : index
    %623 = vector.load %arg4[%c0_375, %c2_376] : memref<32x4xf32, #tpu.memory_space<vmem>>, vector<16x1xf32>
    %c0_377 = arith.constant 0 : index
    %c3_378 = arith.constant 3 : index
    %624 = vector.load %arg4[%c0_377, %c3_378] : memref<32x4xf32, #tpu.memory_space<vmem>>, vector<1x1xf32>
    %c0_379 = arith.constant 0 : index
    %c0_380 = arith.constant 0 : index
    %625 = vector.load %arg2[%c0_379, %c0_380] : memref<32x32xf32, #tpu.memory_space<vmem>>, vector<32x32xf32>
    %cst_381 = arith.constant dense<0.000000e+00> : vector<32x256xf32>
    %626 = tpu.matmul %625, %620, %cst_381 {dimension_numbers = #tpu.dot_dimension_numbers<[1], [0], [0], [1], [0, 0, 1, 1], [], []>} : vector<32x32xf32>, vector<32x256xf32>, vector<32x256xf32> -> vector<32x256xf32>
    %627 = vector.broadcast %621 : vector<32x1xf32> to vector<32x256xf32>
    %628 = arith.addf %626, %627 : vector<32x256xf32>
    %cst_382 = arith.constant 0.000000e+00 : f32
    %629 = vector.broadcast %cst_382 : f32 to vector<32x256xf32>
    %630 = arith.maximumf %628, %629 : vector<32x256xf32>
    %c0_383 = arith.constant 0 : index
    %c0_384 = arith.constant 0 : index
    %631 = vector.load %arg3[%c0_383, %c0_384] : memref<16x32xf32, #tpu.memory_space<vmem>>, vector<16x32xf32>
    %cst_385 = arith.constant dense<0.000000e+00> : vector<16x256xf32>
    %632 = tpu.matmul %631, %630, %cst_385 {dimension_numbers = #tpu.dot_dimension_numbers<[1], [0], [0], [1], [0, 0, 1, 1], [], []>} : vector<16x32xf32>, vector<32x256xf32>, vector<16x256xf32> -> vector<16x256xf32>
    %633 = vector.broadcast %622 : vector<16x1xf32> to vector<16x256xf32>
    %634 = arith.addf %632, %633 : vector<16x256xf32>
    %cst_386 = arith.constant 0.000000e+00 : f32
    %635 = vector.broadcast %cst_386 : f32 to vector<16x256xf32>
    %636 = arith.maximumf %634, %635 : vector<16x256xf32>
    %637 = vector.broadcast %623 : vector<16x1xf32> to vector<16x256xf32>
    %638 = arith.mulf %636, %637 : vector<16x256xf32>
    %cst_387 = arith.constant dense<0.000000e+00> : vector<256xf32>
    %639 = vector.multi_reduction <add>, %638, %cst_387 [0] : vector<16x256xf32> to vector<256xf32>
    %640 = vector.shape_cast %639 : vector<256xf32> to vector<1x256xf32>
    %641 = vector.broadcast %624 : vector<1x1xf32> to vector<1x256xf32>
    %642 = arith.addf %640, %641 : vector<1x256xf32>
    %cst_388 = arith.constant 0.000000e+00 : f32
    %643 = vector.broadcast %cst_388 : f32 to vector<1x256xf32>
    %644 = arith.maximumf %642, %643 : vector<1x256xf32>
    %645 = arith.mulf %630, %630 : vector<32x256xf32>
    %cst_389 = arith.constant dense<0.000000e+00> : vector<256xf32>
    %646 = vector.multi_reduction <add>, %645, %cst_389 [0] : vector<32x256xf32> to vector<256xf32>
    %647 = vector.shape_cast %646 : vector<256xf32> to vector<1x256xf32>
    %cst_390 = arith.constant 1.000000e-24 : f32
    %648 = vector.broadcast %cst_390 : f32 to vector<1x256xf32>
    %649 = arith.maximumf %647, %648 : vector<1x256xf32>
    %650 = math.rsqrt %649 : vector<1x256xf32>
    %651 = vector.broadcast %650 : vector<1x256xf32> to vector<32x256xf32>
    %652 = arith.mulf %630, %651 : vector<32x256xf32>
    %c0_391 = arith.constant 0 : index
    %c0_392 = arith.constant 0 : index
    %653 = vector.load %arg5[%c0_391, %c0_392] : memref<32x256xf32, #tpu.memory_space<vmem>>, vector<32x256xf32>
    tpu.vector_store %arg5[%c0_391, %c0_392], %652 {strides = array<i32>} : memref<32x256xf32, #tpu.memory_space<vmem>>, vector<32x256xf32>,
    %654 = tpu.iota {dimensions = array<i32: 0>} : vector<256x8xi32>
    %655 = tpu.iota {dimensions = array<i32: 1>} : vector<256x8xi32>
    %c32_i32 = arith.constant 32 : i32
    %656 = vector.broadcast %c32_i32 : i32 to vector<256x8xi32>
    %657 = arith.muli %655, %656 : vector<256x8xi32>
    %658 = arith.cmpi sge, %654, %657 : vector<256x8xi32>
    %c1_i32 = arith.constant 1 : i32
    %659 = vector.broadcast %c1_i32 : i32 to vector<256x8xi32>
    %660 = arith.addi %655, %659 : vector<256x8xi32>
    %c32_i32_393 = arith.constant 32 : i32
    %661 = vector.broadcast %c32_i32_393 : i32 to vector<256x8xi32>
    %662 = arith.muli %660, %661 : vector<256x8xi32>
    %663 = arith.cmpi slt, %654, %662 : vector<256x8xi32>
    %664 = arith.andi %658, %663 : vector<256x8xi1>
    %cst_394 = arith.constant 3.125000e-02 : f32
    %cst_395 = arith.constant 0.000000e+00 : f32
    %665 = vector.broadcast %cst_394 : f32 to vector<256x8xf32>
    %666 = vector.broadcast %cst_395 : f32 to vector<256x8xf32>
    %667 = arith.select %664, %665, %666 : vector<256x8xi1>, vector<256x8xf32>
    %668 = vector.broadcast %644 : vector<1x256xf32> to vector<32x256xf32>
    %669 = arith.mulf %630, %668 : vector<32x256xf32>
    %cst_396 = arith.constant dense<0.000000e+00> : vector<32x8xf32>
    %670 = tpu.matmul %669, %667, %cst_396 {dimension_numbers = #tpu.dot_dimension_numbers<[1], [0], [0], [1], [0, 0, 1, 1], [], []>} : vector<32x256xf32>, vector<256x8xf32>, vector<32x8xf32> -> vector<32x8xf32>
    %671 = arith.mulf %670, %670 : vector<32x8xf32>
    %cst_397 = arith.constant dense<0.000000e+00> : vector<8xf32>
    %672 = vector.multi_reduction <add>, %671, %cst_397 [0] : vector<32x8xf32> to vector<8xf32>
    %673 = vector.shape_cast %672 : vector<8xf32> to vector<1x8xf32>
    %cst_398 = arith.constant 1.000000e-24 : f32
    %674 = vector.broadcast %cst_398 : f32 to vector<1x8xf32>
    %675 = arith.maximumf %673, %674 : vector<1x8xf32>
    %676 = math.rsqrt %675 : vector<1x8xf32>
    %677 = vector.broadcast %676 : vector<1x8xf32> to vector<32x8xf32>
    %678 = arith.mulf %670, %677 : vector<32x8xf32>
    %c0_399 = arith.constant 0 : index
    %c0_400 = arith.constant 0 : index
    %679 = vector.load %arg6[%c0_399, %c0_400] : memref<32x8xf32, #tpu.memory_space<vmem>>, vector<32x8xf32>
    tpu.vector_store %arg6[%c0_399, %c0_400], %678 {strides = array<i32>} : memref<32x8xf32, #tpu.memory_space<vmem>>, vector<32x8xf32>,
    return
  }
}

</mosaic_0001>

<llo_original>
// kernel: neg.6
$region0: #{neg.6}
  #allocation0 [shape = 's32[1]{0}', space=sflag, size = 0x4, scoped, tag = 'scoped memory for neg.6']
  %s0 = inlined_call_operand.vmem [shape: f32[8,64,64], index: 0, kind: input, shape index: {}]
  %s1 = inlined_call_operand.vmem [shape: f32[8,64,64], index: 1, kind: output, shape index: {}]
  %v2 = vld [vmem:[%s0] sm:$0xff]
  %3 = xla_tuple %v2
  %4 = xla_tuple %3
  %v5 = vxor.u32 %v2, 2147483648
  %6 = xla_tuple %v5
  %7 = vst [vmem:[%s1] sm:$0xff] %v5
  %s8 = scalar_lea.vmem %s0, 64
  %v9 = vld [vmem:[%s8] sm:$0xff]
  %10 = xla_tuple %v9
  %11 = xla_tuple %10
  %v12 = vxor.u32 %v9, 2147483648
  %13 = xla_tuple %v12
  %s14 = scalar_lea.vmem %s1, 64
  %15 = vst [vmem:[%s14] sm:$0xff] %v12
  %s16 = scalar_lea.vmem %s0, 128
  %v17 = vld [vmem:[%s16] sm:$0xff]
  %18 = xla_tuple %v17
  %19 = xla_tuple %18
  %v20 = vxor.u32 %v17, 2147483648
  %21 = xla_tuple %v20
  %s22 = scalar_lea.vmem %s1, 128
  %23 = vst [vmem:[%s22] sm:$0xff] %v20
  %s24 = scalar_lea.vmem %s0, 192
  %v25 = vld [vmem:[%s24] sm:$0xff]
  %26 = xla_tuple %v25
  %27 = xla_tuple %26
  %v28 = vxor.u32 %v25, 2147483648
  %29 = xla_tuple %v28
  %s30 = scalar_lea.vmem %s1, 192
  %31 = vst [vmem:[%s30] sm:$0xff] %v28
  %s32 = scalar_lea.vmem %s0, 256
  %v33 = vld [vmem:[%s32] sm:$0xff]
  %34 = xla_tuple %v33
  %35 = xla_tuple %34
  %v36 = vxor.u32 %v33, 2147483648
  %37 = xla_tuple %v36
  %s38 = scalar_lea.vmem %s1, 256
  %39 = vst [vmem:[%s38] sm:$0xff] %v36
  %s40 = scalar_lea.vmem %s0, 320
  %v41 = vld [vmem:[%s40] sm:$0xff]
  %42 = xla_tuple %v41
  %43 = xla_tuple %42
  %v44 = vxor.u32 %v41, 2147483648
  %45 = xla_tuple %v44
  %s46 = scalar_lea.vmem %s1, 320
  %47 = vst [vmem:[%s46] sm:$0xff] %v44
  %s48 = scalar_lea.vmem %s0, 384
  %v49 = vld [vmem:[%s48] sm:$0xff]
  %50 = xla_tuple %v49
  %51 = xla_tuple %50
  %v52 = vxor.u32 %v49, 2147483648
  %53 = xla_tuple %v52
  %s54 = scalar_lea.vmem %s1, 384
  %55 = vst [vmem:[%s54] sm:$0xff] %v52
  %s56 = scalar_lea.vmem %s0, 448
  %v57 = vld [vmem:[%s56] sm:$0xff]
  %58 = xla_tuple %v57
  %59 = xla_tuple %58
  %v60 = vxor.u32 %v57, 2147483648
  %61 = xla_tuple %v60
  %s62 = scalar_lea.vmem %s1, 448
  %63 = vst [vmem:[%s62] sm:$0xff] %v60
  %s64 = scalar_lea.vmem %s0, 8
  %v65 = vld [vmem:[%s64] sm:$0xff]
  %66 = xla_tuple %v65
  %67 = xla_tuple %66
  %v68 = vxor.u32 %v65, 2147483648
  %69 = xla_tuple %v68
  %s70 = scalar_lea.vmem %s1, 8
  %71 = vst [vmem:[%s70] sm:$0xff] %v68
  %s72 = scalar_lea.vmem %s0, 72
  %v73 = vld [vmem:[%s72] sm:$0xff]
  %74 = xla_tuple %v73
  %75 = xla_tuple %74
  %v76 = vxor.u32 %v73, 2147483648
  %77 = xla_tuple %v76
  %s78 = scalar_lea.vmem %s1, 72
  %79 = vst [vmem:[%s78] sm:$0xff] %v76
  %s80 = scalar_lea.vmem %s0, 136
  %v81 = vld [vmem:[%s80] sm:$0xff]
  %82 = xla_tuple %v81
  %83 = xla_tuple %82
  %v84 = vxor.u32 %v81, 2147483648
  %85 = xla_tuple %v84
  %s86 = scalar_lea.vmem %s1, 136
  %87 = vst [vmem:[%s86] sm:$0xff] %v84
  %s88 = scalar_lea.vmem %s0, 200
  %v89 = vld [vmem:[%s88] sm:$0xff]
  %90 = xla_tuple %v89
  %91 = xla_tuple %90
  %v92 = vxor.u32 %v89, 2147483648
  %93 = xla_tuple %v92
  %s94 = scalar_lea.vmem %s1, 200
  %95 = vst [vmem:[%s94] sm:$0xff] %v92
  %s96 = scalar_lea.vmem %s0, 264
  %v97 = vld [vmem:[%s96] sm:$0xff]
  %98 = xla_tuple %v97
  %99 = xla_tuple %98
  %v100 = vxor.u32 %v97, 2147483648
  %101 = xla_tuple %v100
  %s102 = scalar_lea.vmem %s1, 264
  %103 = vst [vmem:[%s102] sm:$0xff] %v100
  %s104 = scalar_lea.vmem %s0, 328
  %v105 = vld [vmem:[%s104] sm:$0xff]
  %106 = xla_tuple %v105
  %107 = xla_tuple %106
  %v108 = vxor.u32 %v105, 2147483648
  %109 = xla_tuple %v108
  %s110 = scalar_lea.vmem %s1, 328
  %111 = vst [vmem:[%s110] sm:$0xff] %v108
  %s112 = scalar_lea.vmem %s0, 392
  %v113 = vld [vmem:[%s112] sm:$0xff]
  %114 = xla_tuple %v113
  %115 = xla_tuple %114
  %v116 = vxor.u32 %v113, 2147483648
  %117 = xla_tuple %v116
  %s118 = scalar_lea.vmem %s1, 392
  %119 = vst [vmem:[%s118] sm:$0xff] %v116
  %s120 = scalar_lea.vmem %s0, 456
  %v121 = vld [vmem:[%s120] sm:$0xff]
  %122 = xla_tuple %v121
  %123 = xla_tuple %122
  %v124 = vxor.u32 %v121, 2147483648
  %125 = xla_tuple %v124
  %s126 = scalar_lea.vmem %s1, 456
  %127 = vst [vmem:[%s126] sm:$0xff] %v124
  %s128 = scalar_lea.vmem %s0, 16
  %v129 = vld [vmem:[%s128] sm:$0xff]
  %130 = xla_tuple %v129
  %131 = xla_tuple %130
  %v132 = vxor.u32 %v129, 2147483648
  %133 = xla_tuple %v132
  %s134 = scalar_lea.vmem %s1, 16
  %135 = vst [vmem:[%s134] sm:$0xff] %v132
  %s136 = scalar_lea.vmem %s0, 80
  %v137 = vld [vmem:[%s136] sm:$0xff]
  %138 = xla_tuple %v137
  %139 = xla_tuple %138
  %v140 = vxor.u32 %v137, 2147483648
  %141 = xla_tuple %v140
  %s142 = scalar_lea.vmem %s1, 80
  %143 = vst [vmem:[%s142] sm:$0xff] %v140
  %s144 = scalar_lea.vmem %s0, 144
  %v145 = vld [vmem:[%s144] sm:$0xff]
  %146 = xla_tuple %v145
  %147 = xla_tuple %146
  %v148 = vxor.u32 %v145, 2147483648
  %149 = xla_tuple %v148
  %s150 = scalar_lea.vmem %s1, 144
  %151 = vst [vmem:[%s150] sm:$0xff] %v148
  %s152 = scalar_lea.vmem %s0, 208
  %v153 = vld [vmem:[%s152] sm:$0xff]
  %154 = xla_tuple %v153
  %155 = xla_tuple %154
  %v156 = vxor.u32 %v153, 2147483648
  %157 = xla_tuple %v156
  %s158 = scalar_lea.vmem %s1, 208
  %159 = vst [vmem:[%s158] sm:$0xff] %v156
  %s160 = scalar_lea.vmem %s0, 272
  %v161 = vld [vmem:[%s160] sm:$0xff]
  %162 = xla_tuple %v161
  %163 = xla_tuple %162
  %v164 = vxor.u32 %v161, 2147483648
  %165 = xla_tuple %v164
  %s166 = scalar_lea.vmem %s1, 272
  %167 = vst [vmem:[%s166] sm:$0xff] %v164
  %s168 = scalar_lea.vmem %s0, 336
  %v169 = vld [vmem:[%s168] sm:$0xff]
  %170 = xla_tuple %v169
  %171 = xla_tuple %170
  %v172 = vxor.u32 %v169, 2147483648
  %173 = xla_tuple %v172
  %s174 = scalar_lea.vmem %s1, 336
  %175 = vst [vmem:[%s174] sm:$0xff] %v172
  %s176 = scalar_lea.vmem %s0, 400
  %v177 = vld [vmem:[%s176] sm:$0xff]
  %178 = xla_tuple %v177
  %179 = xla_tuple %178
  %v180 = vxor.u32 %v177, 2147483648
  %181 = xla_tuple %v180
  %s182 = scalar_lea.vmem %s1, 400
  %183 = vst [vmem:[%s182] sm:$0xff] %v180
  %s184 = scalar_lea.vmem %s0, 464
  %v185 = vld [vmem:[%s184] sm:$0xff]
  %186 = xla_tuple %v185
  %187 = xla_tuple %186
  %v188 = vxor.u32 %v185, 2147483648
  %189 = xla_tuple %v188
  %s190 = scalar_lea.vmem %s1, 464
  %191 = vst [vmem:[%s190] sm:$0xff] %v188
  %s192 = scalar_lea.vmem %s0, 24
  %v193 = vld [vmem:[%s192] sm:$0xff]
  %194 = xla_tuple %v193
  %195 = xla_tuple %194
  %v196 = vxor.u32 %v193, 2147483648
  %197 = xla_tuple %v196
  %s198 = scalar_lea.vmem %s1, 24
  %199 = vst [vmem:[%s198] sm:$0xff] %v196
  %s200 = scalar_lea.vmem %s0, 88
  %v201 = vld [vmem:[%s200] sm:$0xff]
  %202 = xla_tuple %v201
  %203 = xla_tuple %202
  %v204 = vxor.u32 %v201, 2147483648
  %205 = xla_tuple %v204
  %s206 = scalar_lea.vmem %s1, 88
  %207 = vst [vmem:[%s206] sm:$0xff] %v204
  %s208 = scalar_lea.vmem %s0, 152
  %v209 = vld [vmem:[%s208] sm:$0xff]
  %210 = xla_tuple %v209
  %211 = xla_tuple %210
  %v212 = vxor.u32 %v209, 2147483648
  %213 = xla_tuple %v212
  %s214 = scalar_lea.vmem %s1, 152
  %215 = vst [vmem:[%s214] sm:$0xff] %v212
  %s216 = scalar_lea.vmem %s0, 216
  %v217 = vld [vmem:[%s216] sm:$0xff]
  %218 = xla_tuple %v217
  %219 = xla_tuple %218
  %v220 = vxor.u32 %v217, 2147483648
  %221 = xla_tuple %v220
  %s222 = scalar_lea.vmem %s1, 216
  %223 = vst [vmem:[%s222] sm:$0xff] %v220
  %s224 = scalar_lea.vmem %s0, 280
  %v225 = vld [vmem:[%s224] sm:$0xff]
  %226 = xla_tuple %v225
  %227 = xla_tuple %226
  %v228 = vxor.u32 %v225, 2147483648
  %229 = xla_tuple %v228
  %s230 = scalar_lea.vmem %s1, 280
  %231 = vst [vmem:[%s230] sm:$0xff] %v228
  %s232 = scalar_lea.vmem %s0, 344
  %v233 = vld [vmem:[%s232] sm:$0xff]
  %234 = xla_tuple %v233
  %235 = xla_tuple %234
  %v236 = vxor.u32 %v233, 2147483648
  %237 = xla_tuple %v236
  %s238 = scalar_lea.vmem %s1, 344
  %239 = vst [vmem:[%s238] sm:$0xff] %v236
  %s240 = scalar_lea.vmem %s0, 408
  %v241 = vld [vmem:[%s240] sm:$0xff]
  %242 = xla_tuple %v241
  %243 = xla_tuple %242
  %v244 = vxor.u32 %v241, 2147483648
  %245 = xla_tuple %v244
  %s246 = scalar_lea.vmem %s1, 408
  %247 = vst [vmem:[%s246] sm:$0xff] %v244
  %s248 = scalar_lea.vmem %s0, 472
  %v249 = vld [vmem:[%s248] sm:$0xff]
  %250 = xla_tuple %v249
  %251 = xla_tuple %250
  %v252 = vxor.u32 %v249, 2147483648
  %253 = xla_tuple %v252
  %s254 = scalar_lea.vmem %s1, 472
  %255 = vst [vmem:[%s254] sm:$0xff] %v252
  %s256 = scalar_lea.vmem %s0, 32
  %v257 = vld [vmem:[%s256] sm:$0xff]
  %258 = xla_tuple %v257
  %259 = xla_tuple %258
  %v260 = vxor.u32 %v257, 2147483648
  %261 = xla_tuple %v260
  %s262 = scalar_lea.vmem %s1, 32
  %263 = vst [vmem:[%s262] sm:$0xff] %v260
  %s264 = scalar_lea.vmem %s0, 96
  %v265 = vld [vmem:[%s264] sm:$0xff]
  %266 = xla_tuple %v265
  %267 = xla_tuple %266
  %v268 = vxor.u32 %v265, 2147483648
  %269 = xla_tuple %v268
  %s270 = scalar_lea.vmem %s1, 96
  %271 = vst [vmem:[%s270] sm:$0xff] %v268
  %s272 = scalar_lea.vmem %s0, 160
  %v273 = vld [vmem:[%s272] sm:$0xff]
  %274 = xla_tuple %v273
  %275 = xla_tuple %274
  %v276 = vxor.u32 %v273, 2147483648
  %277 = xla_tuple %v276
  %s278 = scalar_lea.vmem %s1, 160
  %279 = vst [vmem:[%s278] sm:$0xff] %v276
  %s280 = scalar_lea.vmem %s0, 224
  %v281 = vld [vmem:[%s280] sm:$0xff]
  %282 = xla_tuple %v281
  %283 = xla_tuple %282
  %v284 = vxor.u32 %v281, 2147483648
  %285 = xla_tuple %v284
  %s286 = scalar_lea.vmem %s1, 224
  %287 = vst [vmem:[%s286] sm:$0xff] %v284
  %s288 = scalar_lea.vmem %s0, 288
  %v289 = vld [vmem:[%s288] sm:$0xff]
  %290 = xla_tuple %v289
  %291 = xla_tuple %290
  %v292 = vxor.u32 %v289, 2147483648
  %293 = xla_tuple %v292
  %s294 = scalar_lea.vmem %s1, 288
  %295 = vst [vmem:[%s294] sm:$0xff] %v292
  %s296 = scalar_lea.vmem %s0, 352
  %v297 = vld [vmem:[%s296] sm:$0xff]
  %298 = xla_tuple %v297
  %299 = xla_tuple %298
  %v300 = vxor.u32 %v297, 2147483648
  %301 = xla_tuple %v300
  %s302 = scalar_lea.vmem %s1, 352
  %303 = vst [vmem:[%s302] sm:$0xff] %v300
  %s304 = scalar_lea.vmem %s0, 416
  %v305 = vld [vmem:[%s304] sm:$0xff]
  %306 = xla_tuple %v305
  %307 = xla_tuple %306
  %v308 = vxor.u32 %v305, 2147483648
  %309 = xla_tuple %v308
  %s310 = scalar_lea.vmem %s1, 416
  %311 = vst [vmem:[%s310] sm:$0xff] %v308
  %s312 = scalar_lea.vmem %s0, 480
  %v313 = vld [vmem:[%s312] sm:$0xff]
  %314 = xla_tuple %v313
  %315 = xla_tuple %314
  %v316 = vxor.u32 %v313, 2147483648
  %317 = xla_tuple %v316
  %s318 = scalar_lea.vmem %s1, 480
  %319 = vst [vmem:[%s318] sm:$0xff] %v316
  %s320 = scalar_lea.vmem %s0, 40
  %v321 = vld [vmem:[%s320] sm:$0xff]
  %322 = xla_tuple %v321
  %323 = xla_tuple %322
  %v324 = vxor.u32 %v321, 2147483648
  %325 = xla_tuple %v324
  %s326 = scalar_lea.vmem %s1, 40
  %327 = vst [vmem:[%s326] sm:$0xff] %v324
  %s328 = scalar_lea.vmem %s0, 104
  %v329 = vld [vmem:[%s328] sm:$0xff]
  %330 = xla_tuple %v329
  %331 = xla_tuple %330
  %v332 = vxor.u32 %v329, 2147483648
  %333 = xla_tuple %v332
  %s334 = scalar_lea.vmem %s1, 104
  %335 = vst [vmem:[%s334] sm:$0xff] %v332
  %s336 = scalar_lea.vmem %s0, 168
  %v337 = vld [vmem:[%s336] sm:$0xff]
  %338 = xla_tuple %v337
  %339 = xla_tuple %338
  %v340 = vxor.u32 %v337, 2147483648
  %341 = xla_tuple %v340
  %s342 = scalar_lea.vmem %s1, 168
  %343 = vst [vmem:[%s342] sm:$0xff] %v340
  %s344 = scalar_lea.vmem %s0, 232
  %v345 = vld [vmem:[%s344] sm:$0xff]
  %346 = xla_tuple %v345
  %347 = xla_tuple %346
  %v348 = vxor.u32 %v345, 2147483648
  %349 = xla_tuple %v348
  %s350 = scalar_lea.vmem %s1, 232
  %351 = vst [vmem:[%s350] sm:$0xff] %v348
  %s352 = scalar_lea.vmem %s0, 296
  %v353 = vld [vmem:[%s352] sm:$0xff]
  %354 = xla_tuple %v353
  %355 = xla_tuple %354
  %v356 = vxor.u32 %v353, 2147483648
  %357 = xla_tuple %v356
  %s358 = scalar_lea.vmem %s1, 296
  %359 = vst [vmem:[%s358] sm:$0xff] %v356
  %s360 = scalar_lea.vmem %s0, 360
  %v361 = vld [vmem:[%s360] sm:$0xff]
  %362 = xla_tuple %v361
  %363 = xla_tuple %362
  %v364 = vxor.u32 %v361, 2147483648
  %365 = xla_tuple %v364
  %s366 = scalar_lea.vmem %s1, 360
  %367 = vst [vmem:[%s366] sm:$0xff] %v364
  %s368 = scalar_lea.vmem %s0, 424
  %v369 = vld [vmem:[%s368] sm:$0xff]
  %370 = xla_tuple %v369
  %371 = xla_tuple %370
  %v372 = vxor.u32 %v369, 2147483648
  %373 = xla_tuple %v372
  %s374 = scalar_lea.vmem %s1, 424
  %375 = vst [vmem:[%s374] sm:$0xff] %v372
  %s376 = scalar_lea.vmem %s0, 488
  %v377 = vld [vmem:[%s376] sm:$0xff]
  %378 = xla_tuple %v377
  %379 = xla_tuple %378
  %v380 = vxor.u32 %v377, 2147483648
  %381 = xla_tuple %v380
  %s382 = scalar_lea.vmem %s1, 488
  %383 = vst [vmem:[%s382] sm:$0xff] %v380
  %s384 = scalar_lea.vmem %s0, 48
  %v385 = vld [vmem:[%s384] sm:$0xff]
  %386 = xla_tuple %v385
  %387 = xla_tuple %386
  %v388 = vxor.u32 %v385, 2147483648
  %389 = xla_tuple %v388
  %s390 = scalar_lea.vmem %s1, 48
  %391 = vst [vmem:[%s390] sm:$0xff] %v388
  %s392 = scalar_lea.vmem %s0, 112
  %v393 = vld [vmem:[%s392] sm:$0xff]
  %394 = xla_tuple %v393
  %395 = xla_tuple %394
  %v396 = vxor.u32 %v393, 2147483648
  %397 = xla_tuple %v396
  %s398 = scalar_lea.vmem %s1, 112
  %399 = vst [vmem:[%s398] sm:$0xff] %v396
  %s400 = scalar_lea.vmem %s0, 176
  %v401 = vld [vmem:[%s400] sm:$0xff]
  %402 = xla_tuple %v401
  %403 = xla_tuple %402
  %v404 = vxor.u32 %v401, 2147483648
  %405 = xla_tuple %v404
  %s406 = scalar_lea.vmem %s1, 176
  %407 = vst [vmem:[%s406] sm:$0xff] %v404
  %s408 = scalar_lea.vmem %s0, 240
  %v409 = vld [vmem:[%s408] sm:$0xff]
  %410 = xla_tuple %v409
  %411 = xla_tuple %410
  %v412 = vxor.u32 %v409, 2147483648
  %413 = xla_tuple %v412
  %s414 = scalar_lea.vmem %s1, 240
  %415 = vst [vmem:[%s414] sm:$0xff] %v412
  %s416 = scalar_lea.vmem %s0, 304
  %v417 = vld [vmem:[%s416] sm:$0xff]
  %418 = xla_tuple %v417
  %419 = xla_tuple %418
  %v420 = vxor.u32 %v417, 2147483648
  %421 = xla_tuple %v420
  %s422 = scalar_lea.vmem %s1, 304
  %423 = vst [vmem:[%s422] sm:$0xff] %v420
  %s424 = scalar_lea.vmem %s0, 368
  %v425 = vld [vmem:[%s424] sm:$0xff]
  %426 = xla_tuple %v425
  %427 = xla_tuple %426
  %v428 = vxor.u32 %v425, 2147483648
  %429 = xla_tuple %v428
  %s430 = scalar_lea.vmem %s1, 368
  %431 = vst [vmem:[%s430] sm:$0xff] %v428
  %s432 = scalar_lea.vmem %s0, 432
  %v433 = vld [vmem:[%s432] sm:$0xff]
  %434 = xla_tuple %v433
  %435 = xla_tuple %434
  %v436 = vxor.u32 %v433, 2147483648
  %437 = xla_tuple %v436
  %s438 = scalar_lea.vmem %s1, 432
  %439 = vst [vmem:[%s438] sm:$0xff] %v436
  %s440 = scalar_lea.vmem %s0, 496
  %v441 = vld [vmem:[%s440] sm:$0xff]
  %442 = xla_tuple %v441
  %443 = xla_tuple %442
  %v444 = vxor.u32 %v441, 2147483648
  %445 = xla_tuple %v444
  %s446 = scalar_lea.vmem %s1, 496
  %447 = vst [vmem:[%s446] sm:$0xff] %v444
  %s448 = scalar_lea.vmem %s0, 56
  %v449 = vld [vmem:[%s448] sm:$0xff]
  %450 = xla_tuple %v449
  %451 = xla_tuple %450
  %v452 = vxor.u32 %v449, 2147483648
  %453 = xla_tuple %v452
  %s454 = scalar_lea.vmem %s1, 56
  %455 = vst [vmem:[%s454] sm:$0xff] %v452
  %s456 = scalar_lea.vmem %s0, 120
  %v457 = vld [vmem:[%s456] sm:$0xff]
  %458 = xla_tuple %v457
  %459 = xla_tuple %458
  %v460 = vxor.u32 %v457, 2147483648
  %461 = xla_tuple %v460
  %s462 = scalar_lea.vmem %s1, 120
  %463 = vst [vmem:[%s462] sm:$0xff] %v460
  %s464 = scalar_lea.vmem %s0, 184
  %v465 = vld [vmem:[%s464] sm:$0xff]
  %466 = xla_tuple %v465
  %467 = xla_tuple %466
  %v468 = vxor.u32 %v465, 2147483648
  %469 = xla_tuple %v468
  %s470 = scalar_lea.vmem %s1, 184
  %471 = vst [vmem:[%s470] sm:$0xff] %v468
  %s472 = scalar_lea.vmem %s0, 248
  %v473 = vld [vmem:[%s472] sm:$0xff]
  %474 = xla_tuple %v473
  %475 = xla_tuple %474
  %v476 = vxor.u32 %v473, 2147483648
  %477 = xla_tuple %v476
  %s478 = scalar_lea.vmem %s1, 248
  %479 = vst [vmem:[%s478] sm:$0xff] %v476
  %s480 = scalar_lea.vmem %s0, 312
  %v481 = vld [vmem:[%s480] sm:$0xff]
  %482 = xla_tuple %v481
  %483 = xla_tuple %482
  %v484 = vxor.u32 %v481, 2147483648
  %485 = xla_tuple %v484
  %s486 = scalar_lea.vmem %s1, 312
  %487 = vst [vmem:[%s486] sm:$0xff] %v484
  %s488 = scalar_lea.vmem %s0, 376
  %v489 = vld [vmem:[%s488] sm:$0xff]
  %490 = xla_tuple %v489
  %491 = xla_tuple %490
  %v492 = vxor.u32 %v489, 2147483648
  %493 = xla_tuple %v492
  %s494 = scalar_lea.vmem %s1, 376
  %495 = vst [vmem:[%s494] sm:$0xff] %v492
  %s496 = scalar_lea.vmem %s0, 440
  %v497 = vld [vmem:[%s496] sm:$0xff]
  %498 = xla_tuple %v497
  %499 = xla_tuple %498
  %v500 = vxor.u32 %v497, 2147483648
  %501 = xla_tuple %v500
  %s502 = scalar_lea.vmem %s1, 440
  %503 = vst [vmem:[%s502] sm:$0xff] %v500
  %s504 = scalar_lea.vmem %s0, 504
  %v505 = vld [vmem:[%s504] sm:$0xff]
  %506 = xla_tuple %v505
  %507 = xla_tuple %506
  %v508 = vxor.u32 %v505, 2147483648
  %509 = xla_tuple %v508
  %s510 = scalar_lea.vmem %s1, 504
  %511 = vst [vmem:[%s510] sm:$0xff] %v508

// kernel: mini_spin_net_forward.1
$region0: #{mini_spin_net_forward.1}
  #allocation0 [shape = 'u32[]', space=smem, size = 0x4, offset = 0x4, fixed_abs, tag = 'smem constant byte address 0x4 - core index']
  #allocation1 [shape = 'u32[144,128]{1,0:T(1,128)}', space=vmem, size = 0x12000, scoped, tag = 'internal scratch']
  #allocation2 [shape = 'f32[32,256]{1,0:T(8,128)}', space=vmem, size = 0x8000, scoped, tag = 'scratch operand']
  %s0 = inlined_call_operand.vmem [shape: f32[3,32,256], index: 0, kind: input, shape index: {}]
  %s1 = inlined_call_operand.vmem [shape: f32[4,16], index: 1, kind: input, shape index: {}]
  %s2 = inlined_call_operand.vmem [shape: f32[32,32], index: 2, kind: input, shape index: {}]
  %s3 = inlined_call_operand.vmem [shape: f32[16,32], index: 3, kind: input, shape index: {}]
  %s4 = inlined_call_operand.vmem [shape: f32[32,4], index: 4, kind: input, shape index: {}]
  %s5 = inlined_call_operand.vmem [shape: f32[32,256], index: 5, kind: output, shape index: {0}]
  %s6 = inlined_call_operand.vmem [shape: f32[32,8], index: 6, kind: output, shape index: {1}]
  %7 = xla_tuple %s5, %s6
  %s8 = sld [smem:[#allocation0]]
  $region42: #{mini_spin_net_forward.1} parent=0
    _
  %s10 = ssub.s32 1, %s8
  %s11 = scalar_select 0, %s10, %s8
  $region1: #{mini_spin_net_forward.1} parent=0
    #allocation3 [shape = 'u8[2048]{0}', space=smem, size = 0x800, scoped, tag = 'input window, operand 1, single buffered']
    #allocation4 [shape = 's32[1]{0}', space=sflag, size = 0x4, scoped, tag = 'scoped memory for mini_spin_net_forward.1']
    %12 = vsyncpa [#allocation4], 0
    // Predicated region
    $region2: #{mini_spin_net_forward.1} parent=1 // pred_check
      _
    $region3: #{mini_spin_net_forward.1} parent=1 // pred_check_branch
      %14 = sbr.rel (0) target = $region5
    $region4: #{mini_spin_net_forward.1} parent=1 // pred_region
      _
    $region5: #{mini_spin_net_forward.1} parent=1 // pred_fallthru
      _
    // Predicated region
    $region6: #{mini_spin_net_forward.1} parent=1 // pred_check
      _
    $region7: #{mini_spin_net_forward.1} parent=1 // pred_check_branch
      %16 = sbr.rel (0) target = $region9
    $region8: #{mini_spin_net_forward.1} parent=1 // pred_region
      %s18 = ssub.s32 64, 64
      %19 = vsyncadd [#allocation4], %s18
      %s21 = sshll.u32 %s1, 4
      %s22 = int_to_ptr.vmem [resolvable:$true] %s21
      %24 = dma.vmem_to_smem %s22, 64, [#allocation3], [#allocation4]
    $region9: #{mini_spin_net_forward.1} parent=1 // pred_fallthru
      _
    // Predicated region
    $region10: #{mini_spin_net_forward.1} parent=1 // pred_check
      _
    $region11: #{mini_spin_net_forward.1} parent=1 // pred_check_branch
      %26 = sbr.rel (0) target = $region13
    $region12: #{mini_spin_net_forward.1} parent=1 // pred_region
      _
    $region13: #{mini_spin_net_forward.1} parent=1 // pred_fallthru
      _
    // Predicated region
    $region14: #{mini_spin_net_forward.1} parent=1 // pred_check
      _
    $region15: #{mini_spin_net_forward.1} parent=1 // pred_check_branch
      %28 = sbr.rel (0) target = $region17
    $region16: #{mini_spin_net_forward.1} parent=1 // pred_region
      _
    $region17: #{mini_spin_net_forward.1} parent=1 // pred_fallthru
      _
    // Predicated region
    $region18: #{mini_spin_net_forward.1} parent=1 // pred_check
      _
    $region19: #{mini_spin_net_forward.1} parent=1 // pred_check_branch
      %30 = sbr.rel (0) target = $region21
    $region20: #{mini_spin_net_forward.1} parent=1 // pred_region
      _
    $region21: #{mini_spin_net_forward.1} parent=1 // pred_fallthru
      _
    // Predicated region
    $region22: #{mini_spin_net_forward.1} parent=1 // pred_check
      _
    $region23: #{mini_spin_net_forward.1} parent=1 // pred_check_branch
      %32 = sbr.rel (0) target = $region25
    $region24: #{mini_spin_net_forward.1} parent=1 // pred_region
      %33 = dma.done [#allocation4], 64
    $region25: #{mini_spin_net_forward.1} parent=1 // pred_fallthru
      _
    %34 = sfence
    %v35 = vld [vmem:[%s0] sm:$0xff]
    %v36 = vld [vmem:[%s0 + $0x8] sm:$0xff]
    %v37 = vld [vmem:[%s0 + $0x10] sm:$0xff]
    %v38 = vld [vmem:[%s0 + $0x18] sm:$0xff]
    %s39 = scalar_lea.vmem %s0, 64
    %v40 = vld [vmem:[%s39] sm:$0xff]
    %v41 = vld [vmem:[%s39 + $0x8] sm:$0xff]
    %v42 = vld [vmem:[%s39 + $0x10] sm:$0xff]
    %v43 = vld [vmem:[%s39 + $0x18] sm:$0xff]
    %s44 = scalar_lea.vmem %s0, 128
    %v45 = vld [vmem:[%s44] sm:$0xff]
    %v46 = vld [vmem:[%s44 + $0x8] sm:$0xff]
    %v47 = vld [vmem:[%s44 + $0x10] sm:$0xff]
    %v48 = vld [vmem:[%s44 + $0x18] sm:$0xff]
    %s49 = sld [smem:[#allocation3]]
    %v50 = vstv %s49
    %v51 = vmul.f32 %v50, %v35
    %v52 = vmul.f32 %v50, %v36
    %v53 = vmul.f32 %v50, %v37
    %v54 = vmul.f32 %v50, %v38
    %s55 = sld [smem:[#allocation3 + $0x80]]
    %v56 = vstv %s55
    %v57 = vmul.f32 %v56, %v40
    %v58 = vmul.f32 %v56, %v41
    %v59 = vmul.f32 %v56, %v42
    %v60 = vmul.f32 %v56, %v43
    %v61 = vadd.f32 %v51, %v57
    %v62 = vadd.f32 %v52, %v58
    %v63 = vadd.f32 %v53, %v59
    %v64 = vadd.f32 %v54, %v60
    %s65 = sld [smem:[#allocation3 + $0x100]]
    %v66 = vstv %s65
    %v67 = vmul.f32 %v66, %v45
    %v68 = vmul.f32 %v66, %v46
    %v69 = vmul.f32 %v66, %v47
    %v70 = vmul.f32 %v66, %v48
    %v71 = vadd.f32 %v61, %v67
    %v72 = vadd.f32 %v62, %v68
    %v73 = vadd.f32 %v63, %v69
    %v74 = vadd.f32 %v64, %v70
    %s75 = sld [smem:[#allocation3 + $0x180]]
    %v76 = vstv %s75
    %v77 = vadd.f32 %v71, %v76
    %v78 = vadd.f32 %v72, %v76
    %v79 = vadd.f32 %v73, %v76
    %v80 = vadd.f32 %v74, %v76
    %v81 = vmax.f32 %v77, 0.0
    %v82 = vmax.f32 %v78, 0.0
    %v83 = vmax.f32 %v79, 0.0
    %v84 = vmax.f32 %v80, 0.0
    %v85 = vmax.f32 %v81, %v83
    %v86 = vrot.slane %v85, 4
    %v87 = vmax.f32 %v85, %v86
    %v88 = vrot.slane %v87, 2
    %v89 = vmax.f32 %v87, %v88
    %v90 = vrot.slane %v89, 1
    %v91 = vmax.f32 %v89, %v90
    %v92 = vmax.f32 %v82, %v84
    %v93 = vrot.slane %v92, 4
    %v94 = vmax.f32 %v92, %v93
    %v95 = vrot.slane %v94, 2
    %v96 = vmax.f32 %v94, %v95
    %v97 = vrot.slane %v96, 1
    %v98 = vmax.f32 %v96, %v97
    %v101 = vcombine.low %v91, %v98
    %v103 = vunpack.c.l.s4 1966171168
    %v104 = vunpack.c.0.s8 %v103
    %v105 = vlaneseq
    %v106 = vshrl.u32 %v105, 7
    %v107 = vsub.s32 %v104, %v106
    %v108 = vrot.slane %v101, %v107
    %v110 = vunpack.c.l.s4 1966171168
    %v111 = vunpack.c.0.s8 %v110
    %v112 = vlaneseq
    %v113 = vshrl.u32 %v112, 7
    %v114 = vsub.s32 %v111, %v113
    %v115 = vrot.slane %v108, %v114
    %v117 = vlaneseq
    %vm118 = vcmp.ge.s32.totalorder %v117, 0
    %vm119 = vcmp.lt.s32.totalorder %v117, 256
    %vm120 = vmand %vm118, %vm119
    %121 = vst.msk [vmem:[#allocation2] ss:$8 sm:$0x3] %vm120, %v115
    %122 = vst.msk [vmem:[#allocation2] ss:$8 sm:$0x0] %vm120, %v115
    %s123 = sld [smem:[#allocation3 + $0x1]]
    %v124 = vstv %s123
    %v125 = vmul.f32 %v124, %v35
    %v126 = vmul.f32 %v124, %v36
    %v127 = vmul.f32 %v124, %v37
    %v128 = vmul.f32 %v124, %v38
    %s129 = sld [smem:[#allocation3 + $0x81]]
    %v130 = vstv %s129
    %v131 = vmul.f32 %v130, %v40
    %v132 = vmul.f32 %v130, %v41
    %v133 = vmul.f32 %v130, %v42
    %v134 = vmul.f32 %v130, %v43
    %v135 = vadd.f32 %v125, %v131
    %v136 = vadd.f32 %v126, %v132
    %v137 = vadd.f32 %v127, %v133
    %v138 = vadd.f32 %v128, %v134
    %s139 = sld [smem:[#allocation3 + $0x101]]
    %v140 = vstv %s139
    %v141 = vmul.f32 %v140, %v45
    %v142 = vmul.f32 %v140, %v46
    %v143 = vmul.f32 %v140, %v47
    %v144 = vmul.f32 %v140, %v48
    %v145 = vadd.f32 %v135, %v141
    %v146 = vadd.f32 %v136, %v142
    %v147 = vadd.f32 %v137, %v143
    %v148 = vadd.f32 %v138, %v144
    %s149 = sld [smem:[#allocation3 + $0x181]]
    %v150 = vstv %s149
    %v151 = vadd.f32 %v145, %v150
    %v152 = vadd.f32 %v146, %v150
    %v153 = vadd.f32 %v147, %v150
    %v154 = vadd.f32 %v148, %v150
    %v155 = vmax.f32 %v151, 0.0
    %v156 = vmax.f32 %v152, 0.0
    %v157 = vmax.f32 %v153, 0.0
    %v158 = vmax.f32 %v154, 0.0
    %v159 = vmax.f32 %v155, %v157
    %v160 = vrot.slane %v159, 4
    %v161 = vmax.f32 %v159, %v160
    %v162 = vrot.slane %v161, 2
    %v163 = vmax.f32 %v161, %v162
    %v164 = vrot.slane %v163, 1
    %v165 = vmax.f32 %v163, %v164
    %v166 = vmax.f32 %v156, %v158
    %v167 = vrot.slane %v166, 4
    %v168 = vmax.f32 %v166, %v167
    %v169 = vrot.slane %v168, 2
    %v170 = vmax.f32 %v168, %v169
    %v171 = vrot.slane %v170, 1
    %v172 = vmax.f32 %v170, %v171
    %v175 = vcombine.low %v165, %v172
    %v177 = vunpack.c.l.s4 1966171168
    %v178 = vunpack.c.0.s8 %v177
    %v179 = vlaneseq
    %v180 = vshrl.u32 %v179, 7
    %v181 = vsub.s32 %v178, %v180
    %v182 = vrot.slane %v175, %v181
    %v184 = vunpack.c.l.s4 1966171168
    %v185 = vunpack.c.0.s8 %v184
    %v186 = vlaneseq
    %v187 = vshrl.u32 %v186, 7
    %v188 = vsub.s32 %v185, %v187
    %v189 = vrot.slane %v182, %v188
    %s191 = scalar_lea.vmem [#allocation2], 1
    %192 = vst.msk [vmem:[%s191] ss:$8 sm:$0x3] %vm120, %v189
    %193 = vst.msk [vmem:[%s191] ss:$8 sm:$0x0] %vm120, %v189
    %s194 = sld [smem:[#allocation3 + $0x2]]
    %v195 = vstv %s194
    %v196 = vmul.f32 %v195, %v35
    %v197 = vmul.f32 %v195, %v36
    %v198 = vmul.f32 %v195, %v37
    %v199 = vmul.f32 %v195, %v38
    %s200 = sld [smem:[#allocation3 + $0x82]]
    %v201 = vstv %s200
    %v202 = vmul.f32 %v201, %v40
    %v203 = vmul.f32 %v201, %v41
    %v204 = vmul.f32 %v201, %v42
    %v205 = vmul.f32 %v201, %v43
    %v206 = vadd.f32 %v196, %v202
    %v207 = vadd.f32 %v197, %v203
    %v208 = vadd.f32 %v198, %v204
    %v209 = vadd.f32 %v199, %v205
    %s210 = sld [smem:[#allocation3 + $0x102]]
    %v211 = vstv %s210
    %v212 = vmul.f32 %v211, %v45
    %v213 = vmul.f32 %v211, %v46
    %v214 = vmul.f32 %v211, %v47
    %v215 = vmul.f32 %v211, %v48
    %v216 = vadd.f32 %v206, %v212
    %v217 = vadd.f32 %v207, %v213
    %v218 = vadd.f32 %v208, %v214
    %v219 = vadd.f32 %v209, %v215
    %s220 = sld [smem:[#allocation3 + $0x182]]
    %v221 = vstv %s220
    %v222 = vadd.f32 %v216, %v221
    %v223 = vadd.f32 %v217, %v221
    %v224 = vadd.f32 %v218, %v221
    %v225 = vadd.f32 %v219, %v221
    %v226 = vmax.f32 %v222, 0.0
    %v227 = vmax.f32 %v223, 0.0
    %v228 = vmax.f32 %v224, 0.0
    %v229 = vmax.f32 %v225, 0.0
    %v230 = vmax.f32 %v226, %v228
    %v231 = vrot.slane %v230, 4
    %v232 = vmax.f32 %v230, %v231
    %v233 = vrot.slane %v232, 2
    %v234 = vmax.f32 %v232, %v233
    %v235 = vrot.slane %v234, 1
    %v236 = vmax.f32 %v234, %v235
    %v237 = vmax.f32 %v227, %v229
    %v238 = vrot.slane %v237, 4
    %v239 = vmax.f32 %v237, %v238
    %v240 = vrot.slane %v239, 2
    %v241 = vmax.f32 %v239, %v240
    %v242 = vrot.slane %v241, 1
    %v243 = vmax.f32 %v241, %v242
    %v246 = vcombine.low %v236, %v243
    %v248 = vunpack.c.l.s4 1966171168
    %v249 = vunpack.c.0.s8 %v248
    %v250 = vlaneseq
    %v251 = vshrl.u32 %v250, 7
    %v252 = vsub.s32 %v249, %v251
    %v253 = vrot.slane %v246, %v252
    %v255 = vunpack.c.l.s4 1966171168
    %v256 = vunpack.c.0.s8 %v255
    %v257 = vlaneseq
    %v258 = vshrl.u32 %v257, 7
    %v259 = vsub.s32 %v256, %v258
    %v260 = vrot.slane %v253, %v259
    %s262 = scalar_lea.vmem [#allocation2], 2
    %263 = vst.msk [vmem:[%s262] ss:$8 sm:$0x3] %vm120, %v260
    %264 = vst.msk [vmem:[%s262] ss:$8 sm:$0x0] %vm120, %v260
    %s265 = sld [smem:[#allocation3 + $0x3]]
    %v266 = vstv %s265
    %v267 = vmul.f32 %v266, %v35
    %v268 = vmul.f32 %v266, %v36
    %v269 = vmul.f32 %v266, %v37
    %v270 = vmul.f32 %v266, %v38
    %s271 = sld [smem:[#allocation3 + $0x83]]
    %v272 = vstv %s271
    %v273 = vmul.f32 %v272, %v40
    %v274 = vmul.f32 %v272, %v41
    %v275 = vmul.f32 %v272, %v42
    %v276 = vmul.f32 %v272, %v43
    %v277 = vadd.f32 %v267, %v273
    %v278 = vadd.f32 %v268, %v274
    %v279 = vadd.f32 %v269, %v275
    %v280 = vadd.f32 %v270, %v276
    %s281 = sld [smem:[#allocation3 + $0x103]]
    %v282 = vstv %s281
    %v283 = vmul.f32 %v282, %v45
    %v284 = vmul.f32 %v282, %v46
    %v285 = vmul.f32 %v282, %v47
    %v286 = vmul.f32 %v282, %v48
    %v287 = vadd.f32 %v277, %v283
    %v288 = vadd.f32 %v278, %v284
    %v289 = vadd.f32 %v279, %v285
    %v290 = vadd.f32 %v280, %v286
    %s291 = sld [smem:[#allocation3 + $0x183]]
    %v292 = vstv %s291
    %v293 = vadd.f32 %v287, %v292
    %v294 = vadd.f32 %v288, %v292
    %v295 = vadd.f32 %v289, %v292
    %v296 = vadd.f32 %v290, %v292
    %v297 = vmax.f32 %v293, 0.0
    %v298 = vmax.f32 %v294, 0.0
    %v299 = vmax.f32 %v295, 0.0
    %v300 = vmax.f32 %v296, 0.0
    %v301 = vmax.f32 %v297, %v299
    %v302 = vrot.slane %v301, 4
    %v303 = vmax.f32 %v301, %v302
    %v304 = vrot.slane %v303, 2
    %v305 = vmax.f32 %v303, %v304
    %v306 = vrot.slane %v305, 1
    %v307 = vmax.f32 %v305, %v306
    %v308 = vmax.f32 %v298, %v300
    %v309 = vrot.slane %v308, 4
    %v310 = vmax.f32 %v308, %v309
    %v311 = vrot.slane %v310, 2
    %v312 = vmax.f32 %v310, %v311
    %v313 = vrot.slane %v312, 1
    %v314 = vmax.f32 %v312, %v313
    %v317 = vcombine.low %v307, %v314
    %v319 = vunpack.c.l.s4 1966171168
    %v320 = vunpack.c.0.s8 %v319
    %v321 = vlaneseq
    %v322 = vshrl.u32 %v321, 7
    %v323 = vsub.s32 %v320, %v322
    %v324 = vrot.slane %v317, %v323
    %v326 = vunpack.c.l.s4 1966171168
    %v327 = vunpack.c.0.s8 %v326
    %v328 = vlaneseq
    %v329 = vshrl.u32 %v328, 7
    %v330 = vsub.s32 %v327, %v329
    %v331 = vrot.slane %v324, %v330
    %s333 = scalar_lea.vmem [#allocation2], 3
    %334 = vst.msk [vmem:[%s333] ss:$8 sm:$0x3] %vm120, %v331
    %335 = vst.msk [vmem:[%s333] ss:$8 sm:$0x0] %vm120, %v331
    %s336 = sld [smem:[#allocation3 + $0x4]]
    %v337 = vstv %s336
    %v338 = vmul.f32 %v337, %v35
    %v339 = vmul.f32 %v337, %v36
    %v340 = vmul.f32 %v337, %v37
    %v341 = vmul.f32 %v337, %v38
    %s342 = sld [smem:[#allocation3 + $0x84]]
    %v343 = vstv %s342
    %v344 = vmul.f32 %v343, %v40
    %v345 = vmul.f32 %v343, %v41
    %v346 = vmul.f32 %v343, %v42
    %v347 = vmul.f32 %v343, %v43
    %v348 = vadd.f32 %v338, %v344
    %v349 = vadd.f32 %v339, %v345
    %v350 = vadd.f32 %v340, %v346
    %v351 = vadd.f32 %v341, %v347
    %s352 = sld [smem:[#allocation3 + $0x104]]
    %v353 = vstv %s352
    %v354 = vmul.f32 %v353, %v45
    %v355 = vmul.f32 %v353, %v46
    %v356 = vmul.f32 %v353, %v47
    %v357 = vmul.f32 %v353, %v48
    %v358 = vadd.f32 %v348, %v354
    %v359 = vadd.f32 %v349, %v355
    %v360 = vadd.f32 %v350, %v356
    %v361 = vadd.f32 %v351, %v357
    %s362 = sld [smem:[#allocation3 + $0x184]]
    %v363 = vstv %s362
    %v364 = vadd.f32 %v358, %v363
    %v365 = vadd.f32 %v359, %v363
    %v366 = vadd.f32 %v360, %v363
    %v367 = vadd.f32 %v361, %v363
    %v368 = vmax.f32 %v364, 0.0
    %v369 = vmax.f32 %v365, 0.0
    %v370 = vmax.f32 %v366, 0.0
    %v371 = vmax.f32 %v367, 0.0
    %v372 = vmax.f32 %v368, %v370
    %v373 = vrot.slane %v372, 4
    %v374 = vmax.f32 %v372, %v373
    %v375 = vrot.slane %v374, 2
    %v376 = vmax.f32 %v374, %v375
    %v377 = vrot.slane %v376, 1
    %v378 = vmax.f32 %v376, %v377
    %v379 = vmax.f32 %v369, %v371
    %v380 = vrot.slane %v379, 4
    %v381 = vmax.f32 %v379, %v380
    %v382 = vrot.slane %v381, 2
    %v383 = vmax.f32 %v381, %v382
    %v384 = vrot.slane %v383, 1
    %v385 = vmax.f32 %v383, %v384
    %v388 = vcombine.low %v378, %v385
    %v390 = vunpack.c.l.s4 1966171168
    %v391 = vunpack.c.0.s8 %v390
    %v392 = vlaneseq
    %v393 = vshrl.u32 %v392, 7
    %v394 = vsub.s32 %v391, %v393
    %v395 = vrot.slane %v388, %v394
    %v397 = vunpack.c.l.s4 1966171168
    %v398 = vunpack.c.0.s8 %v397
    %v399 = vlaneseq
    %v400 = vshrl.u32 %v399, 7
    %v401 = vsub.s32 %v398, %v400
    %v402 = vrot.slane %v395, %v401
    %s404 = scalar_lea.vmem [#allocation2], 4
    %405 = vst.msk [vmem:[%s404] ss:$8 sm:$0x3] %vm120, %v402
    %406 = vst.msk [vmem:[%s404] ss:$8 sm:$0x0] %vm120, %v402
    %s407 = sld [smem:[#allocation3 + $0x5]]
    %v408 = vstv %s407
    %v409 = vmul.f32 %v408, %v35
    %v410 = vmul.f32 %v408, %v36
    %v411 = vmul.f32 %v408, %v37
    %v412 = vmul.f32 %v408, %v38
    %s413 = sld [smem:[#allocation3 + $0x85]]
    %v414 = vstv %s413
    %v415 = vmul.f32 %v414, %v40
    %v416 = vmul.f32 %v414, %v41
    %v417 = vmul.f32 %v414, %v42
    %v418 = vmul.f32 %v414, %v43
    %v419 = vadd.f32 %v409, %v415
    %v420 = vadd.f32 %v410, %v416
    %v421 = vadd.f32 %v411, %v417
    %v422 = vadd.f32 %v412, %v418
    %s423 = sld [smem:[#allocation3 + $0x105]]
    %v424 = vstv %s423
    %v425 = vmul.f32 %v424, %v45
    %v426 = vmul.f32 %v424, %v46
    %v427 = vmul.f32 %v424, %v47
    %v428 = vmul.f32 %v424, %v48
    %v429 = vadd.f32 %v419, %v425
    %v430 = vadd.f32 %v420, %v426
    %v431 = vadd.f32 %v421, %v427
    %v432 = vadd.f32 %v422, %v428
    %s433 = sld [smem:[#allocation3 + $0x185]]
    %v434 = vstv %s433
    %v435 = vadd.f32 %v429, %v434
    %v436 = vadd.f32 %v430, %v434
    %v437 = vadd.f32 %v431, %v434
    %v438 = vadd.f32 %v432, %v434
    %v439 = vmax.f32 %v435, 0.0
    %v440 = vmax.f32 %v436, 0.0
    %v441 = vmax.f32 %v437, 0.0
    %v442 = vmax.f32 %v438, 0.0
    %v443 = vmax.f32 %v439, %v441
    %v444 = vrot.slane %v443, 4
    %v445 = vmax.f32 %v443, %v444
    %v446 = vrot.slane %v445, 2
    %v447 = vmax.f32 %v445, %v446
    %v448 = vrot.slane %v447, 1
    %v449 = vmax.f32 %v447, %v448
    %v450 = vmax.f32 %v440, %v442
    %v451 = vrot.slane %v450, 4
    %v452 = vmax.f32 %v450, %v451
    %v453 = vrot.slane %v452, 2
    %v454 = vmax.f32 %v452, %v453
    %v455 = vrot.slane %v454, 1
    %v456 = vmax.f32 %v454, %v455
    %v459 = vcombine.low %v449, %v456
    %v461 = vunpack.c.l.s4 1966171168
    %v462 = vunpack.c.0.s8 %v461
    %v463 = vlaneseq
    %v464 = vshrl.u32 %v463, 7
    %v465 = vsub.s32 %v462, %v464
    %v466 = vrot.slane %v459, %v465
    %v468 = vunpack.c.l.s4 1966171168
    %v469 = vunpack.c.0.s8 %v468
    %v470 = vlaneseq
    %v471 = vshrl.u32 %v470, 7
    %v472 = vsub.s32 %v469, %v471
    %v473 = vrot.slane %v466, %v472
    %s475 = scalar_lea.vmem [#allocation2], 5
    %476 = vst.msk [vmem:[%s475] ss:$8 sm:$0x3] %vm120, %v473
    %477 = vst.msk [vmem:[%s475] ss:$8 sm:$0x0] %vm120, %v473
    %s478 = sld [smem:[#allocation3 + $0x6]]
    %v479 = vstv %s478
    %v480 = vmul.f32 %v479, %v35
    %v481 = vmul.f32 %v479, %v36
    %v482 = vmul.f32 %v479, %v37
    %v483 = vmul.f32 %v479, %v38
    %s484 = sld [smem:[#allocation3 + $0x86]]
    %v485 = vstv %s484
    %v486 = vmul.f32 %v485, %v40
    %v487 = vmul.f32 %v485, %v41
    %v488 = vmul.f32 %v485, %v42
    %v489 = vmul.f32 %v485, %v43
    %v490 = vadd.f32 %v480, %v486
    %v491 = vadd.f32 %v481, %v487
    %v492 = vadd.f32 %v482, %v488
    %v493 = vadd.f32 %v483, %v489
    %s494 = sld [smem:[#allocation3 + $0x106]]
    %v495 = vstv %s494
    %v496 = vmul.f32 %v495, %v45
    %v497 = vmul.f32 %v495, %v46
    %v498 = vmul.f32 %v495, %v47
    %v499 = vmul.f32 %v495, %v48
    %v500 = vadd.f32 %v490, %v496
    %v501 = vadd.f32 %v491, %v497
    %v502 = vadd.f32 %v492, %v498
    %v503 = vadd.f32 %v493, %v499
    %s504 = sld [smem:[#allocation3 + $0x186]]
    %v505 = vstv %s504
    %v506 = vadd.f32 %v500, %v505
    %v507 = vadd.f32 %v501, %v505
    %v508 = vadd.f32 %v502, %v505
    %v509 = vadd.f32 %v503, %v505
    %v510 = vmax.f32 %v506, 0.0
    %v511 = vmax.f32 %v507, 0.0
    %v512 = vmax.f32 %v508, 0.0
    %v513 = vmax.f32 %v509, 0.0
    %v514 = vmax.f32 %v510, %v512
    %v515 = vrot.slane %v514, 4
    %v516 = vmax.f32 %v514, %v515
    %v517 = vrot.slane %v516, 2
    %v518 = vmax.f32 %v516, %v517
    %v519 = vrot.slane %v518, 1
    %v520 = vmax.f32 %v518, %v519
    %v521 = vmax.f32 %v511, %v513
    %v522 = vrot.slane %v521, 4
    %v523 = vmax.f32 %v521, %v522
    %v524 = vrot.slane %v523, 2
    %v525 = vmax.f32 %v523, %v524
    %v526 = vrot.slane %v525, 1
    %v527 = vmax.f32 %v525, %v526
    %v530 = vcombine.low %v520, %v527
    %v532 = vunpack.c.l.s4 1966171168
    %v533 = vunpack.c.0.s8 %v532
    %v534 = vlaneseq
    %v535 = vshrl.u32 %v534, 7
    %v536 = vsub.s32 %v533, %v535
    %v537 = vrot.slane %v530, %v536
    %v539 = vunpack.c.l.s4 1966171168
    %v540 = vunpack.c.0.s8 %v539
    %v541 = vlaneseq
    %v542 = vshrl.u32 %v541, 7
    %v543 = vsub.s32 %v540, %v542
    %v544 = vrot.slane %v537, %v543
    %s546 = scalar_lea.vmem [#allocation2], 6
    %547 = vst.msk [vmem:[%s546] ss:$8 sm:$0x3] %vm120, %v544
    %548 = vst.msk [vmem:[%s546] ss:$8 sm:$0x0] %vm120, %v544
    %s549 = sld [smem:[#allocation3 + $0x7]]
    %v550 = vstv %s549
    %v551 = vmul.f32 %v550, %v35
    %v552 = vmul.f32 %v550, %v36
    %v553 = vmul.f32 %v550, %v37
    %v554 = vmul.f32 %v550, %v38
    %s555 = sld [smem:[#allocation3 + $0x87]]
    %v556 = vstv %s555
    %v557 = vmul.f32 %v556, %v40
    %v558 = vmul.f32 %v556, %v41
    %v559 = vmul.f32 %v556, %v42
    %v560 = vmul.f32 %v556, %v43
    %v561 = vadd.f32 %v551, %v557
    %v562 = vadd.f32 %v552, %v558
    %v563 = vadd.f32 %v553, %v559
    %v564 = vadd.f32 %v554, %v560
    %s565 = sld [smem:[#allocation3 + $0x107]]
    %v566 = vstv %s565
    %v567 = vmul.f32 %v566, %v45
    %v568 = vmul.f32 %v566, %v46
    %v569 = vmul.f32 %v566, %v47
    %v570 = vmul.f32 %v566, %v48
    %v571 = vadd.f32 %v561, %v567
    %v572 = vadd.f32 %v562, %v568
    %v573 = vadd.f32 %v563, %v569
    %v574 = vadd.f32 %v564, %v570
    %s575 = sld [smem:[#allocation3 + $0x187]]
    %v576 = vstv %s575
    %v577 = vadd.f32 %v571, %v576
    %v578 = vadd.f32 %v572, %v576
    %v579 = vadd.f32 %v573, %v576
    %v580 = vadd.f32 %v574, %v576
    %v581 = vmax.f32 %v577, 0.0
    %v582 = vmax.f32 %v578, 0.0
    %v583 = vmax.f32 %v579, 0.0
    %v584 = vmax.f32 %v580, 0.0
    %v585 = vmax.f32 %v581, %v583
    %v586 = vrot.slane %v585, 4
    %v587 = vmax.f32 %v585, %v586
    %v588 = vrot.slane %v587, 2
    %v589 = vmax.f32 %v587, %v588
    %v590 = vrot.slane %v589, 1
    %v591 = vmax.f32 %v589, %v590
    %v592 = vmax.f32 %v582, %v584
    %v593 = vrot.slane %v592, 4
    %v594 = vmax.f32 %v592, %v593
    %v595 = vrot.slane %v594, 2
    %v596 = vmax.f32 %v594, %v595
    %v597 = vrot.slane %v596, 1
    %v598 = vmax.f32 %v596, %v597
    %v601 = vcombine.low %v591, %v598
    %v603 = vunpack.c.l.s4 1966171168
    %v604 = vunpack.c.0.s8 %v603
    %v605 = vlaneseq
    %v606 = vshrl.u32 %v605, 7
    %v607 = vsub.s32 %v604, %v606
    %v608 = vrot.slane %v601, %v607
    %v610 = vunpack.c.l.s4 1966171168
    %v611 = vunpack.c.0.s8 %v610
    %v612 = vlaneseq
    %v613 = vshrl.u32 %v612, 7
    %v614 = vsub.s32 %v611, %v613
    %v615 = vrot.slane %v608, %v614
    %s617 = scalar_lea.vmem [#allocation2], 7
    %618 = vst.msk [vmem:[%s617] ss:$8 sm:$0x3] %vm120, %v615
    %619 = vst.msk [vmem:[%s617] ss:$8 sm:$0x0] %vm120, %v615
    %s620 = sld [smem:[#allocation3 + $0x8]]
    %v621 = vstv %s620
    %v622 = vmul.f32 %v621, %v35
    %v623 = vmul.f32 %v621, %v36
    %v624 = vmul.f32 %v621, %v37
    %v625 = vmul.f32 %v621, %v38
    %s626 = sld [smem:[#allocation3 + $0x88]]
    %v627 = vstv %s626
    %v628 = vmul.f32 %v627, %v40
    %v629 = vmul.f32 %v627, %v41
    %v630 = vmul.f32 %v627, %v42
    %v631 = vmul.f32 %v627, %v43
    %v632 = vadd.f32 %v622, %v628
    %v633 = vadd.f32 %v623, %v629
    %v634 = vadd.f32 %v624, %v630
    %v635 = vadd.f32 %v625, %v631
    %s636 = sld [smem:[#allocation3 + $0x108]]
    %v637 = vstv %s636
    %v638 = vmul.f32 %v637, %v45
    %v639 = vmul.f32 %v637, %v46
    %v640 = vmul.f32 %v637, %v47
    %v641 = vmul.f32 %v637, %v48
    %v642 = vadd.f32 %v632, %v638
    %v643 = vadd.f32 %v633, %v639
    %v644 = vadd.f32 %v634, %v640
    %v645 = vadd.f32 %v635, %v641
    %s646 = sld [smem:[#allocation3 + $0x188]]
    %v647 = vstv %s646
    %v648 = vadd.f32 %v642, %v647
    %v649 = vadd.f32 %v643, %v647
    %v650 = vadd.f32 %v644, %v647
    %v651 = vadd.f32 %v645, %v647
    %v652 = vmax.f32 %v648, 0.0
    %v653 = vmax.f32 %v649, 0.0
    %v654 = vmax.f32 %v650, 0.0
    %v655 = vmax.f32 %v651, 0.0
    %v656 = vmax.f32 %v652, %v654
    %v657 = vrot.slane %v656, 4
    %v658 = vmax.f32 %v656, %v657
    %v659 = vrot.slane %v658, 2
    %v660 = vmax.f32 %v658, %v659
    %v661 = vrot.slane %v660, 1
    %v662 = vmax.f32 %v660, %v661
    %v663 = vmax.f32 %v653, %v655
    %v664 = vrot.slane %v663, 4
    %v665 = vmax.f32 %v663, %v664
    %v666 = vrot.slane %v665, 2
    %v667 = vmax.f32 %v665, %v666
    %v668 = vrot.slane %v667, 1
    %v669 = vmax.f32 %v667, %v668
    %v672 = vcombine.low %v662, %v669
    %v674 = vunpack.c.l.s4 1966171168
    %v675 = vunpack.c.0.s8 %v674
    %v676 = vlaneseq
    %v677 = vshrl.u32 %v676, 7
    %v678 = vsub.s32 %v675, %v677
    %v679 = vrot.slane %v672, %v678
    %v681 = vunpack.c.l.s4 1966171168
    %v682 = vunpack.c.0.s8 %v681
    %v683 = vlaneseq
    %v684 = vshrl.u32 %v683, 7
    %v685 = vsub.s32 %v682, %v684
    %v686 = vrot.slane %v679, %v685
    %s688 = scalar_lea.vmem [#allocation2], 16
    %689 = vst.msk [vmem:[%s688] ss:$8 sm:$0x3] %vm120, %v686
    %690 = vst.msk [vmem:[%s688] ss:$8 sm:$0x0] %vm120, %v686
    %s691 = sld [smem:[#allocation3 + $0x9]]
    %v692 = vstv %s691
    %v693 = vmul.f32 %v692, %v35
    %v694 = vmul.f32 %v692, %v36
    %v695 = vmul.f32 %v692, %v37
    %v696 = vmul.f32 %v692, %v38
    %s697 = sld [smem:[#allocation3 + $0x89]]
    %v698 = vstv %s697
    %v699 = vmul.f32 %v698, %v40
    %v700 = vmul.f32 %v698, %v41
    %v701 = vmul.f32 %v698, %v42
    %v702 = vmul.f32 %v698, %v43
    %v703 = vadd.f32 %v693, %v699
    %v704 = vadd.f32 %v694, %v700
    %v705 = vadd.f32 %v695, %v701
    %v706 = vadd.f32 %v696, %v702
    %s707 = sld [smem:[#allocation3 + $0x109]]
    %v708 = vstv %s707
    %v709 = vmul.f32 %v708, %v45
    %v710 = vmul.f32 %v708, %v46
    %v711 = vmul.f32 %v708, %v47
    %v712 = vmul.f32 %v708, %v48
    %v713 = vadd.f32 %v703, %v709
    %v714 = vadd.f32 %v704, %v710
    %v715 = vadd.f32 %v705, %v711
    %v716 = vadd.f32 %v706, %v712
    %s717 = sld [smem:[#allocation3 + $0x189]]
    %v718 = vstv %s717
    %v719 = vadd.f32 %v713, %v718
    %v720 = vadd.f32 %v714, %v718
    %v721 = vadd.f32 %v715, %v718
    %v722 = vadd.f32 %v716, %v718
    %v723 = vmax.f32 %v719, 0.0
    %v724 = vmax.f32 %v720, 0.0
    %v725 = vmax.f32 %v721, 0.0
    %v726 = vmax.f32 %v722, 0.0
    %v727 = vmax.f32 %v723, %v725
    %v728 = vrot.slane %v727, 4
    %v729 = vmax.f32 %v727, %v728
    %v730 = vrot.slane %v729, 2
    %v731 = vmax.f32 %v729, %v730
    %v732 = vrot.slane %v731, 1
    %v733 = vmax.f32 %v731, %v732
    %v734 = vmax.f32 %v724, %v726
    %v735 = vrot.slane %v734, 4
    %v736 = vmax.f32 %v734, %v735
    %v737 = vrot.slane %v736, 2
    %v738 = vmax.f32 %v736, %v737
    %v739 = vrot.slane %v738, 1
    %v740 = vmax.f32 %v738, %v739
    %v743 = vcombine.low %v733, %v740
    %v745 = vunpack.c.l.s4 1966171168
    %v746 = vunpack.c.0.s8 %v745
    %v747 = vlaneseq
    %v748 = vshrl.u32 %v747, 7
    %v749 = vsub.s32 %v746, %v748
    %v750 = vrot.slane %v743, %v749
    %v752 = vunpack.c.l.s4 1966171168
    %v753 = vunpack.c.0.s8 %v752
    %v754 = vlaneseq
    %v755 = vshrl.u32 %v754, 7
    %v756 = vsub.s32 %v753, %v755
    %v757 = vrot.slane %v750, %v756
    %s759 = scalar_lea.vmem [#allocation2], 17
    %760 = vst.msk [vmem:[%s759] ss:$8 sm:$0x3] %vm120, %v757
    %761 = vst.msk [vmem:[%s759] ss:$8 sm:$0x0] %vm120, %v757
    %s762 = sld [smem:[#allocation3 + $0xa]]
    %v763 = vstv %s762
    %v764 = vmul.f32 %v763, %v35
    %v765 = vmul.f32 %v763, %v36
    %v766 = vmul.f32 %v763, %v37
    %v767 = vmul.f32 %v763, %v38
    %s768 = sld [smem:[#allocation3 + $0x8a]]
    %v769 = vstv %s768
    %v770 = vmul.f32 %v769, %v40
    %v771 = vmul.f32 %v769, %v41
    %v772 = vmul.f32 %v769, %v42
    %v773 = vmul.f32 %v769, %v43
    %v774 = vadd.f32 %v764, %v770
    %v775 = vadd.f32 %v765, %v771
    %v776 = vadd.f32 %v766, %v772
    %v777 = vadd.f32 %v767, %v773
    %s778 = sld [smem:[#allocation3 + $0x10a]]
    %v779 = vstv %s778
    %v780 = vmul.f32 %v779, %v45
    %v781 = vmul.f32 %v779, %v46
    %v782 = vmul.f32 %v779, %v47
    %v783 = vmul.f32 %v779, %v48
    %v784 = vadd.f32 %v774, %v780
    %v785 = vadd.f32 %v775, %v781
    %v786 = vadd.f32 %v776, %v782
    %v787 = vadd.f32 %v777, %v783
    %s788 = sld [smem:[#allocation3 + $0x18a]]
    %v789 = vstv %s788
    %v790 = vadd.f32 %v784, %v789
    %v791 = vadd.f32 %v785, %v789
    %v792 = vadd.f32 %v786, %v789
    %v793 = vadd.f32 %v787, %v789
    %v794 = vmax.f32 %v790, 0.0
    %v795 = vmax.f32 %v791, 0.0
    %v796 = vmax.f32 %v792, 0.0
    %v797 = vmax.f32 %v793, 0.0
    %v798 = vmax.f32 %v794, %v796
    %v799 = vrot.slane %v798, 4
    %v800 = vmax.f32 %v798, %v799
    %v801 = vrot.slane %v800, 2
    %v802 = vmax.f32 %v800, %v801
    %v803 = vrot.slane %v802, 1
    %v804 = vmax.f32 %v802, %v803
    %v805 = vmax.f32 %v795, %v797
    %v806 = vrot.slane %v805, 4
    %v807 = vmax.f32 %v805, %v806
    %v808 = vrot.slane %v807, 2
    %v809 = vmax.f32 %v807, %v808
    %v810 = vrot.slane %v809, 1
    %v811 = vmax.f32 %v809, %v810
    %v814 = vcombine.low %v804, %v811
    %v816 = vunpack.c.l.s4 1966171168
    %v817 = vunpack.c.0.s8 %v816
    %v818 = vlaneseq
    %v819 = vshrl.u32 %v818, 7
    %v820 = vsub.s32 %v817, %v819
    %v821 = vrot.slane %v814, %v820
    %v823 = vunpack.c.l.s4 1966171168
    %v824 = vunpack.c.0.s8 %v823
    %v825 = vlaneseq
    %v826 = vshrl.u32 %v825, 7
    %v827 = vsub.s32 %v824, %v826
    %v828 = vrot.slane %v821, %v827
    %s830 = scalar_lea.vmem [#allocation2], 18
    %831 = vst.msk [vmem:[%s830] ss:$8 sm:$0x3] %vm120, %v828
    %832 = vst.msk [vmem:[%s830] ss:$8 sm:$0x0] %vm120, %v828
    %s833 = sld [smem:[#allocation3 + $0xb]]
    %v834 = vstv %s833
    %v835 = vmul.f32 %v834, %v35
    %v836 = vmul.f32 %v834, %v36
    %v837 = vmul.f32 %v834, %v37
    %v838 = vmul.f32 %v834, %v38
    %s839 = sld [smem:[#allocation3 + $0x8b]]
    %v840 = vstv %s839
    %v841 = vmul.f32 %v840, %v40
    %v842 = vmul.f32 %v840, %v41
    %v843 = vmul.f32 %v840, %v42
    %v844 = vmul.f32 %v840, %v43
    %v845 = vadd.f32 %v835, %v841
    %v846 = vadd.f32 %v836, %v842
    %v847 = vadd.f32 %v837, %v843
    %v848 = vadd.f32 %v838, %v844
    %s849 = sld [smem:[#allocation3 + $0x10b]]
    %v850 = vstv %s849
    %v851 = vmul.f32 %v850, %v45
    %v852 = vmul.f32 %v850, %v46
    %v853 = vmul.f32 %v850, %v47
    %v854 = vmul.f32 %v850, %v48
    %v855 = vadd.f32 %v845, %v851
    %v856 = vadd.f32 %v846, %v852
    %v857 = vadd.f32 %v847, %v853
    %v858 = vadd.f32 %v848, %v854
    %s859 = sld [smem:[#allocation3 + $0x18b]]
    %v860 = vstv %s859
    %v861 = vadd.f32 %v855, %v860
    %v862 = vadd.f32 %v856, %v860
    %v863 = vadd.f32 %v857, %v860
    %v864 = vadd.f32 %v858, %v860
    %v865 = vmax.f32 %v861, 0.0
    %v866 = vmax.f32 %v862, 0.0
    %v867 = vmax.f32 %v863, 0.0
    %v868 = vmax.f32 %v864, 0.0
    %v869 = vmax.f32 %v865, %v867
    %v870 = vrot.slane %v869, 4
    %v871 = vmax.f32 %v869, %v870
    %v872 = vrot.slane %v871, 2
    %v873 = vmax.f32 %v871, %v872
    %v874 = vrot.slane %v873, 1
    %v875 = vmax.f32 %v873, %v874
    %v876 = vmax.f32 %v866, %v868
    %v877 = vrot.slane %v876, 4
    %v878 = vmax.f32 %v876, %v877
    %v879 = vrot.slane %v878, 2
    %v880 = vmax.f32 %v878, %v879
    %v881 = vrot.slane %v880, 1
    %v882 = vmax.f32 %v880, %v881
    %v885 = vcombine.low %v875, %v882
    %v887 = vunpack.c.l.s4 1966171168
    %v888 = vunpack.c.0.s8 %v887
    %v889 = vlaneseq
    %v890 = vshrl.u32 %v889, 7
    %v891 = vsub.s32 %v888, %v890
    %v892 = vrot.slane %v885, %v891
    %v894 = vunpack.c.l.s4 1966171168
    %v895 = vunpack.c.0.s8 %v894
    %v896 = vlaneseq
    %v897 = vshrl.u32 %v896, 7
    %v898 = vsub.s32 %v895, %v897
    %v899 = vrot.slane %v892, %v898
    %s901 = scalar_lea.vmem [#allocation2], 19
    %902 = vst.msk [vmem:[%s901] ss:$8 sm:$0x3] %vm120, %v899
    %903 = vst.msk [vmem:[%s901] ss:$8 sm:$0x0] %vm120, %v899
    %s904 = sld [smem:[#allocation3 + $0xc]]
    %v905 = vstv %s904
    %v906 = vmul.f32 %v905, %v35
    %v907 = vmul.f32 %v905, %v36
    %v908 = vmul.f32 %v905, %v37
    %v909 = vmul.f32 %v905, %v38
    %s910 = sld [smem:[#allocation3 + $0x8c]]
    %v911 = vstv %s910
    %v912 = vmul.f32 %v911, %v40
    %v913 = vmul.f32 %v911, %v41
    %v914 = vmul.f32 %v911, %v42
    %v915 = vmul.f32 %v911, %v43
    %v916 = vadd.f32 %v906, %v912
    %v917 = vadd.f32 %v907, %v913
    %v918 = vadd.f32 %v908, %v914
    %v919 = vadd.f32 %v909, %v915
    %s920 = sld [smem:[#allocation3 + $0x10c]]
    %v921 = vstv %s920
    %v922 = vmul.f32 %v921, %v45
    %v923 = vmul.f32 %v921, %v46
    %v924 = vmul.f32 %v921, %v47
    %v925 = vmul.f32 %v921, %v48
    %v926 = vadd.f32 %v916, %v922
    %v927 = vadd.f32 %v917, %v923
    %v928 = vadd.f32 %v918, %v924
    %v929 = vadd.f32 %v919, %v925
    %s930 = sld [smem:[#allocation3 + $0x18c]]
    %v931 = vstv %s930
    %v932 = vadd.f32 %v926, %v931
    %v933 = vadd.f32 %v927, %v931
    %v934 = vadd.f32 %v928, %v931
    %v935 = vadd.f32 %v929, %v931
    %v936 = vmax.f32 %v932, 0.0
    %v937 = vmax.f32 %v933, 0.0
    %v938 = vmax.f32 %v934, 0.0
    %v939 = vmax.f32 %v935, 0.0
    %v940 = vmax.f32 %v936, %v938
    %v941 = vrot.slane %v940, 4
    %v942 = vmax.f32 %v940, %v941
    %v943 = vrot.slane %v942, 2
    %v944 = vmax.f32 %v942, %v943
    %v945 = vrot.slane %v944, 1
    %v946 = vmax.f32 %v944, %v945
    %v947 = vmax.f32 %v937, %v939
    %v948 = vrot.slane %v947, 4
    %v949 = vmax.f32 %v947, %v948
    %v950 = vrot.slane %v949, 2
    %v951 = vmax.f32 %v949, %v950
    %v952 = vrot.slane %v951, 1
    %v953 = vmax.f32 %v951, %v952
    %v956 = vcombine.low %v946, %v953
    %v958 = vunpack.c.l.s4 1966171168
    %v959 = vunpack.c.0.s8 %v958
    %v960 = vlaneseq
    %v961 = vshrl.u32 %v960, 7
    %v962 = vsub.s32 %v959, %v961
    %v963 = vrot.slane %v956, %v962
    %v965 = vunpack.c.l.s4 1966171168
    %v966 = vunpack.c.0.s8 %v965
    %v967 = vlaneseq
    %v968 = vshrl.u32 %v967, 7
    %v969 = vsub.s32 %v966, %v968
    %v970 = vrot.slane %v963, %v969
    %s972 = scalar_lea.vmem [#allocation2], 20
    %973 = vst.msk [vmem:[%s972] ss:$8 sm:$0x3] %vm120, %v970
    %974 = vst.msk [vmem:[%s972] ss:$8 sm:$0x0] %vm120, %v970
    %s975 = sld [smem:[#allocation3 + $0xd]]
    %v976 = vstv %s975
    %v977 = vmul.f32 %v976, %v35
    %v978 = vmul.f32 %v976, %v36
    %v979 = vmul.f32 %v976, %v37
    %v980 = vmul.f32 %v976, %v38
    %s981 = sld [smem:[#allocation3 + $0x8d]]
    %v982 = vstv %s981
    %v983 = vmul.f32 %v982, %v40
    %v984 = vmul.f32 %v982, %v41
    %v985 = vmul.f32 %v982, %v42
    %v986 = vmul.f32 %v982, %v43
    %v987 = vadd.f32 %v977, %v983
    %v988 = vadd.f32 %v978, %v984
    %v989 = vadd.f32 %v979, %v985
    %v990 = vadd.f32 %v980, %v986
    %s991 = sld [smem:[#allocation3 + $0x10d]]
    %v992 = vstv %s991
    %v993 = vmul.f32 %v992, %v45
    %v994 = vmul.f32 %v992, %v46
    %v995 = vmul.f32 %v992, %v47
    %v996 = vmul.f32 %v992, %v48
    %v997 = vadd.f32 %v987, %v993
    %v998 = vadd.f32 %v988, %v994
    %v999 = vadd.f32 %v989, %v995
    %v1000 = vadd.f32 %v990, %v996
    %s1001 = sld [smem:[#allocation3 + $0x18d]]
    %v1002 = vstv %s1001
    %v1003 = vadd.f32 %v997, %v1002
    %v1004 = vadd.f32 %v998, %v1002
    %v1005 = vadd.f32 %v999, %v1002
    %v1006 = vadd.f32 %v1000, %v1002
    %v1007 = vmax.f32 %v1003, 0.0
    %v1008 = vmax.f32 %v1004, 0.0
    %v1009 = vmax.f32 %v1005, 0.0
    %v1010 = vmax.f32 %v1006, 0.0
    %v1011 = vmax.f32 %v1007, %v1009
    %v1012 = vrot.slane %v1011, 4
    %v1013 = vmax.f32 %v1011, %v1012
    %v1014 = vrot.slane %v1013, 2
    %v1015 = vmax.f32 %v1013, %v1014
    %v1016 = vrot.slane %v1015, 1
    %v1017 = vmax.f32 %v1015, %v1016
    %v1018 = vmax.f32 %v1008, %v1010
    %v1019 = vrot.slane %v1018, 4
    %v1020 = vmax.f32 %v1018, %v1019
    %v1021 = vrot.slane %v1020, 2
    %v1022 = vmax.f32 %v1020, %v1021
    %v1023 = vrot.slane %v1022, 1
    %v1024 = vmax.f32 %v1022, %v1023
    %v1027 = vcombine.low %v1017, %v1024
    %v1029 = vunpack.c.l.s4 1966171168
    %v1030 = vunpack.c.0.s8 %v1029
    %v1031 = vlaneseq
    %v1032 = vshrl.u32 %v1031, 7
    %v1033 = vsub.s32 %v1030, %v1032
    %v1034 = vrot.slane %v1027, %v1033
    %v1036 = vunpack.c.l.s4 1966171168
    %v1037 = vunpack.c.0.s8 %v1036
    %v1038 = vlaneseq
    %v1039 = vshrl.u32 %v1038, 7
    %v1040 = vsub.s32 %v1037, %v1039
    %v1041 = vrot.slane %v1034, %v1040
    %s1043 = scalar_lea.vmem [#allocation2], 21
    %1044 = vst.msk [vmem:[%s1043] ss:$8 sm:$0x3] %vm120, %v1041
    %1045 = vst.msk [vmem:[%s1043] ss:$8 sm:$0x0] %vm120, %v1041
    %s1046 = sld [smem:[#allocation3 + $0xe]]
    %v1047 = vstv %s1046
    %v1048 = vmul.f32 %v1047, %v35
    %v1049 = vmul.f32 %v1047, %v36
    %v1050 = vmul.f32 %v1047, %v37
    %v1051 = vmul.f32 %v1047, %v38
    %s1052 = sld [smem:[#allocation3 + $0x8e]]
    %v1053 = vstv %s1052
    %v1054 = vmul.f32 %v1053, %v40
    %v1055 = vmul.f32 %v1053, %v41
    %v1056 = vmul.f32 %v1053, %v42
    %v1057 = vmul.f32 %v1053, %v43
    %v1058 = vadd.f32 %v1048, %v1054
    %v1059 = vadd.f32 %v1049, %v1055
    %v1060 = vadd.f32 %v1050, %v1056
    %v1061 = vadd.f32 %v1051, %v1057
    %s1062 = sld [smem:[#allocation3 + $0x10e]]
    %v1063 = vstv %s1062
    %v1064 = vmul.f32 %v1063, %v45
    %v1065 = vmul.f32 %v1063, %v46
    %v1066 = vmul.f32 %v1063, %v47
    %v1067 = vmul.f32 %v1063, %v48
    %v1068 = vadd.f32 %v1058, %v1064
    %v1069 = vadd.f32 %v1059, %v1065
    %v1070 = vadd.f32 %v1060, %v1066
    %v1071 = vadd.f32 %v1061, %v1067
    %s1072 = sld [smem:[#allocation3 + $0x18e]]
    %v1073 = vstv %s1072
    %v1074 = vadd.f32 %v1068, %v1073
    %v1075 = vadd.f32 %v1069, %v1073
    %v1076 = vadd.f32 %v1070, %v1073
    %v1077 = vadd.f32 %v1071, %v1073
    %v1078 = vmax.f32 %v1074, 0.0
    %v1079 = vmax.f32 %v1075, 0.0
    %v1080 = vmax.f32 %v1076, 0.0
    %v1081 = vmax.f32 %v1077, 0.0
    %v1082 = vmax.f32 %v1078, %v1080
    %v1083 = vrot.slane %v1082, 4
    %v1084 = vmax.f32 %v1082, %v1083
    %v1085 = vrot.slane %v1084, 2
    %v1086 = vmax.f32 %v1084, %v1085
    %v1087 = vrot.slane %v1086, 1
    %v1088 = vmax.f32 %v1086, %v1087
    %v1089 = vmax.f32 %v1079, %v1081
    %v1090 = vrot.slane %v1089, 4
    %v1091 = vmax.f32 %v1089, %v1090
    %v1092 = vrot.slane %v1091, 2
    %v1093 = vmax.f32 %v1091, %v1092
    %v1094 = vrot.slane %v1093, 1
    %v1095 = vmax.f32 %v1093, %v1094
    %v1098 = vcombine.low %v1088, %v1095
    %v1100 = vunpack.c.l.s4 1966171168
    %v1101 = vunpack.c.0.s8 %v1100
    %v1102 = vlaneseq
    %v1103 = vshrl.u32 %v1102, 7
    %v1104 = vsub.s32 %v1101, %v1103
    %v1105 = vrot.slane %v1098, %v1104
    %v1107 = vunpack.c.l.s4 1966171168
    %v1108 = vunpack.c.0.s8 %v1107
    %v1109 = vlaneseq
    %v1110 = vshrl.u32 %v1109, 7
    %v1111 = vsub.s32 %v1108, %v1110
    %v1112 = vrot.slane %v1105, %v1111
    %s1114 = scalar_lea.vmem [#allocation2], 22
    %1115 = vst.msk [vmem:[%s1114] ss:$8 sm:$0x3] %vm120, %v1112
    %1116 = vst.msk [vmem:[%s1114] ss:$8 sm:$0x0] %vm120, %v1112
    %s1117 = sld [smem:[#allocation3 + $0xf]]
    %v1118 = vstv %s1117
    %v1119 = vmul.f32 %v1118, %v35
    %v1120 = vmul.f32 %v1118, %v36
    %v1121 = vmul.f32 %v1118, %v37
    %v1122 = vmul.f32 %v1118, %v38
    %s1123 = sld [smem:[#allocation3 + $0x8f]]
    %v1124 = vstv %s1123
    %v1125 = vmul.f32 %v1124, %v40
    %v1126 = vmul.f32 %v1124, %v41
    %v1127 = vmul.f32 %v1124, %v42
    %v1128 = vmul.f32 %v1124, %v43
    %v1129 = vadd.f32 %v1119, %v1125
    %v1130 = vadd.f32 %v1120, %v1126
    %v1131 = vadd.f32 %v1121, %v1127
    %v1132 = vadd.f32 %v1122, %v1128
    %s1133 = sld [smem:[#allocation3 + $0x10f]]
    %v1134 = vstv %s1133
    %v1135 = vmul.f32 %v1134, %v45
    %v1136 = vmul.f32 %v1134, %v46
    %v1137 = vmul.f32 %v1134, %v47
    %v1138 = vmul.f32 %v1134, %v48
    %v1139 = vadd.f32 %v1129, %v1135
    %v1140 = vadd.f32 %v1130, %v1136
    %v1141 = vadd.f32 %v1131, %v1137
    %v1142 = vadd.f32 %v1132, %v1138
    %s1143 = sld [smem:[#allocation3 + $0x18f]]
    %v1144 = vstv %s1143
    %v1145 = vadd.f32 %v1139, %v1144
    %v1146 = vadd.f32 %v1140, %v1144
    %v1147 = vadd.f32 %v1141, %v1144
    %v1148 = vadd.f32 %v1142, %v1144
    %v1149 = vmax.f32 %v1145, 0.0
    %v1150 = vmax.f32 %v1146, 0.0
    %v1151 = vmax.f32 %v1147, 0.0
    %v1152 = vmax.f32 %v1148, 0.0
    %v1153 = vmax.f32 %v1149, %v1151
    %v1154 = vrot.slane %v1153, 4
    %v1155 = vmax.f32 %v1153, %v1154
    %v1156 = vrot.slane %v1155, 2
    %v1157 = vmax.f32 %v1155, %v1156
    %v1158 = vrot.slane %v1157, 1
    %v1159 = vmax.f32 %v1157, %v1158
    %v1160 = vmax.f32 %v1150, %v1152
    %v1161 = vrot.slane %v1160, 4
    %v1162 = vmax.f32 %v1160, %v1161
    %v1163 = vrot.slane %v1162, 2
    %v1164 = vmax.f32 %v1162, %v1163
    %v1165 = vrot.slane %v1164, 1
    %v1166 = vmax.f32 %v1164, %v1165
    %v1169 = vcombine.low %v1159, %v1166
    %v1171 = vunpack.c.l.s4 1966171168
    %v1172 = vunpack.c.0.s8 %v1171
    %v1173 = vlaneseq
    %v1174 = vshrl.u32 %v1173, 7
    %v1175 = vsub.s32 %v1172, %v1174
    %v1176 = vrot.slane %v1169, %v1175
    %v1178 = vunpack.c.l.s4 1966171168
    %v1179 = vunpack.c.0.s8 %v1178
    %v1180 = vlaneseq
    %v1181 = vshrl.u32 %v1180, 7
    %v1182 = vsub.s32 %v1179, %v1181
    %v1183 = vrot.slane %v1176, %v1182
    %s1185 = scalar_lea.vmem [#allocation2], 23
    %1186 = vst.msk [vmem:[%s1185] ss:$8 sm:$0x3] %vm120, %v1183
    %1187 = vst.msk [vmem:[%s1185] ss:$8 sm:$0x0] %vm120, %v1183
    %v1188 = vld [vmem:[%s0 + $0x20] sm:$0xff]
    %v1189 = vld [vmem:[%s0 + $0x28] sm:$0xff]
    %v1190 = vld [vmem:[%s0 + $0x30] sm:$0xff]
    %v1191 = vld [vmem:[%s0 + $0x38] sm:$0xff]
    %v1192 = vld [vmem:[%s39 + $0x20] sm:$0xff]
    %v1193 = vld [vmem:[%s39 + $0x28] sm:$0xff]
    %v1194 = vld [vmem:[%s39 + $0x30] sm:$0xff]
    %v1195 = vld [vmem:[%s39 + $0x38] sm:$0xff]
    %v1196 = vld [vmem:[%s44 + $0x20] sm:$0xff]
    %v1197 = vld [vmem:[%s44 + $0x28] sm:$0xff]
    %v1198 = vld [vmem:[%s44 + $0x30] sm:$0xff]
    %v1199 = vld [vmem:[%s44 + $0x38] sm:$0xff]
    %s1200 = sld [smem:[#allocation3]]
    %v1201 = vstv %s1200
    %v1202 = vmul.f32 %v1201, %v1188
    %v1203 = vmul.f32 %v1201, %v1189
    %v1204 = vmul.f32 %v1201, %v1190
    %v1205 = vmul.f32 %v1201, %v1191
    %s1206 = sld [smem:[#allocation3 + $0x80]]
    %v1207 = vstv %s1206
    %v1208 = vmul.f32 %v1207, %v1192
    %v1209 = vmul.f32 %v1207, %v1193
    %v1210 = vmul.f32 %v1207, %v1194
    %v1211 = vmul.f32 %v1207, %v1195
    %v1212 = vadd.f32 %v1202, %v1208
    %v1213 = vadd.f32 %v1203, %v1209
    %v1214 = vadd.f32 %v1204, %v1210
    %v1215 = vadd.f32 %v1205, %v1211
    %s1216 = sld [smem:[#allocation3 + $0x100]]
    %v1217 = vstv %s1216
    %v1218 = vmul.f32 %v1217, %v1196
    %v1219 = vmul.f32 %v1217, %v1197
    %v1220 = vmul.f32 %v1217, %v1198
    %v1221 = vmul.f32 %v1217, %v1199
    %v1222 = vadd.f32 %v1212, %v1218
    %v1223 = vadd.f32 %v1213, %v1219
    %v1224 = vadd.f32 %v1214, %v1220
    %v1225 = vadd.f32 %v1215, %v1221
    %s1226 = sld [smem:[#allocation3 + $0x180]]
    %v1227 = vstv %s1226
    %v1228 = vadd.f32 %v1222, %v1227
    %v1229 = vadd.f32 %v1223, %v1227
    %v1230 = vadd.f32 %v1224, %v1227
    %v1231 = vadd.f32 %v1225, %v1227
    %v1232 = vmax.f32 %v1228, 0.0
    %v1233 = vmax.f32 %v1229, 0.0
    %v1234 = vmax.f32 %v1230, 0.0
    %v1235 = vmax.f32 %v1231, 0.0
    %v1236 = vmax.f32 %v1232, %v1234
    %v1237 = vrot.slane %v1236, 4
    %v1238 = vmax.f32 %v1236, %v1237
    %v1239 = vrot.slane %v1238, 2
    %v1240 = vmax.f32 %v1238, %v1239
    %v1241 = vrot.slane %v1240, 1
    %v1242 = vmax.f32 %v1240, %v1241
    %v1243 = vmax.f32 %v1233, %v1235
    %v1244 = vrot.slane %v1243, 4
    %v1245 = vmax.f32 %v1243, %v1244
    %v1246 = vrot.slane %v1245, 2
    %v1247 = vmax.f32 %v1245, %v1246
    %v1248 = vrot.slane %v1247, 1
    %v1249 = vmax.f32 %v1247, %v1248
    %v1252 = vcombine.low %v1242, %v1249
    %v1254 = vunpack.c.l.s4 1966171168
    %v1255 = vunpack.c.0.s8 %v1254
    %v1256 = vlaneseq
    %v1257 = vshrl.u32 %v1256, 7
    %v1258 = vsub.s32 %v1255, %v1257
    %v1259 = vrot.slane %v1252, %v1258
    %v1261 = vunpack.c.l.s4 1966171168
    %v1262 = vunpack.c.0.s8 %v1261
    %v1263 = vlaneseq
    %v1264 = vshrl.u32 %v1263, 7
    %v1265 = vsub.s32 %v1262, %v1264
    %v1266 = vrot.slane %v1259, %v1265
    %s1268 = scalar_lea.vmem [#allocation2], 32
    %1269 = vst.msk [vmem:[%s1268] ss:$8 sm:$0x3] %vm120, %v1266
    %1270 = vst.msk [vmem:[%s1268] ss:$8 sm:$0x0] %vm120, %v1266
    %s1271 = sld [smem:[#allocation3 + $0x1]]
    %v1272 = vstv %s1271
    %v1273 = vmul.f32 %v1272, %v1188
    %v1274 = vmul.f32 %v1272, %v1189
    %v1275 = vmul.f32 %v1272, %v1190
    %v1276 = vmul.f32 %v1272, %v1191
    %s1277 = sld [smem:[#allocation3 + $0x81]]
    %v1278 = vstv %s1277
    %v1279 = vmul.f32 %v1278, %v1192
    %v1280 = vmul.f32 %v1278, %v1193
    %v1281 = vmul.f32 %v1278, %v1194
    %v1282 = vmul.f32 %v1278, %v1195
    %v1283 = vadd.f32 %v1273, %v1279
    %v1284 = vadd.f32 %v1274, %v1280
    %v1285 = vadd.f32 %v1275, %v1281
    %v1286 = vadd.f32 %v1276, %v1282
    %s1287 = sld [smem:[#allocation3 + $0x101]]
    %v1288 = vstv %s1287
    %v1289 = vmul.f32 %v1288, %v1196
    %v1290 = vmul.f32 %v1288, %v1197
    %v1291 = vmul.f32 %v1288, %v1198
    %v1292 = vmul.f32 %v1288, %v1199
    %v1293 = vadd.f32 %v1283, %v1289
    %v1294 = vadd.f32 %v1284, %v1290
    %v1295 = vadd.f32 %v1285, %v1291
    %v1296 = vadd.f32 %v1286, %v1292
    %s1297 = sld [smem:[#allocation3 + $0x181]]
    %v1298 = vstv %s1297
    %v1299 = vadd.f32 %v1293, %v1298
    %v1300 = vadd.f32 %v1294, %v1298
    %v1301 = vadd.f32 %v1295, %v1298
    %v1302 = vadd.f32 %v1296, %v1298
    %v1303 = vmax.f32 %v1299, 0.0
    %v1304 = vmax.f32 %v1300, 0.0
    %v1305 = vmax.f32 %v1301, 0.0
    %v1306 = vmax.f32 %v1302, 0.0
    %v1307 = vmax.f32 %v1303, %v1305
    %v1308 = vrot.slane %v1307, 4
    %v1309 = vmax.f32 %v1307, %v1308
    %v1310 = vrot.slane %v1309, 2
    %v1311 = vmax.f32 %v1309, %v1310
    %v1312 = vrot.slane %v1311, 1
    %v1313 = vmax.f32 %v1311, %v1312
    %v1314 = vmax.f32 %v1304, %v1306
    %v1315 = vrot.slane %v1314, 4
    %v1316 = vmax.f32 %v1314, %v1315
    %v1317 = vrot.slane %v1316, 2
    %v1318 = vmax.f32 %v1316, %v1317
    %v1319 = vrot.slane %v1318, 1
    %v1320 = vmax.f32 %v1318, %v1319
    %v1323 = vcombine.low %v1313, %v1320
    %v1325 = vunpack.c.l.s4 1966171168
    %v1326 = vunpack.c.0.s8 %v1325
    %v1327 = vlaneseq
    %v1328 = vshrl.u32 %v1327, 7
    %v1329 = vsub.s32 %v1326, %v1328
    %v1330 = vrot.slane %v1323, %v1329
    %v1332 = vunpack.c.l.s4 1966171168
    %v1333 = vunpack.c.0.s8 %v1332
    %v1334 = vlaneseq
    %v1335 = vshrl.u32 %v1334, 7
    %v1336 = vsub.s32 %v1333, %v1335
    %v1337 = vrot.slane %v1330, %v1336
    %s1339 = scalar_lea.vmem [#allocation2], 33
    %1340 = vst.msk [vmem:[%s1339] ss:$8 sm:$0x3] %vm120, %v1337
    %1341 = vst.msk [vmem:[%s1339] ss:$8 sm:$0x0] %vm120, %v1337
    %s1342 = sld [smem:[#allocation3 + $0x2]]
    %v1343 = vstv %s1342
    %v1344 = vmul.f32 %v1343, %v1188
    %v1345 = vmul.f32 %v1343, %v1189
    %v1346 = vmul.f32 %v1343, %v1190
    %v1347 = vmul.f32 %v1343, %v1191
    %s1348 = sld [smem:[#allocation3 + $0x82]]
    %v1349 = vstv %s1348
    %v1350 = vmul.f32 %v1349, %v1192
    %v1351 = vmul.f32 %v1349, %v1193
    %v1352 = vmul.f32 %v1349, %v1194
    %v1353 = vmul.f32 %v1349, %v1195
    %v1354 = vadd.f32 %v1344, %v1350
    %v1355 = vadd.f32 %v1345, %v1351
    %v1356 = vadd.f32 %v1346, %v1352
    %v1357 = vadd.f32 %v1347, %v1353
    %s1358 = sld [smem:[#allocation3 + $0x102]]
    %v1359 = vstv %s1358
    %v1360 = vmul.f32 %v1359, %v1196
    %v1361 = vmul.f32 %v1359, %v1197
    %v1362 = vmul.f32 %v1359, %v1198
    %v1363 = vmul.f32 %v1359, %v1199
    %v1364 = vadd.f32 %v1354, %v1360
    %v1365 = vadd.f32 %v1355, %v1361
    %v1366 = vadd.f32 %v1356, %v1362
    %v1367 = vadd.f32 %v1357, %v1363
    %s1368 = sld [smem:[#allocation3 + $0x182]]
    %v1369 = vstv %s1368
    %v1370 = vadd.f32 %v1364, %v1369
    %v1371 = vadd.f32 %v1365, %v1369
    %v1372 = vadd.f32 %v1366, %v1369
    %v1373 = vadd.f32 %v1367, %v1369
    %v1374 = vmax.f32 %v1370, 0.0
    %v1375 = vmax.f32 %v1371, 0.0
    %v1376 = vmax.f32 %v1372, 0.0
    %v1377 = vmax.f32 %v1373, 0.0
    %v1378 = vmax.f32 %v1374, %v1376
    %v1379 = vrot.slane %v1378, 4
    %v1380 = vmax.f32 %v1378, %v1379
    %v1381 = vrot.slane %v1380, 2
    %v1382 = vmax.f32 %v1380, %v1381
    %v1383 = vrot.slane %v1382, 1
    %v1384 = vmax.f32 %v1382, %v1383
    %v1385 = vmax.f32 %v1375, %v1377
    %v1386 = vrot.slane %v1385, 4
    %v1387 = vmax.f32 %v1385, %v1386
    %v1388 = vrot.slane %v1387, 2
    %v1389 = vmax.f32 %v1387, %v1388
    %v1390 = vrot.slane %v1389, 1
    %v1391 = vmax.f32 %v1389, %v1390
    %v1394 = vcombine.low %v1384, %v1391
    %v1396 = vunpack.c.l.s4 1966171168
    %v1397 = vunpack.c.0.s8 %v1396
    %v1398 = vlaneseq
    %v1399 = vshrl.u32 %v1398, 7
    %v1400 = vsub.s32 %v1397, %v1399
    %v1401 = vrot.slane %v1394, %v1400
    %v1403 = vunpack.c.l.s4 1966171168
    %v1404 = vunpack.c.0.s8 %v1403
    %v1405 = vlaneseq
    %v1406 = vshrl.u32 %v1405, 7
    %v1407 = vsub.s32 %v1404, %v1406
    %v1408 = vrot.slane %v1401, %v1407
    %s1410 = scalar_lea.vmem [#allocation2], 34
    %1411 = vst.msk [vmem:[%s1410] ss:$8 sm:$0x3] %vm120, %v1408
    %1412 = vst.msk [vmem:[%s1410] ss:$8 sm:$0x0] %vm120, %v1408
    %s1413 = sld [smem:[#allocation3 + $0x3]]
    %v1414 = vstv %s1413
    %v1415 = vmul.f32 %v1414, %v1188
    %v1416 = vmul.f32 %v1414, %v1189
    %v1417 = vmul.f32 %v1414, %v1190
    %v1418 = vmul.f32 %v1414, %v1191
    %s1419 = sld [smem:[#allocation3 + $0x83]]
    %v1420 = vstv %s1419
    %v1421 = vmul.f32 %v1420, %v1192
    %v1422 = vmul.f32 %v1420, %v1193
    %v1423 = vmul.f32 %v1420, %v1194
    %v1424 = vmul.f32 %v1420, %v1195
    %v1425 = vadd.f32 %v1415, %v1421
    %v1426 = vadd.f32 %v1416, %v1422
    %v1427 = vadd.f32 %v1417, %v1423
    %v1428 = vadd.f32 %v1418, %v1424
    %s1429 = sld [smem:[#allocation3 + $0x103]]
    %v1430 = vstv %s1429
    %v1431 = vmul.f32 %v1430, %v1196
    %v1432 = vmul.f32 %v1430, %v1197
    %v1433 = vmul.f32 %v1430, %v1198
    %v1434 = vmul.f32 %v1430, %v1199
    %v1435 = vadd.f32 %v1425, %v1431
    %v1436 = vadd.f32 %v1426, %v1432
    %v1437 = vadd.f32 %v1427, %v1433
    %v1438 = vadd.f32 %v1428, %v1434
    %s1439 = sld [smem:[#allocation3 + $0x183]]
    %v1440 = vstv %s1439
    %v1441 = vadd.f32 %v1435, %v1440
    %v1442 = vadd.f32 %v1436, %v1440
    %v1443 = vadd.f32 %v1437, %v1440
    %v1444 = vadd.f32 %v1438, %v1440
    %v1445 = vmax.f32 %v1441, 0.0
    %v1446 = vmax.f32 %v1442, 0.0
    %v1447 = vmax.f32 %v1443, 0.0
    %v1448 = vmax.f32 %v1444, 0.0
    %v1449 = vmax.f32 %v1445, %v1447
    %v1450 = vrot.slane %v1449, 4
    %v1451 = vmax.f32 %v1449, %v1450
    %v1452 = vrot.slane %v1451, 2
    %v1453 = vmax.f32 %v1451, %v1452
    %v1454 = vrot.slane %v1453, 1
    %v1455 = vmax.f32 %v1453, %v1454
    %v1456 = vmax.f32 %v1446, %v1448
    %v1457 = vrot.slane %v1456, 4
    %v1458 = vmax.f32 %v1456, %v1457
    %v1459 = vrot.slane %v1458, 2
    %v1460 = vmax.f32 %v1458, %v1459
    %v1461 = vrot.slane %v1460, 1
    %v1462 = vmax.f32 %v1460, %v1461
    %v1465 = vcombine.low %v1455, %v1462
    %v1467 = vunpack.c.l.s4 1966171168
    %v1468 = vunpack.c.0.s8 %v1467
    %v1469 = vlaneseq
    %v1470 = vshrl.u32 %v1469, 7
    %v1471 = vsub.s32 %v1468, %v1470
    %v1472 = vrot.slane %v1465, %v1471
    %v1474 = vunpack.c.l.s4 1966171168
    %v1475 = vunpack.c.0.s8 %v1474
    %v1476 = vlaneseq
    %v1477 = vshrl.u32 %v1476, 7
    %v1478 = vsub.s32 %v1475, %v1477
    %v1479 = vrot.slane %v1472, %v1478
    %s1481 = scalar_lea.vmem [#allocation2], 35
    %1482 = vst.msk [vmem:[%s1481] ss:$8 sm:$0x3] %vm120, %v1479
    %1483 = vst.msk [vmem:[%s1481] ss:$8 sm:$0x0] %vm120, %v1479
    %s1484 = sld [smem:[#allocation3 + $0x4]]
    %v1485 = vstv %s1484
    %v1486 = vmul.f32 %v1485, %v1188
    %v1487 = vmul.f32 %v1485, %v1189
    %v1488 = vmul.f32 %v1485, %v1190
    %v1489 = vmul.f32 %v1485, %v1191
    %s1490 = sld [smem:[#allocation3 + $0x84]]
    %v1491 = vstv %s1490
    %v1492 = vmul.f32 %v1491, %v1192
    %v1493 = vmul.f32 %v1491, %v1193
    %v1494 = vmul.f32 %v1491, %v1194
    %v1495 = vmul.f32 %v1491, %v1195
    %v1496 = vadd.f32 %v1486, %v1492
    %v1497 = vadd.f32 %v1487, %v1493
    %v1498 = vadd.f32 %v1488, %v1494
    %v1499 = vadd.f32 %v1489, %v1495
    %s1500 = sld [smem:[#allocation3 + $0x104]]
    %v1501 = vstv %s1500
    %v1502 = vmul.f32 %v1501, %v1196
    %v1503 = vmul.f32 %v1501, %v1197
    %v1504 = vmul.f32 %v1501, %v1198
    %v1505 = vmul.f32 %v1501, %v1199
    %v1506 = vadd.f32 %v1496, %v1502
    %v1507 = vadd.f32 %v1497, %v1503
    %v1508 = vadd.f32 %v1498, %v1504
    %v1509 = vadd.f32 %v1499, %v1505
    %s1510 = sld [smem:[#allocation3 + $0x184]]
    %v1511 = vstv %s1510
    %v1512 = vadd.f32 %v1506, %v1511
    %v1513 = vadd.f32 %v1507, %v1511
    %v1514 = vadd.f32 %v1508, %v1511
    %v1515 = vadd.f32 %v1509, %v1511
    %v1516 = vmax.f32 %v1512, 0.0
    %v1517 = vmax.f32 %v1513, 0.0
    %v1518 = vmax.f32 %v1514, 0.0
    %v1519 = vmax.f32 %v1515, 0.0
    %v1520 = vmax.f32 %v1516, %v1518
    %v1521 = vrot.slane %v1520, 4
    %v1522 = vmax.f32 %v1520, %v1521
    %v1523 = vrot.slane %v1522, 2
    %v1524 = vmax.f32 %v1522, %v1523
    %v1525 = vrot.slane %v1524, 1
    %v1526 = vmax.f32 %v1524, %v1525
    %v1527 = vmax.f32 %v1517, %v1519
    %v1528 = vrot.slane %v1527, 4
    %v1529 = vmax.f32 %v1527, %v1528
    %v1530 = vrot.slane %v1529, 2
    %v1531 = vmax.f32 %v1529, %v1530
    %v1532 = vrot.slane %v1531, 1
    %v1533 = vmax.f32 %v1531, %v1532
    %v1536 = vcombine.low %v1526, %v1533
    %v1538 = vunpack.c.l.s4 1966171168
    %v1539 = vunpack.c.0.s8 %v1538
    %v1540 = vlaneseq
    %v1541 = vshrl.u32 %v1540, 7
    %v1542 = vsub.s32 %v1539, %v1541
    %v1543 = vrot.slane %v1536, %v1542
    %v1545 = vunpack.c.l.s4 1966171168
    %v1546 = vunpack.c.0.s8 %v1545
    %v1547 = vlaneseq
    %v1548 = vshrl.u32 %v1547, 7
    %v1549 = vsub.s32 %v1546, %v1548
    %v1550 = vrot.slane %v1543, %v1549
    %s1552 = scalar_lea.vmem [#allocation2], 36
    %1553 = vst.msk [vmem:[%s1552] ss:$8 sm:$0x3] %vm120, %v1550
    %1554 = vst.msk [vmem:[%s1552] ss:$8 sm:$0x0] %vm120, %v1550
    %s1555 = sld [smem:[#allocation3 + $0x5]]
    %v1556 = vstv %s1555
    %v1557 = vmul.f32 %v1556, %v1188
    %v1558 = vmul.f32 %v1556, %v1189
    %v1559 = vmul.f32 %v1556, %v1190
    %v1560 = vmul.f32 %v1556, %v1191
    %s1561 = sld [smem:[#allocation3 + $0x85]]
    %v1562 = vstv %s1561
    %v1563 = vmul.f32 %v1562, %v1192
    %v1564 = vmul.f32 %v1562, %v1193
    %v1565 = vmul.f32 %v1562, %v1194
    %v1566 = vmul.f32 %v1562, %v1195
    %v1567 = vadd.f32 %v1557, %v1563
    %v1568 = vadd.f32 %v1558, %v1564
    %v1569 = vadd.f32 %v1559, %v1565
    %v1570 = vadd.f32 %v1560, %v1566
    %s1571 = sld [smem:[#allocation3 + $0x105]]
    %v1572 = vstv %s1571
    %v1573 = vmul.f32 %v1572, %v1196
    %v1574 = vmul.f32 %v1572, %v1197
    %v1575 = vmul.f32 %v1572, %v1198
    %v1576 = vmul.f32 %v1572, %v1199
    %v1577 = vadd.f32 %v1567, %v1573
    %v1578 = vadd.f32 %v1568, %v1574
    %v1579 = vadd.f32 %v1569, %v1575
    %v1580 = vadd.f32 %v1570, %v1576
    %s1581 = sld [smem:[#allocation3 + $0x185]]
    %v1582 = vstv %s1581
    %v1583 = vadd.f32 %v1577, %v1582
    %v1584 = vadd.f32 %v1578, %v1582
    %v1585 = vadd.f32 %v1579, %v1582
    %v1586 = vadd.f32 %v1580, %v1582
    %v1587 = vmax.f32 %v1583, 0.0
    %v1588 = vmax.f32 %v1584, 0.0
    %v1589 = vmax.f32 %v1585, 0.0
    %v1590 = vmax.f32 %v1586, 0.0
    %v1591 = vmax.f32 %v1587, %v1589
    %v1592 = vrot.slane %v1591, 4
    %v1593 = vmax.f32 %v1591, %v1592
    %v1594 = vrot.slane %v1593, 2
    %v1595 = vmax.f32 %v1593, %v1594
    %v1596 = vrot.slane %v1595, 1
    %v1597 = vmax.f32 %v1595, %v1596
    %v1598 = vmax.f32 %v1588, %v1590
    %v1599 = vrot.slane %v1598, 4
    %v1600 = vmax.f32 %v1598, %v1599
    %v1601 = vrot.slane %v1600, 2
    %v1602 = vmax.f32 %v1600, %v1601
    %v1603 = vrot.slane %v1602, 1
    %v1604 = vmax.f32 %v1602, %v1603
    %v1607 = vcombine.low %v1597, %v1604
    %v1609 = vunpack.c.l.s4 1966171168
    %v1610 = vunpack.c.0.s8 %v1609
    %v1611 = vlaneseq
    %v1612 = vshrl.u32 %v1611, 7
    %v1613 = vsub.s32 %v1610, %v1612
    %v1614 = vrot.slane %v1607, %v1613
    %v1616 = vunpack.c.l.s4 1966171168
    %v1617 = vunpack.c.0.s8 %v1616
    %v1618 = vlaneseq
    %v1619 = vshrl.u32 %v1618, 7
    %v1620 = vsub.s32 %v1617, %v1619
    %v1621 = vrot.slane %v1614, %v1620
    %s1623 = scalar_lea.vmem [#allocation2], 37
    %1624 = vst.msk [vmem:[%s1623] ss:$8 sm:$0x3] %vm120, %v1621
    %1625 = vst.msk [vmem:[%s1623] ss:$8 sm:$0x0] %vm120, %v1621
    %s1626 = sld [smem:[#allocation3 + $0x6]]
    %v1627 = vstv %s1626
    %v1628 = vmul.f32 %v1627, %v1188
    %v1629 = vmul.f32 %v1627, %v1189
    %v1630 = vmul.f32 %v1627, %v1190
    %v1631 = vmul.f32 %v1627, %v1191
    %s1632 = sld [smem:[#allocation3 + $0x86]]
    %v1633 = vstv %s1632
    %v1634 = vmul.f32 %v1633, %v1192
    %v1635 = vmul.f32 %v1633, %v1193
    %v1636 = vmul.f32 %v1633, %v1194
    %v1637 = vmul.f32 %v1633, %v1195
    %v1638 = vadd.f32 %v1628, %v1634
    %v1639 = vadd.f32 %v1629, %v1635
    %v1640 = vadd.f32 %v1630, %v1636
    %v1641 = vadd.f32 %v1631, %v1637
    %s1642 = sld [smem:[#allocation3 + $0x106]]
    %v1643 = vstv %s1642
    %v1644 = vmul.f32 %v1643, %v1196
    %v1645 = vmul.f32 %v1643, %v1197
    %v1646 = vmul.f32 %v1643, %v1198
    %v1647 = vmul.f32 %v1643, %v1199
    %v1648 = vadd.f32 %v1638, %v1644
    %v1649 = vadd.f32 %v1639, %v1645
    %v1650 = vadd.f32 %v1640, %v1646
    %v1651 = vadd.f32 %v1641, %v1647
    %s1652 = sld [smem:[#allocation3 + $0x186]]
    %v1653 = vstv %s1652
    %v1654 = vadd.f32 %v1648, %v1653
    %v1655 = vadd.f32 %v1649, %v1653
    %v1656 = vadd.f32 %v1650, %v1653
    %v1657 = vadd.f32 %v1651, %v1653
    %v1658 = vmax.f32 %v1654, 0.0
    %v1659 = vmax.f32 %v1655, 0.0
    %v1660 = vmax.f32 %v1656, 0.0
    %v1661 = vmax.f32 %v1657, 0.0
    %v1662 = vmax.f32 %v1658, %v1660
    %v1663 = vrot.slane %v1662, 4
    %v1664 = vmax.f32 %v1662, %v1663
    %v1665 = vrot.slane %v1664, 2
    %v1666 = vmax.f32 %v1664, %v1665
    %v1667 = vrot.slane %v1666, 1
    %v1668 = vmax.f32 %v1666, %v1667
    %v1669 = vmax.f32 %v1659, %v1661
    %v1670 = vrot.slane %v1669, 4
    %v1671 = vmax.f32 %v1669, %v1670
    %v1672 = vrot.slane %v1671, 2
    %v1673 = vmax.f32 %v1671, %v1672
    %v1674 = vrot.slane %v1673, 1
    %v1675 = vmax.f32 %v1673, %v1674
    %v1678 = vcombine.low %v1668, %v1675
    %v1680 = vunpack.c.l.s4 1966171168
    %v1681 = vunpack.c.0.s8 %v1680
    %v1682 = vlaneseq
    %v1683 = vshrl.u32 %v1682, 7
    %v1684 = vsub.s32 %v1681, %v1683
    %v1685 = vrot.slane %v1678, %v1684
    %v1687 = vunpack.c.l.s4 1966171168
    %v1688 = vunpack.c.0.s8 %v1687
    %v1689 = vlaneseq
    %v1690 = vshrl.u32 %v1689, 7
    %v1691 = vsub.s32 %v1688, %v1690
    %v1692 = vrot.slane %v1685, %v1691
    %s1694 = scalar_lea.vmem [#allocation2], 38
    %1695 = vst.msk [vmem:[%s1694] ss:$8 sm:$0x3] %vm120, %v1692
    %1696 = vst.msk [vmem:[%s1694] ss:$8 sm:$0x0] %vm120, %v1692
    %s1697 = sld [smem:[#allocation3 + $0x7]]
    %v1698 = vstv %s1697
    %v1699 = vmul.f32 %v1698, %v1188
    %v1700 = vmul.f32 %v1698, %v1189
    %v1701 = vmul.f32 %v1698, %v1190
    %v1702 = vmul.f32 %v1698, %v1191
    %s1703 = sld [smem:[#allocation3 + $0x87]]
    %v1704 = vstv %s1703
    %v1705 = vmul.f32 %v1704, %v1192
    %v1706 = vmul.f32 %v1704, %v1193
    %v1707 = vmul.f32 %v1704, %v1194
    %v1708 = vmul.f32 %v1704, %v1195
    %v1709 = vadd.f32 %v1699, %v1705
    %v1710 = vadd.f32 %v1700, %v1706
    %v1711 = vadd.f32 %v1701, %v1707
    %v1712 = vadd.f32 %v1702, %v1708
    %s1713 = sld [smem:[#allocation3 + $0x107]]
    %v1714 = vstv %s1713
    %v1715 = vmul.f32 %v1714, %v1196
    %v1716 = vmul.f32 %v1714, %v1197
    %v1717 = vmul.f32 %v1714, %v1198
    %v1718 = vmul.f32 %v1714, %v1199
    %v1719 = vadd.f32 %v1709, %v1715
    %v1720 = vadd.f32 %v1710, %v1716
    %v1721 = vadd.f32 %v1711, %v1717
    %v1722 = vadd.f32 %v1712, %v1718
    %s1723 = sld [smem:[#allocation3 + $0x187]]
    %v1724 = vstv %s1723
    %v1725 = vadd.f32 %v1719, %v1724
    %v1726 = vadd.f32 %v1720, %v1724
    %v1727 = vadd.f32 %v1721, %v1724
    %v1728 = vadd.f32 %v1722, %v1724
    %v1729 = vmax.f32 %v1725, 0.0
    %v1730 = vmax.f32 %v1726, 0.0
    %v1731 = vmax.f32 %v1727, 0.0
    %v1732 = vmax.f32 %v1728, 0.0
    %v1733 = vmax.f32 %v1729, %v1731
    %v1734 = vrot.slane %v1733, 4
    %v1735 = vmax.f32 %v1733, %v1734
    %v1736 = vrot.slane %v1735, 2
    %v1737 = vmax.f32 %v1735, %v1736
    %v1738 = vrot.slane %v1737, 1
    %v1739 = vmax.f32 %v1737, %v1738
    %v1740 = vmax.f32 %v1730, %v1732
    %v1741 = vrot.slane %v1740, 4
    %v1742 = vmax.f32 %v1740, %v1741
    %v1743 = vrot.slane %v1742, 2
    %v1744 = vmax.f32 %v1742, %v1743
    %v1745 = vrot.slane %v1744, 1
    %v1746 = vmax.f32 %v1744, %v1745
    %v1749 = vcombine.low %v1739, %v1746
    %v1751 = vunpack.c.l.s4 1966171168
    %v1752 = vunpack.c.0.s8 %v1751
    %v1753 = vlaneseq
    %v1754 = vshrl.u32 %v1753, 7
    %v1755 = vsub.s32 %v1752, %v1754
    %v1756 = vrot.slane %v1749, %v1755
    %v1758 = vunpack.c.l.s4 1966171168
    %v1759 = vunpack.c.0.s8 %v1758
    %v1760 = vlaneseq
    %v1761 = vshrl.u32 %v1760, 7
    %v1762 = vsub.s32 %v1759, %v1761
    %v1763 = vrot.slane %v1756, %v1762
    %s1765 = scalar_lea.vmem [#allocation2], 39
    %1766 = vst.msk [vmem:[%s1765] ss:$8 sm:$0x3] %vm120, %v1763
    %1767 = vst.msk [vmem:[%s1765] ss:$8 sm:$0x0] %vm120, %v1763
    %s1768 = sld [smem:[#allocation3 + $0x8]]
    %v1769 = vstv %s1768
    %v1770 = vmul.f32 %v1769, %v1188
    %v1771 = vmul.f32 %v1769, %v1189
    %v1772 = vmul.f32 %v1769, %v1190
    %v1773 = vmul.f32 %v1769, %v1191
    %s1774 = sld [smem:[#allocation3 + $0x88]]
    %v1775 = vstv %s1774
    %v1776 = vmul.f32 %v1775, %v1192
    %v1777 = vmul.f32 %v1775, %v1193
    %v1778 = vmul.f32 %v1775, %v1194
    %v1779 = vmul.f32 %v1775, %v1195
    %v1780 = vadd.f32 %v1770, %v1776
    %v1781 = vadd.f32 %v1771, %v1777
    %v1782 = vadd.f32 %v1772, %v1778
    %v1783 = vadd.f32 %v1773, %v1779
    %s1784 = sld [smem:[#allocation3 + $0x108]]
    %v1785 = vstv %s1784
    %v1786 = vmul.f32 %v1785, %v1196
    %v1787 = vmul.f32 %v1785, %v1197
    %v1788 = vmul.f32 %v1785, %v1198
    %v1789 = vmul.f32 %v1785, %v1199
    %v1790 = vadd.f32 %v1780, %v1786
    %v1791 = vadd.f32 %v1781, %v1787
    %v1792 = vadd.f32 %v1782, %v1788
    %v1793 = vadd.f32 %v1783, %v1789
    %s1794 = sld [smem:[#allocation3 + $0x188]]
    %v1795 = vstv %s1794
    %v1796 = vadd.f32 %v1790, %v1795
    %v1797 = vadd.f32 %v1791, %v1795
    %v1798 = vadd.f32 %v1792, %v1795
    %v1799 = vadd.f32 %v1793, %v1795
    %v1800 = vmax.f32 %v1796, 0.0
    %v1801 = vmax.f32 %v1797, 0.0
    %v1802 = vmax.f32 %v1798, 0.0
    %v1803 = vmax.f32 %v1799, 0.0
    %v1804 = vmax.f32 %v1800, %v1802
    %v1805 = vrot.slane %v1804, 4
    %v1806 = vmax.f32 %v1804, %v1805
    %v1807 = vrot.slane %v1806, 2
    %v1808 = vmax.f32 %v1806, %v1807
    %v1809 = vrot.slane %v1808, 1
    %v1810 = vmax.f32 %v1808, %v1809
    %v1811 = vmax.f32 %v1801, %v1803
    %v1812 = vrot.slane %v1811, 4
    %v1813 = vmax.f32 %v1811, %v1812
    %v1814 = vrot.slane %v1813, 2
    %v1815 = vmax.f32 %v1813, %v1814
    %v1816 = vrot.slane %v1815, 1
    %v1817 = vmax.f32 %v1815, %v1816
    %v1820 = vcombine.low %v1810, %v1817
    %v1822 = vunpack.c.l.s4 1966171168
    %v1823 = vunpack.c.0.s8 %v1822
    %v1824 = vlaneseq
    %v1825 = vshrl.u32 %v1824, 7
    %v1826 = vsub.s32 %v1823, %v1825
    %v1827 = vrot.slane %v1820, %v1826
    %v1829 = vunpack.c.l.s4 1966171168
    %v1830 = vunpack.c.0.s8 %v1829
    %v1831 = vlaneseq
    %v1832 = vshrl.u32 %v1831, 7
    %v1833 = vsub.s32 %v1830, %v1832
    %v1834 = vrot.slane %v1827, %v1833
    %s1836 = scalar_lea.vmem [#allocation2], 48
    %1837 = vst.msk [vmem:[%s1836] ss:$8 sm:$0x3] %vm120, %v1834
    %1838 = vst.msk [vmem:[%s1836] ss:$8 sm:$0x0] %vm120, %v1834
    %s1839 = sld [smem:[#allocation3 + $0x9]]
    %v1840 = vstv %s1839
    %v1841 = vmul.f32 %v1840, %v1188
    %v1842 = vmul.f32 %v1840, %v1189
    %v1843 = vmul.f32 %v1840, %v1190
    %v1844 = vmul.f32 %v1840, %v1191
    %s1845 = sld [smem:[#allocation3 + $0x89]]
    %v1846 = vstv %s1845
    %v1847 = vmul.f32 %v1846, %v1192
    %v1848 = vmul.f32 %v1846, %v1193
    %v1849 = vmul.f32 %v1846, %v1194
    %v1850 = vmul.f32 %v1846, %v1195
    %v1851 = vadd.f32 %v1841, %v1847
    %v1852 = vadd.f32 %v1842, %v1848
    %v1853 = vadd.f32 %v1843, %v1849
    %v1854 = vadd.f32 %v1844, %v1850
    %s1855 = sld [smem:[#allocation3 + $0x109]]
    %v1856 = vstv %s1855
    %v1857 = vmul.f32 %v1856, %v1196
    %v1858 = vmul.f32 %v1856, %v1197
    %v1859 = vmul.f32 %v1856, %v1198
    %v1860 = vmul.f32 %v1856, %v1199
    %v1861 = vadd.f32 %v1851, %v1857
    %v1862 = vadd.f32 %v1852, %v1858
    %v1863 = vadd.f32 %v1853, %v1859
    %v1864 = vadd.f32 %v1854, %v1860
    %s1865 = sld [smem:[#allocation3 + $0x189]]
    %v1866 = vstv %s1865
    %v1867 = vadd.f32 %v1861, %v1866
    %v1868 = vadd.f32 %v1862, %v1866
    %v1869 = vadd.f32 %v1863, %v1866
    %v1870 = vadd.f32 %v1864, %v1866
    %v1871 = vmax.f32 %v1867, 0.0
    %v1872 = vmax.f32 %v1868, 0.0
    %v1873 = vmax.f32 %v1869, 0.0
    %v1874 = vmax.f32 %v1870, 0.0
    %v1875 = vmax.f32 %v1871, %v1873
    %v1876 = vrot.slane %v1875, 4
    %v1877 = vmax.f32 %v1875, %v1876
    %v1878 = vrot.slane %v1877, 2
    %v1879 = vmax.f32 %v1877, %v1878
    %v1880 = vrot.slane %v1879, 1
    %v1881 = vmax.f32 %v1879, %v1880
    %v1882 = vmax.f32 %v1872, %v1874
    %v1883 = vrot.slane %v1882, 4
    %v1884 = vmax.f32 %v1882, %v1883
    %v1885 = vrot.slane %v1884, 2
    %v1886 = vmax.f32 %v1884, %v1885
    %v1887 = vrot.slane %v1886, 1
    %v1888 = vmax.f32 %v1886, %v1887
    %v1891 = vcombine.low %v1881, %v1888
    %v1893 = vunpack.c.l.s4 1966171168
    %v1894 = vunpack.c.0.s8 %v1893
    %v1895 = vlaneseq
    %v1896 = vshrl.u32 %v1895, 7
    %v1897 = vsub.s32 %v1894, %v1896
    %v1898 = vrot.slane %v1891, %v1897
    %v1900 = vunpack.c.l.s4 1966171168
    %v1901 = vunpack.c.0.s8 %v1900
    %v1902 = vlaneseq
    %v1903 = vshrl.u32 %v1902, 7
    %v1904 = vsub.s32 %v1901, %v1903
    %v1905 = vrot.slane %v1898, %v1904
    %s1907 = scalar_lea.vmem [#allocation2], 49
    %1908 = vst.msk [vmem:[%s1907] ss:$8 sm:$0x3] %vm120, %v1905
    %1909 = vst.msk [vmem:[%s1907] ss:$8 sm:$0x0] %vm120, %v1905
    %s1910 = sld [smem:[#allocation3 + $0xa]]
    %v1911 = vstv %s1910
    %v1912 = vmul.f32 %v1911, %v1188
    %v1913 = vmul.f32 %v1911, %v1189
    %v1914 = vmul.f32 %v1911, %v1190
    %v1915 = vmul.f32 %v1911, %v1191
    %s1916 = sld [smem:[#allocation3 + $0x8a]]
    %v1917 = vstv %s1916
    %v1918 = vmul.f32 %v1917, %v1192
    %v1919 = vmul.f32 %v1917, %v1193
    %v1920 = vmul.f32 %v1917, %v1194
    %v1921 = vmul.f32 %v1917, %v1195
    %v1922 = vadd.f32 %v1912, %v1918
    %v1923 = vadd.f32 %v1913, %v1919
    %v1924 = vadd.f32 %v1914, %v1920
    %v1925 = vadd.f32 %v1915, %v1921
    %s1926 = sld [smem:[#allocation3 + $0x10a]]
    %v1927 = vstv %s1926
    %v1928 = vmul.f32 %v1927, %v1196
    %v1929 = vmul.f32 %v1927, %v1197
    %v1930 = vmul.f32 %v1927, %v1198
    %v1931 = vmul.f32 %v1927, %v1199
    %v1932 = vadd.f32 %v1922, %v1928
    %v1933 = vadd.f32 %v1923, %v1929
    %v1934 = vadd.f32 %v1924, %v1930
    %v1935 = vadd.f32 %v1925, %v1931
    %s1936 = sld [smem:[#allocation3 + $0x18a]]
    %v1937 = vstv %s1936
    %v1938 = vadd.f32 %v1932, %v1937
    %v1939 = vadd.f32 %v1933, %v1937
    %v1940 = vadd.f32 %v1934, %v1937
    %v1941 = vadd.f32 %v1935, %v1937
    %v1942 = vmax.f32 %v1938, 0.0
    %v1943 = vmax.f32 %v1939, 0.0
    %v1944 = vmax.f32 %v1940, 0.0
    %v1945 = vmax.f32 %v1941, 0.0
    %v1946 = vmax.f32 %v1942, %v1944
    %v1947 = vrot.slane %v1946, 4
    %v1948 = vmax.f32 %v1946, %v1947
    %v1949 = vrot.slane %v1948, 2
    %v1950 = vmax.f32 %v1948, %v1949
    %v1951 = vrot.slane %v1950, 1
    %v1952 = vmax.f32 %v1950, %v1951
    %v1953 = vmax.f32 %v1943, %v1945
    %v1954 = vrot.slane %v1953, 4
    %v1955 = vmax.f32 %v1953, %v1954
    %v1956 = vrot.slane %v1955, 2
    %v1957 = vmax.f32 %v1955, %v1956
    %v1958 = vrot.slane %v1957, 1
    %v1959 = vmax.f32 %v1957, %v1958
    %v1962 = vcombine.low %v1952, %v1959
    %v1964 = vunpack.c.l.s4 1966171168
    %v1965 = vunpack.c.0.s8 %v1964
    %v1966 = vlaneseq
    %v1967 = vshrl.u32 %v1966, 7
    %v1968 = vsub.s32 %v1965, %v1967
    %v1969 = vrot.slane %v1962, %v1968
    %v1971 = vunpack.c.l.s4 1966171168
    %v1972 = vunpack.c.0.s8 %v1971
    %v1973 = vlaneseq
    %v1974 = vshrl.u32 %v1973, 7
    %v1975 = vsub.s32 %v1972, %v1974
    %v1976 = vrot.slane %v1969, %v1975
    %s1978 = scalar_lea.vmem [#allocation2], 50
    %1979 = vst.msk [vmem:[%s1978] ss:$8 sm:$0x3] %vm120, %v1976
    %1980 = vst.msk [vmem:[%s1978] ss:$8 sm:$0x0] %vm120, %v1976
    %s1981 = sld [smem:[#allocation3 + $0xb]]
    %v1982 = vstv %s1981
    %v1983 = vmul.f32 %v1982, %v1188
    %v1984 = vmul.f32 %v1982, %v1189
    %v1985 = vmul.f32 %v1982, %v1190
    %v1986 = vmul.f32 %v1982, %v1191
    %s1987 = sld [smem:[#allocation3 + $0x8b]]
    %v1988 = vstv %s1987
    %v1989 = vmul.f32 %v1988, %v1192
    %v1990 = vmul.f32 %v1988, %v1193
    %v1991 = vmul.f32 %v1988, %v1194
    %v1992 = vmul.f32 %v1988, %v1195
    %v1993 = vadd.f32 %v1983, %v1989
    %v1994 = vadd.f32 %v1984, %v1990
    %v1995 = vadd.f32 %v1985, %v1991
    %v1996 = vadd.f32 %v1986, %v1992
    %s1997 = sld [smem:[#allocation3 + $0x10b]]
    %v1998 = vstv %s1997
    %v1999 = vmul.f32 %v1998, %v1196
    %v2000 = vmul.f32 %v1998, %v1197
    %v2001 = vmul.f32 %v1998, %v1198
    %v2002 = vmul.f32 %v1998, %v1199
    %v2003 = vadd.f32 %v1993, %v1999
    %v2004 = vadd.f32 %v1994, %v2000
    %v2005 = vadd.f32 %v1995, %v2001
    %v2006 = vadd.f32 %v1996, %v2002
    %s2007 = sld [smem:[#allocation3 + $0x18b]]
    %v2008 = vstv %s2007
    %v2009 = vadd.f32 %v2003, %v2008
    %v2010 = vadd.f32 %v2004, %v2008
    %v2011 = vadd.f32 %v2005, %v2008
    %v2012 = vadd.f32 %v2006, %v2008
    %v2013 = vmax.f32 %v2009, 0.0
    %v2014 = vmax.f32 %v2010, 0.0
    %v2015 = vmax.f32 %v2011, 0.0
    %v2016 = vmax.f32 %v2012, 0.0
    %v2017 = vmax.f32 %v2013, %v2015
    %v2018 = vrot.slane %v2017, 4
    %v2019 = vmax.f32 %v2017, %v2018
    %v2020 = vrot.slane %v2019, 2
    %v2021 = vmax.f32 %v2019, %v2020
    %v2022 = vrot.slane %v2021, 1
    %v2023 = vmax.f32 %v2021, %v2022
    %v2024 = vmax.f32 %v2014, %v2016
    %v2025 = vrot.slane %v2024, 4
    %v2026 = vmax.f32 %v2024, %v2025
    %v2027 = vrot.slane %v2026, 2
    %v2028 = vmax.f32 %v2026, %v2027
    %v2029 = vrot.slane %v2028, 1
    %v2030 = vmax.f32 %v2028, %v2029
    %v2033 = vcombine.low %v2023, %v2030
    %v2035 = vunpack.c.l.s4 1966171168
    %v2036 = vunpack.c.0.s8 %v2035
    %v2037 = vlaneseq
    %v2038 = vshrl.u32 %v2037, 7
    %v2039 = vsub.s32 %v2036, %v2038
    %v2040 = vrot.slane %v2033, %v2039
    %v2042 = vunpack.c.l.s4 1966171168
    %v2043 = vunpack.c.0.s8 %v2042
    %v2044 = vlaneseq
    %v2045 = vshrl.u32 %v2044, 7
    %v2046 = vsub.s32 %v2043, %v2045
    %v2047 = vrot.slane %v2040, %v2046
    %s2049 = scalar_lea.vmem [#allocation2], 51
    %2050 = vst.msk [vmem:[%s2049] ss:$8 sm:$0x3] %vm120, %v2047
    %2051 = vst.msk [vmem:[%s2049] ss:$8 sm:$0x0] %vm120, %v2047
    %s2052 = sld [smem:[#allocation3 + $0xc]]
    %v2053 = vstv %s2052
    %v2054 = vmul.f32 %v2053, %v1188
    %v2055 = vmul.f32 %v2053, %v1189
    %v2056 = vmul.f32 %v2053, %v1190
    %v2057 = vmul.f32 %v2053, %v1191
    %s2058 = sld [smem:[#allocation3 + $0x8c]]
    %v2059 = vstv %s2058
    %v2060 = vmul.f32 %v2059, %v1192
    %v2061 = vmul.f32 %v2059, %v1193
    %v2062 = vmul.f32 %v2059, %v1194
    %v2063 = vmul.f32 %v2059, %v1195
    %v2064 = vadd.f32 %v2054, %v2060
    %v2065 = vadd.f32 %v2055, %v2061
    %v2066 = vadd.f32 %v2056, %v2062
    %v2067 = vadd.f32 %v2057, %v2063
    %s2068 = sld [smem:[#allocation3 + $0x10c]]
    %v2069 = vstv %s2068
    %v2070 = vmul.f32 %v2069, %v1196
    %v2071 = vmul.f32 %v2069, %v1197
    %v2072 = vmul.f32 %v2069, %v1198
    %v2073 = vmul.f32 %v2069, %v1199
    %v2074 = vadd.f32 %v2064, %v2070
    %v2075 = vadd.f32 %v2065, %v2071
    %v2076 = vadd.f32 %v2066, %v2072
    %v2077 = vadd.f32 %v2067, %v2073
    %s2078 = sld [smem:[#allocation3 + $0x18c]]
    %v2079 = vstv %s2078
    %v2080 = vadd.f32 %v2074, %v2079
    %v2081 = vadd.f32 %v2075, %v2079
    %v2082 = vadd.f32 %v2076, %v2079
    %v2083 = vadd.f32 %v2077, %v2079
    %v2084 = vmax.f32 %v2080, 0.0
    %v2085 = vmax.f32 %v2081, 0.0
    %v2086 = vmax.f32 %v2082, 0.0
    %v2087 = vmax.f32 %v2083, 0.0
    %v2088 = vmax.f32 %v2084, %v2086
    %v2089 = vrot.slane %v2088, 4
    %v2090 = vmax.f32 %v2088, %v2089
    %v2091 = vrot.slane %v2090, 2
    %v2092 = vmax.f32 %v2090, %v2091
    %v2093 = vrot.slane %v2092, 1
    %v2094 = vmax.f32 %v2092, %v2093
    %v2095 = vmax.f32 %v2085, %v2087
    %v2096 = vrot.slane %v2095, 4
    %v2097 = vmax.f32 %v2095, %v2096
    %v2098 = vrot.slane %v2097, 2
    %v2099 = vmax.f32 %v2097, %v2098
    %v2100 = vrot.slane %v2099, 1
    %v2101 = vmax.f32 %v2099, %v2100
    %v2104 = vcombine.low %v2094, %v2101
    %v2106 = vunpack.c.l.s4 1966171168
    %v2107 = vunpack.c.0.s8 %v2106
    %v2108 = vlaneseq
    %v2109 = vshrl.u32 %v2108, 7
    %v2110 = vsub.s32 %v2107, %v2109
    %v2111 = vrot.slane %v2104, %v2110
    %v2113 = vunpack.c.l.s4 1966171168
    %v2114 = vunpack.c.0.s8 %v2113
    %v2115 = vlaneseq
    %v2116 = vshrl.u32 %v2115, 7
    %v2117 = vsub.s32 %v2114, %v2116
    %v2118 = vrot.slane %v2111, %v2117
    %s2120 = scalar_lea.vmem [#allocation2], 52
    %2121 = vst.msk [vmem:[%s2120] ss:$8 sm:$0x3] %vm120, %v2118
    %2122 = vst.msk [vmem:[%s2120] ss:$8 sm:$0x0] %vm120, %v2118
    %s2123 = sld [smem:[#allocation3 + $0xd]]
    %v2124 = vstv %s2123
    %v2125 = vmul.f32 %v2124, %v1188
    %v2126 = vmul.f32 %v2124, %v1189
    %v2127 = vmul.f32 %v2124, %v1190
    %v2128 = vmul.f32 %v2124, %v1191
    %s2129 = sld [smem:[#allocation3 + $0x8d]]
    %v2130 = vstv %s2129
    %v2131 = vmul.f32 %v2130, %v1192
    %v2132 = vmul.f32 %v2130, %v1193
    %v2133 = vmul.f32 %v2130, %v1194
    %v2134 = vmul.f32 %v2130, %v1195
    %v2135 = vadd.f32 %v2125, %v2131
    %v2136 = vadd.f32 %v2126, %v2132
    %v2137 = vadd.f32 %v2127, %v2133
    %v2138 = vadd.f32 %v2128, %v2134
    %s2139 = sld [smem:[#allocation3 + $0x10d]]
    %v2140 = vstv %s2139
    %v2141 = vmul.f32 %v2140, %v1196
    %v2142 = vmul.f32 %v2140, %v1197
    %v2143 = vmul.f32 %v2140, %v1198
    %v2144 = vmul.f32 %v2140, %v1199
    %v2145 = vadd.f32 %v2135, %v2141
    %v2146 = vadd.f32 %v2136, %v2142
    %v2147 = vadd.f32 %v2137, %v2143
    %v2148 = vadd.f32 %v2138, %v2144
    %s2149 = sld [smem:[#allocation3 + $0x18d]]
    %v2150 = vstv %s2149
    %v2151 = vadd.f32 %v2145, %v2150
    %v2152 = vadd.f32 %v2146, %v2150
    %v2153 = vadd.f32 %v2147, %v2150
    %v2154 = vadd.f32 %v2148, %v2150
    %v2155 = vmax.f32 %v2151, 0.0
    %v2156 = vmax.f32 %v2152, 0.0
    %v2157 = vmax.f32 %v2153, 0.0
    %v2158 = vmax.f32 %v2154, 0.0
    %v2159 = vmax.f32 %v2155, %v2157
    %v2160 = vrot.slane %v2159, 4
    %v2161 = vmax.f32 %v2159, %v2160
    %v2162 = vrot.slane %v2161, 2
    %v2163 = vmax.f32 %v2161, %v2162
    %v2164 = vrot.slane %v2163, 1
    %v2165 = vmax.f32 %v2163, %v2164
    %v2166 = vmax.f32 %v2156, %v2158
    %v2167 = vrot.slane %v2166, 4
    %v2168 = vmax.f32 %v2166, %v2167
    %v2169 = vrot.slane %v2168, 2
    %v2170 = vmax.f32 %v2168, %v2169
    %v2171 = vrot.slane %v2170, 1
    %v2172 = vmax.f32 %v2170, %v2171
    %v2175 = vcombine.low %v2165, %v2172
    %v2177 = vunpack.c.l.s4 1966171168
    %v2178 = vunpack.c.0.s8 %v2177
    %v2179 = vlaneseq
    %v2180 = vshrl.u32 %v2179, 7
    %v2181 = vsub.s32 %v2178, %v2180
    %v2182 = vrot.slane %v2175, %v2181
    %v2184 = vunpack.c.l.s4 1966171168
    %v2185 = vunpack.c.0.s8 %v2184
    %v2186 = vlaneseq
    %v2187 = vshrl.u32 %v2186, 7
    %v2188 = vsub.s32 %v2185, %v2187
    %v2189 = vrot.slane %v2182, %v2188
    %s2191 = scalar_lea.vmem [#allocation2], 53
    %2192 = vst.msk [vmem:[%s2191] ss:$8 sm:$0x3] %vm120, %v2189
    %2193 = vst.msk [vmem:[%s2191] ss:$8 sm:$0x0] %vm120, %v2189
    %s2194 = sld [smem:[#allocation3 + $0xe]]
    %v2195 = vstv %s2194
    %v2196 = vmul.f32 %v2195, %v1188
    %v2197 = vmul.f32 %v2195, %v1189
    %v2198 = vmul.f32 %v2195, %v1190
    %v2199 = vmul.f32 %v2195, %v1191
    %s2200 = sld [smem:[#allocation3 + $0x8e]]
    %v2201 = vstv %s2200
    %v2202 = vmul.f32 %v2201, %v1192
    %v2203 = vmul.f32 %v2201, %v1193
    %v2204 = vmul.f32 %v2201, %v1194
    %v2205 = vmul.f32 %v2201, %v1195
    %v2206 = vadd.f32 %v2196, %v2202
    %v2207 = vadd.f32 %v2197, %v2203
    %v2208 = vadd.f32 %v2198, %v2204
    %v2209 = vadd.f32 %v2199, %v2205
    %s2210 = sld [smem:[#allocation3 + $0x10e]]
    %v2211 = vstv %s2210
    %v2212 = vmul.f32 %v2211, %v1196
    %v2213 = vmul.f32 %v2211, %v1197
    %v2214 = vmul.f32 %v2211, %v1198
    %v2215 = vmul.f32 %v2211, %v1199
    %v2216 = vadd.f32 %v2206, %v2212
    %v2217 = vadd.f32 %v2207, %v2213
    %v2218 = vadd.f32 %v2208, %v2214
    %v2219 = vadd.f32 %v2209, %v2215
    %s2220 = sld [smem:[#allocation3 + $0x18e]]
    %v2221 = vstv %s2220
    %v2222 = vadd.f32 %v2216, %v2221
    %v2223 = vadd.f32 %v2217, %v2221
    %v2224 = vadd.f32 %v2218, %v2221
    %v2225 = vadd.f32 %v2219, %v2221
    %v2226 = vmax.f32 %v2222, 0.0
    %v2227 = vmax.f32 %v2223, 0.0
    %v2228 = vmax.f32 %v2224, 0.0
    %v2229 = vmax.f32 %v2225, 0.0
    %v2230 = vmax.f32 %v2226, %v2228
    %v2231 = vrot.slane %v2230, 4
    %v2232 = vmax.f32 %v2230, %v2231
    %v2233 = vrot.slane %v2232, 2
    %v2234 = vmax.f32 %v2232, %v2233
    %v2235 = vrot.slane %v2234, 1
    %v2236 = vmax.f32 %v2234, %v2235
    %v2237 = vmax.f32 %v2227, %v2229
    %v2238 = vrot.slane %v2237, 4
    %v2239 = vmax.f32 %v2237, %v2238
    %v2240 = vrot.slane %v2239, 2
    %v2241 = vmax.f32 %v2239, %v2240
    %v2242 = vrot.slane %v2241, 1
    %v2243 = vmax.f32 %v2241, %v2242
    %v2246 = vcombine.low %v2236, %v2243
    %v2248 = vunpack.c.l.s4 1966171168
    %v2249 = vunpack.c.0.s8 %v2248
    %v2250 = vlaneseq
    %v2251 = vshrl.u32 %v2250, 7
    %v2252 = vsub.s32 %v2249, %v2251
    %v2253 = vrot.slane %v2246, %v2252
    %v2255 = vunpack.c.l.s4 1966171168
    %v2256 = vunpack.c.0.s8 %v2255
    %v2257 = vlaneseq
    %v2258 = vshrl.u32 %v2257, 7
    %v2259 = vsub.s32 %v2256, %v2258
    %v2260 = vrot.slane %v2253, %v2259
    %s2262 = scalar_lea.vmem [#allocation2], 54
    %2263 = vst.msk [vmem:[%s2262] ss:$8 sm:$0x3] %vm120, %v2260
    %2264 = vst.msk [vmem:[%s2262] ss:$8 sm:$0x0] %vm120, %v2260
    %s2265 = sld [smem:[#allocation3 + $0xf]]
    %v2266 = vstv %s2265
    %v2267 = vmul.f32 %v2266, %v1188
    %v2268 = vmul.f32 %v2266, %v1189
    %v2269 = vmul.f32 %v2266, %v1190
    %v2270 = vmul.f32 %v2266, %v1191
    %s2271 = sld [smem:[#allocation3 + $0x8f]]
    %v2272 = vstv %s2271
    %v2273 = vmul.f32 %v2272, %v1192
    %v2274 = vmul.f32 %v2272, %v1193
    %v2275 = vmul.f32 %v2272, %v1194
    %v2276 = vmul.f32 %v2272, %v1195
    %v2277 = vadd.f32 %v2267, %v2273
    %v2278 = vadd.f32 %v2268, %v2274
    %v2279 = vadd.f32 %v2269, %v2275
    %v2280 = vadd.f32 %v2270, %v2276
    %s2281 = sld [smem:[#allocation3 + $0x10f]]
    %v2282 = vstv %s2281
    %v2283 = vmul.f32 %v2282, %v1196
    %v2284 = vmul.f32 %v2282, %v1197
    %v2285 = vmul.f32 %v2282, %v1198
    %v2286 = vmul.f32 %v2282, %v1199
    %v2287 = vadd.f32 %v2277, %v2283
    %v2288 = vadd.f32 %v2278, %v2284
    %v2289 = vadd.f32 %v2279, %v2285
    %v2290 = vadd.f32 %v2280, %v2286
    %s2291 = sld [smem:[#allocation3 + $0x18f]]
    %v2292 = vstv %s2291
    %v2293 = vadd.f32 %v2287, %v2292
    %v2294 = vadd.f32 %v2288, %v2292
    %v2295 = vadd.f32 %v2289, %v2292
    %v2296 = vadd.f32 %v2290, %v2292
    %v2297 = vmax.f32 %v2293, 0.0
    %v2298 = vmax.f32 %v2294, 0.0
    %v2299 = vmax.f32 %v2295, 0.0
    %v2300 = vmax.f32 %v2296, 0.0
    %v2301 = vmax.f32 %v2297, %v2299
    %v2302 = vrot.slane %v2301, 4
    %v2303 = vmax.f32 %v2301, %v2302
    %v2304 = vrot.slane %v2303, 2
    %v2305 = vmax.f32 %v2303, %v2304
    %v2306 = vrot.slane %v2305, 1
    %v2307 = vmax.f32 %v2305, %v2306
    %v2308 = vmax.f32 %v2298, %v2300
    %v2309 = vrot.slane %v2308, 4
    %v2310 = vmax.f32 %v2308, %v2309
    %v2311 = vrot.slane %v2310, 2
    %v2312 = vmax.f32 %v2310, %v2311
    %v2313 = vrot.slane %v2312, 1
    %v2314 = vmax.f32 %v2312, %v2313
    %v2317 = vcombine.low %v2307, %v2314
    %v2319 = vunpack.c.l.s4 1966171168
    %v2320 = vunpack.c.0.s8 %v2319
    %v2321 = vlaneseq
    %v2322 = vshrl.u32 %v2321, 7
    %v2323 = vsub.s32 %v2320, %v2322
    %v2324 = vrot.slane %v2317, %v2323
    %v2326 = vunpack.c.l.s4 1966171168
    %v2327 = vunpack.c.0.s8 %v2326
    %v2328 = vlaneseq
    %v2329 = vshrl.u32 %v2328, 7
    %v2330 = vsub.s32 %v2327, %v2329
    %v2331 = vrot.slane %v2324, %v2330
    %s2333 = scalar_lea.vmem [#allocation2], 55
    %2334 = vst.msk [vmem:[%s2333] ss:$8 sm:$0x3] %vm120, %v2331
    %2335 = vst.msk [vmem:[%s2333] ss:$8 sm:$0x0] %vm120, %v2331
    %v2336 = vld [vmem:[#allocation2] sm:$0xff]
    %v2337 = vld [vmem:[#allocation2 + $0x8] sm:$0xff]
    %v2338 = vld [vmem:[#allocation2 + $0x10] sm:$0xff]
    %v2339 = vld [vmem:[#allocation2 + $0x18] sm:$0xff]
    %v2340 = vld [vmem:[#allocation2 + $0x20] sm:$0xff]
    %v2341 = vld [vmem:[#allocation2 + $0x28] sm:$0xff]
    %v2342 = vld [vmem:[#allocation2 + $0x30] sm:$0xff]
    %v2343 = vld [vmem:[#allocation2 + $0x38] sm:$0xff]
    %v2344 = vld [vmem:[%s4] sm:$0xff]
    %v2345 = vld [vmem:[%s4 + $0x8] sm:$0xff]
    %v2346 = vld [vmem:[%s4 + $0x10] sm:$0xff]
    %v2347 = vld [vmem:[%s4 + $0x18] sm:$0xff]
    %v2348 = vld [vmem:[%s4] sm:$0x1]
    %v2349 = vld [vmem:[%s2] sm:$0xff]
    %v2350 = vld [vmem:[%s2 + $0x8] sm:$0xff]
    %v2351 = vld [vmem:[%s2 + $0x10] sm:$0xff]
    %v2352 = vld [vmem:[%s2 + $0x18] sm:$0xff]
    %2354 = vset.pattern.permute.xlu0 0
    %2355 = vperm.xlu0 %2354, %v2344
    %v2356 = vpop.permute.xlu0 %2355
    %2359 = vset.pattern.permute.xlu0 0
    %2360 = vperm.xlu0 %2359, %v2345
    %v2361 = vpop.permute.xlu0 %2360
    %2364 = vset.pattern.permute.xlu0 0
    %2365 = vperm.xlu0 %2364, %v2346
    %v2366 = vpop.permute.xlu0 %2365
    %2369 = vset.pattern.permute.xlu0 0
    %2370 = vperm.xlu0 %2369, %v2347
    %v2371 = vpop.permute.xlu0 %2370
    %vm2373 = vcmask 261120
    %v2375 = vsel %vm2373, %v2349, 0
    %v2378 = vsel %vm2373, %v2350, 0
    %v2381 = vsel %vm2373, %v2351, 0
    %v2384 = vsel %vm2373, %v2352, 0
    %2386 = vmatprep.subr.mxu0 0.0
    %2387 = vmatpush1.msra.mxu0 0.0
    %2388 = vmatprep.subr.mxu0 0.0
    %2389 = vmatpush1.msra.mxu0 0.0
    %2390 = vmatprep.subr.mxu0 0.0
    %2391 = vmatpush1.msra.mxu0 0.0
    %2392 = vmatprep.subr.mxu0 0.0
    %2393 = vmatpush1.msra.mxu0 0.0
    %2394 = vmatprep.subr.mxu0 0.0
    %2395 = vmatpush1.msra.mxu0 0.0
    %2396 = vmatprep.subr.mxu0 0.0
    %2397 = vmatpush1.msra.mxu0 0.0
    %2398 = vmatprep.subr.mxu0 0.0
    %2399 = vmatpush1.msra.mxu0 0.0
    %2400 = vmatprep.subr.mxu0 0.0
    %2401 = vmatpush1.msra.mxu0 0.0
    %2402 = vmatprep.subr.mxu0 0.0
    %2403 = vmatpush1.msra.mxu0 0.0
    %2404 = vmatprep.subr.mxu0 0.0
    %2405 = vmatpush1.msra.mxu0 0.0
    %2406 = vmatprep.subr.mxu0 0.0
    %2407 = vmatpush1.msra.mxu0 0.0
    %2408 = vmatprep.subr.mxu0 0.0
    %2409 = vmatpush1.msra.mxu0 0.0
    %2410 = vmatprep.subr.mxu0 %v2343
    %2411 = vmatpush1.msra.mxu0 %v2342
    %2412 = vmatprep.subr.mxu0 %v2341
    %2413 = vmatpush1.msra.mxu0 %v2340
    %2414 = vmatprep.subr.mxu0 %v2339
    %2415 = vmatpush1.msra.mxu0 %v2338
    %2416 = vmatprep.subr.mxu0 %v2337
    %2417 = vmatpush1.msra.mxu0 %v2336
    %2418 = vmatprep.subr.mxu0 0.0
    %2419 = vmatpush2.msra.mxu0 0.0
    %2420 = vmatprep.subr.mxu0 0.0
    %2421 = vmatpush2.msra.mxu0 0.0
    %2422 = vmatprep.subr.mxu0 0.0
    %2423 = vmatpush2.msra.mxu0 0.0
    %2424 = vmatprep.subr.mxu0 0.0
    %2425 = vmatpush2.msra.mxu0 0.0
    %2426 = vmatprep.subr.mxu0 0.0
    %2427 = vmatpush2.msra.mxu0 0.0
    %2428 = vmatprep.subr.mxu0 0.0
    %2429 = vmatpush2.msra.mxu0 0.0
    %2430 = vmatprep.subr.mxu0 0.0
    %2431 = vmatpush2.msra.mxu0 0.0
    %2432 = vmatprep.subr.mxu0 0.0
    %2433 = vmatpush2.msra.mxu0 0.0
    %2434 = vmatprep.subr.mxu0 0.0
    %2435 = vmatpush2.msra.mxu0 0.0
    %2436 = vmatprep.subr.mxu0 0.0
    %2437 = vmatpush2.msra.mxu0 0.0
    %2438 = vmatprep.subr.mxu0 0.0
    %2439 = vmatpush2.msra.mxu0 0.0
    %2440 = vmatprep.subr.mxu0 0.0
    %2441 = vmatpush2.msra.mxu0 0.0
    %2442 = vmatprep.subr.mxu0 0.0
    %2443 = vmatpush2.msra.mxu0 0.0
    %2444 = vmatprep.subr.mxu0 0.0
    %2445 = vmatpush2.msra.mxu0 0.0
    %2446 = vmatprep.subr.mxu0 0.0
    %2447 = vmatpush2.msra.mxu0 0.0
    %2448 = vmatprep.subr.mxu0 0.0
    %2449 = vmatpush2.msra.mxu0 0.0
    %2450 = vmatprep.mubr.f32.mxu0 0.0
    %2451 = vmatmul.mubr.f32.gmra.mxu0 %v2375
    %v2452 = vpop.f32.mrf.mxu0
    %v2453 = vadd.f32 %v2356, %v2452
    %v2454 = vpop.f32.mrf.mxu0
    %v2455 = vadd.f32 %v2356, %v2454
    %2456 = vmatprep.mubr.f32.mxu0 0.0
    %2457 = vmatmul.mubr.f32.gmra.mxu0 %v2378
    %v2458 = vpop.f32.mrf.mxu0
    %v2459 = vadd.f32 %v2361, %v2458
    %v2460 = vpop.f32.mrf.mxu0
    %v2461 = vadd.f32 %v2361, %v2460
    %2462 = vmatprep.mubr.f32.mxu0 0.0
    %2463 = vmatmul.mubr.f32.gmra.mxu0 %v2381
    %v2464 = vpop.f32.mrf.mxu0
    %v2465 = vadd.f32 %v2366, %v2464
    %v2466 = vpop.f32.mrf.mxu0
    %v2467 = vadd.f32 %v2366, %v2466
    %2468 = vmatprep.mubr.f32.mxu0 0.0
    %2469 = vmatmul.mubr.f32.gmra.mxu0 %v2384
    %v2470 = vpop.f32.mrf.mxu0
    %v2471 = vadd.f32 %v2371, %v2470
    %v2472 = vpop.f32.mrf.mxu0
    %v2473 = vadd.f32 %v2371, %v2472
    %2474 = vdwg.mxu0
    %v2475 = vmax.f32 %v2453, 0.0
    %v2476 = vmax.f32 %v2455, 0.0
    %v2477 = vmax.f32 %v2459, 0.0
    %v2478 = vmax.f32 %v2461, 0.0
    %v2479 = vmax.f32 %v2465, 0.0
    %v2480 = vmax.f32 %v2467, 0.0
    %v2481 = vmax.f32 %v2471, 0.0
    %v2482 = vmax.f32 %v2473, 0.0
    %v2483 = vld [vmem:[%s3] sm:$0xff]
    %v2484 = vld [vmem:[%s3 + $0x8] sm:$0xff]
    %2485 = vset.pattern.permute.xlu0 1
    %2486 = vperm.xlu0 %2485, %v2344
    %v2487 = vpop.permute.xlu0 %2486
    %2489 = vset.pattern.permute.xlu0 1
    %2490 = vperm.xlu0 %2489, %v2345
    %v2491 = vpop.permute.xlu0 %2490
    %v2494 = vsel %vm2373, %v2483, 0
    %v2497 = vsel %vm2373, %v2484, 0
    %2499 = vmatprep.subr.mxu0 0.0
    %2500 = vmatpush1.msra.mxu0 0.0
    %2501 = vmatprep.subr.mxu0 0.0
    %2502 = vmatpush1.msra.mxu0 0.0
    %2503 = vmatprep.subr.mxu0 0.0
    %2504 = vmatpush1.msra.mxu0 0.0
    %2505 = vmatprep.subr.mxu0 0.0
    %2506 = vmatpush1.msra.mxu0 0.0
    %2507 = vmatprep.subr.mxu0 0.0
    %2508 = vmatpush1.msra.mxu0 0.0
    %2509 = vmatprep.subr.mxu0 0.0
    %2510 = vmatpush1.msra.mxu0 0.0
    %2511 = vmatprep.subr.mxu0 0.0
    %2512 = vmatpush1.msra.mxu0 0.0
    %2513 = vmatprep.subr.mxu0 0.0
    %2514 = vmatpush1.msra.mxu0 0.0
    %2515 = vmatprep.subr.mxu0 0.0
    %2516 = vmatpush1.msra.mxu0 0.0
    %2517 = vmatprep.subr.mxu0 0.0
    %2518 = vmatpush1.msra.mxu0 0.0
    %2519 = vmatprep.subr.mxu0 0.0
    %2520 = vmatpush1.msra.mxu0 0.0
    %2521 = vmatprep.subr.mxu0 0.0
    %2522 = vmatpush1.msra.mxu0 0.0
    %2523 = vmatprep.subr.mxu0 %v2482
    %2524 = vmatpush1.msra.mxu0 %v2481
    %2525 = vmatprep.subr.mxu0 %v2480
    %2526 = vmatpush1.msra.mxu0 %v2479
    %2527 = vmatprep.subr.mxu0 %v2478
    %2528 = vmatpush1.msra.mxu0 %v2477
    %2529 = vmatprep.subr.mxu0 %v2476
    %2530 = vmatpush1.msra.mxu0 %v2475
    %2531 = vmatprep.subr.mxu0 0.0
    %2532 = vmatpush2.msra.mxu0 0.0
    %2533 = vmatprep.subr.mxu0 0.0
    %2534 = vmatpush2.msra.mxu0 0.0
    %2535 = vmatprep.subr.mxu0 0.0
    %2536 = vmatpush2.msra.mxu0 0.0
    %2537 = vmatprep.subr.mxu0 0.0
    %2538 = vmatpush2.msra.mxu0 0.0
    %2539 = vmatprep.subr.mxu0 0.0
    %2540 = vmatpush2.msra.mxu0 0.0
    %2541 = vmatprep.subr.mxu0 0.0
    %2542 = vmatpush2.msra.mxu0 0.0
    %2543 = vmatprep.subr.mxu0 0.0
    %2544 = vmatpush2.msra.mxu0 0.0
    %2545 = vmatprep.subr.mxu0 0.0
    %2546 = vmatpush2.msra.mxu0 0.0
    %2547 = vmatprep.subr.mxu0 0.0
    %2548 = vmatpush2.msra.mxu0 0.0
    %2549 = vmatprep.subr.mxu0 0.0
    %2550 = vmatpush2.msra.mxu0 0.0
    %2551 = vmatprep.subr.mxu0 0.0
    %2552 = vmatpush2.msra.mxu0 0.0
    %2553 = vmatprep.subr.mxu0 0.0
    %2554 = vmatpush2.msra.mxu0 0.0
    %2555 = vmatprep.subr.mxu0 0.0
    %2556 = vmatpush2.msra.mxu0 0.0
    %2557 = vmatprep.subr.mxu0 0.0
    %2558 = vmatpush2.msra.mxu0 0.0
    %2559 = vmatprep.subr.mxu0 0.0
    %2560 = vmatpush2.msra.mxu0 0.0
    %2561 = vmatprep.subr.mxu0 0.0
    %2562 = vmatpush2.msra.mxu0 0.0
    %2563 = vmatprep.mubr.f32.mxu0 0.0
    %2564 = vmatmul.mubr.f32.gmra.mxu0 %v2494
    %v2565 = vpop.f32.mrf.mxu0
    %v2566 = vadd.f32 %v2487, %v2565
    %v2567 = vpop.f32.mrf.mxu0
    %v2568 = vadd.f32 %v2487, %v2567
    %2569 = vmatprep.mubr.f32.mxu0 0.0
    %2570 = vmatmul.mubr.f32.gmra.mxu0 %v2497
    %v2571 = vpop.f32.mrf.mxu0
    %v2572 = vadd.f32 %v2491, %v2571
    %v2573 = vpop.f32.mrf.mxu0
    %v2574 = vadd.f32 %v2491, %v2573
    %2575 = vdwg.mxu0
    %v2576 = vmax.f32 %v2566, 0.0
    %v2577 = vmax.f32 %v2568, 0.0
    %v2578 = vmax.f32 %v2572, 0.0
    %v2579 = vmax.f32 %v2574, 0.0
    %2580 = vset.pattern.permute.xlu0 2
    %2581 = vperm.xlu0 %2580, %v2344
    %v2582 = vpop.permute.xlu0 %2581
    %2584 = vset.pattern.permute.xlu0 2
    %2585 = vperm.xlu0 %2584, %v2345
    %v2586 = vpop.permute.xlu0 %2585
    %v2588 = vmul.f32 %v2576, %v2582
    %v2589 = vmul.f32 %v2577, %v2582
    %v2590 = vmul.f32 %v2578, %v2586
    %v2591 = vmul.f32 %v2579, %v2586
    %v2592 = vadd.f32 %v2588, %v2590
    %v2593 = vrot.slane %v2592, 4
    %v2594 = vadd.f32 %v2592, %v2593
    %v2595 = vrot.slane %v2594, 2
    %v2596 = vadd.f32 %v2594, %v2595
    %v2597 = vrot.slane %v2596, 1
    %v2598 = vadd.f32 %v2596, %v2597
    %v2599 = vadd.f32 %v2589, %v2591
    %v2600 = vrot.slane %v2599, 4
    %v2601 = vadd.f32 %v2599, %v2600
    %v2602 = vrot.slane %v2601, 2
    %v2603 = vadd.f32 %v2601, %v2602
    %v2604 = vrot.slane %v2603, 1
    %v2605 = vadd.f32 %v2603, %v2604
    %2607 = vset.pattern.permute.xlu0 3
    %2608 = vperm.xlu0 %2607, %v2348
    %v2609 = vpop.permute.xlu0 %2608
    %v2611 = vadd.f32 %v2598, %v2609
    %v2612 = vadd.f32 %v2605, %v2609
    %v2613 = vmax.f32 %v2611, 0.0
    %v2614 = vmax.f32 %v2612, 0.0
    %v2615 = vmul.f32 %v2475, %v2475
    %v2616 = vmul.f32 %v2476, %v2476
    %v2617 = vmul.f32 %v2477, %v2477
    %v2618 = vmul.f32 %v2478, %v2478
    %v2619 = vmul.f32 %v2479, %v2479
    %v2620 = vmul.f32 %v2480, %v2480
    %v2621 = vmul.f32 %v2481, %v2481
    %v2622 = vmul.f32 %v2482, %v2482
    %v2623 = vadd.f32 %v2615, %v2617
    %v2624 = vadd.f32 %v2623, %v2619
    %v2625 = vadd.f32 %v2624, %v2621
    %v2626 = vrot.slane %v2625, 4
    %v2627 = vadd.f32 %v2625, %v2626
    %v2628 = vrot.slane %v2627, 2
    %v2629 = vadd.f32 %v2627, %v2628
    %v2630 = vrot.slane %v2629, 1
    %v2631 = vadd.f32 %v2629, %v2630
    %v2632 = vadd.f32 %v2616, %v2618
    %v2633 = vadd.f32 %v2632, %v2620
    %v2634 = vadd.f32 %v2633, %v2622
    %v2635 = vrot.slane %v2634, 4
    %v2636 = vadd.f32 %v2634, %v2635
    %v2637 = vrot.slane %v2636, 2
    %v2638 = vadd.f32 %v2636, %v2637
    %v2639 = vrot.slane %v2638, 1
    %v2640 = vadd.f32 %v2638, %v2639
    %v2641 = vmax.f32 %v2631, 1e-24
    %v2642 = vmax.f32 %v2640, 1e-24
    %v2643 = vrsqrt.pop %v2641
    %v2644 = vrsqrt.pop %v2642
    %v2645 = vmul.f32 %v2475, %v2643
    %v2646 = vmul.f32 %v2476, %v2644
    %v2647 = vmul.f32 %v2477, %v2643
    %v2648 = vmul.f32 %v2478, %v2644
    %v2649 = vmul.f32 %v2479, %v2643
    %v2650 = vmul.f32 %v2480, %v2644
    %v2651 = vmul.f32 %v2481, %v2643
    %v2652 = vmul.f32 %v2482, %v2644
    %2653 = vst [vmem:[%s5] sm:$0xff] %v2645
    %2654 = vst [vmem:[%s5 + $0x8] sm:$0xff] %v2646
    %2655 = vst [vmem:[%s5 + $0x10] sm:$0xff] %v2647
    %2656 = vst [vmem:[%s5 + $0x18] sm:$0xff] %v2648
    %2657 = vst [vmem:[%s5 + $0x20] sm:$0xff] %v2649
    %2658 = vst [vmem:[%s5 + $0x28] sm:$0xff] %v2650
    %2659 = vst [vmem:[%s5 + $0x30] sm:$0xff] %v2651
    %2660 = vst [vmem:[%s5 + $0x38] sm:$0xff] %v2652
    %v2661 = vlaneseq
    %v2662 = vshrl.u32 %v2661, 7
    %v2663 = vadd.s32 %v2662, 8
    %v2664 = vadd.s32 %v2662, 16
    %v2665 = vadd.s32 %v2662, 24
    %v2666 = vadd.s32 %v2662, 32
    %v2667 = vadd.s32 %v2662, 40
    %v2668 = vadd.s32 %v2662, 48
    %v2669 = vadd.s32 %v2662, 56
    %v2670 = vadd.s32 %v2662, 64
    %v2671 = vadd.s32 %v2662, 72
    %v2672 = vadd.s32 %v2662, 80
    %v2673 = vadd.s32 %v2662, 88
    %v2674 = vadd.s32 %v2662, 96
    %v2675 = vadd.s32 %v2662, 104
    %v2676 = vadd.s32 %v2662, 112
    %v2677 = vadd.s32 %v2662, 120
    %v2678 = vadd.s32 %v2662, 128
    %v2679 = vadd.s32 %v2662, 136
    %v2680 = vadd.s32 %v2662, 144
    %v2681 = vadd.s32 %v2662, 152
    %v2682 = vadd.s32 %v2662, 160
    %v2683 = vadd.s32 %v2662, 168
    %v2684 = vadd.s32 %v2662, 176
    %v2685 = vadd.s32 %v2662, 184
    %v2686 = vadd.s32 %v2662, 192
    %v2687 = vadd.s32 %v2662, 200
    %v2688 = vadd.s32 %v2662, 208
    %v2689 = vadd.s32 %v2662, 216
    %v2690 = vadd.s32 %v2662, 224
    %v2691 = vadd.s32 %v2662, 232
    %v2692 = vadd.s32 %v2662, 240
    %v2693 = vadd.s32 %v2662, 248
    %v2694 = vlaneseq
    %v2695 = vand.u32 %v2694, 127
    %v2696 = vmul.u32 %v2695, 32
    %vm2697 = vcmp.ge.s32.totalorder %v2662, %v2696
    %vm2698 = vcmp.ge.s32.totalorder %v2663, %v2696
    %vm2699 = vcmp.ge.s32.totalorder %v2664, %v2696
    %vm2700 = vcmp.ge.s32.totalorder %v2665, %v2696
    %vm2701 = vcmp.ge.s32.totalorder %v2666, %v2696
    %vm2702 = vcmp.ge.s32.totalorder %v2667, %v2696
    %vm2703 = vcmp.ge.s32.totalorder %v2668, %v2696
    %vm2704 = vcmp.ge.s32.totalorder %v2669, %v2696
    %vm2705 = vcmp.ge.s32.totalorder %v2670, %v2696
    %vm2706 = vcmp.ge.s32.totalorder %v2671, %v2696
    %vm2707 = vcmp.ge.s32.totalorder %v2672, %v2696
    %vm2708 = vcmp.ge.s32.totalorder %v2673, %v2696
    %vm2709 = vcmp.ge.s32.totalorder %v2674, %v2696
    %vm2710 = vcmp.ge.s32.totalorder %v2675, %v2696
    %vm2711 = vcmp.ge.s32.totalorder %v2676, %v2696
    %vm2712 = vcmp.ge.s32.totalorder %v2677, %v2696
    %vm2713 = vcmp.ge.s32.totalorder %v2678, %v2696
    %vm2714 = vcmp.ge.s32.totalorder %v2679, %v2696
    %vm2715 = vcmp.ge.s32.totalorder %v2680, %v2696
    %vm2716 = vcmp.ge.s32.totalorder %v2681, %v2696
    %vm2717 = vcmp.ge.s32.totalorder %v2682, %v2696
    %vm2718 = vcmp.ge.s32.totalorder %v2683, %v2696
    %vm2719 = vcmp.ge.s32.totalorder %v2684, %v2696
    %vm2720 = vcmp.ge.s32.totalorder %v2685, %v2696
    %vm2721 = vcmp.ge.s32.totalorder %v2686, %v2696
    %vm2722 = vcmp.ge.s32.totalorder %v2687, %v2696
    %vm2723 = vcmp.ge.s32.totalorder %v2688, %v2696
    %vm2724 = vcmp.ge.s32.totalorder %v2689, %v2696
    %vm2725 = vcmp.ge.s32.totalorder %v2690, %v2696
    %vm2726 = vcmp.ge.s32.totalorder %v2691, %v2696
    %vm2727 = vcmp.ge.s32.totalorder %v2692, %v2696
    %vm2728 = vcmp.ge.s32.totalorder %v2693, %v2696
    %v2729 = vadd.s32 %v2695, 1
    %v2730 = vmul.u32 %v2729, 32
    %vm2731 = vcmp.lt.s32.totalorder %v2662, %v2730
    %vm2732 = vcmp.lt.s32.totalorder %v2663, %v2730
    %vm2733 = vcmp.lt.s32.totalorder %v2664, %v2730
    %vm2734 = vcmp.lt.s32.totalorder %v2665, %v2730
    %vm2735 = vcmp.lt.s32.totalorder %v2666, %v2730
    %vm2736 = vcmp.lt.s32.totalorder %v2667, %v2730
    %vm2737 = vcmp.lt.s32.totalorder %v2668, %v2730
    %vm2738 = vcmp.lt.s32.totalorder %v2669, %v2730
    %vm2739 = vcmp.lt.s32.totalorder %v2670, %v2730
    %vm2740 = vcmp.lt.s32.totalorder %v2671, %v2730
    %vm2741 = vcmp.lt.s32.totalorder %v2672, %v2730
    %vm2742 = vcmp.lt.s32.totalorder %v2673, %v2730
    %vm2743 = vcmp.lt.s32.totalorder %v2674, %v2730
    %vm2744 = vcmp.lt.s32.totalorder %v2675, %v2730
    %vm2745 = vcmp.lt.s32.totalorder %v2676, %v2730
    %vm2746 = vcmp.lt.s32.totalorder %v2677, %v2730
    %vm2747 = vcmp.lt.s32.totalorder %v2678, %v2730
    %vm2748 = vcmp.lt.s32.totalorder %v2679, %v2730
    %vm2749 = vcmp.lt.s32.totalorder %v2680, %v2730
    %vm2750 = vcmp.lt.s32.totalorder %v2681, %v2730
    %vm2751 = vcmp.lt.s32.totalorder %v2682, %v2730
    %vm2752 = vcmp.lt.s32.totalorder %v2683, %v2730
    %vm2753 = vcmp.lt.s32.totalorder %v2684, %v2730
    %vm2754 = vcmp.lt.s32.totalorder %v2685, %v2730
    %vm2755 = vcmp.lt.s32.totalorder %v2686, %v2730
    %vm2756 = vcmp.lt.s32.totalorder %v2687, %v2730
    %vm2757 = vcmp.lt.s32.totalorder %v2688, %v2730
    %vm2758 = vcmp.lt.s32.totalorder %v2689, %v2730
    %vm2759 = vcmp.lt.s32.totalorder %v2690, %v2730
    %vm2760 = vcmp.lt.s32.totalorder %v2691, %v2730
    %vm2761 = vcmp.lt.s32.totalorder %v2692, %v2730
    %vm2762 = vcmp.lt.s32.totalorder %v2693, %v2730
    %vm2763 = vmand %vm2697, %vm2731
    %vm2764 = vmand %vm2698, %vm2732
    %vm2765 = vmand %vm2699, %vm2733
    %vm2766 = vmand %vm2700, %vm2734
    %vm2767 = vmand %vm2701, %vm2735
    %vm2768 = vmand %vm2702, %vm2736
    %vm2769 = vmand %vm2703, %vm2737
    %vm2770 = vmand %vm2704, %vm2738
    %vm2771 = vmand %vm2705, %vm2739
    %vm2772 = vmand %vm2706, %vm2740
    %vm2773 = vmand %vm2707, %vm2741
    %vm2774 = vmand %vm2708, %vm2742
    %vm2775 = vmand %vm2709, %vm2743
    %vm2776 = vmand %vm2710, %vm2744
    %vm2777 = vmand %vm2711, %vm2745
    %vm2778 = vmand %vm2712, %vm2746
    %vm2779 = vmand %vm2713, %vm2747
    %vm2780 = vmand %vm2714, %vm2748
    %vm2781 = vmand %vm2715, %vm2749
    %vm2782 = vmand %vm2716, %vm2750
    %vm2783 = vmand %vm2717, %vm2751
    %vm2784 = vmand %vm2718, %vm2752
    %vm2785 = vmand %vm2719, %vm2753
    %vm2786 = vmand %vm2720, %vm2754
    %vm2787 = vmand %vm2721, %vm2755
    %vm2788 = vmand %vm2722, %vm2756
    %vm2789 = vmand %vm2723, %vm2757
    %vm2790 = vmand %vm2724, %vm2758
    %vm2791 = vmand %vm2725, %vm2759
    %vm2792 = vmand %vm2726, %vm2760
    %vm2793 = vmand %vm2727, %vm2761
    %vm2794 = vmand %vm2728, %vm2762
    %v2795 = vsel %vm2763, 0.03125, 0.0
    %v2796 = vsel %vm2764, 0.03125, 0.0
    %v2797 = vsel %vm2765, 0.03125, 0.0
    %v2798 = vsel %vm2766, 0.03125, 0.0
    %v2799 = vsel %vm2767, 0.03125, 0.0
    %v2800 = vsel %vm2768, 0.03125, 0.0
    %v2801 = vsel %vm2769, 0.03125, 0.0
    %v2802 = vsel %vm2770, 0.03125, 0.0
    %v2803 = vsel %vm2771, 0.03125, 0.0
    %v2804 = vsel %vm2772, 0.03125, 0.0
    %v2805 = vsel %vm2773, 0.03125, 0.0
    %v2806 = vsel %vm2774, 0.03125, 0.0
    %v2807 = vsel %vm2775, 0.03125, 0.0
    %v2808 = vsel %vm2776, 0.03125, 0.0
    %v2809 = vsel %vm2777, 0.03125, 0.0
    %v2810 = vsel %vm2778, 0.03125, 0.0
    %v2811 = vsel %vm2779, 0.03125, 0.0
    %v2812 = vsel %vm2780, 0.03125, 0.0
    %v2813 = vsel %vm2781, 0.03125, 0.0
    %v2814 = vsel %vm2782, 0.03125, 0.0
    %v2815 = vsel %vm2783, 0.03125, 0.0
    %v2816 = vsel %vm2784, 0.03125, 0.0
    %v2817 = vsel %vm2785, 0.03125, 0.0
    %v2818 = vsel %vm2786, 0.03125, 0.0
    %v2819 = vsel %vm2787, 0.03125, 0.0
    %v2820 = vsel %vm2788, 0.03125, 0.0
    %v2821 = vsel %vm2789, 0.03125, 0.0
    %v2822 = vsel %vm2790, 0.03125, 0.0
    %v2823 = vsel %vm2791, 0.03125, 0.0
    %v2824 = vsel %vm2792, 0.03125, 0.0
    %v2825 = vsel %vm2793, 0.03125, 0.0
    %v2826 = vsel %vm2794, 0.03125, 0.0
    %v2827 = vlaneseq
    %v2828 = vshrl.u32 %v2827, 7
    %v2829 = vsub.s32 0, %v2828
    %v2830 = vrot.slane %v2613, %v2829
    %v2831 = vlaneseq
    %v2832 = vshrl.u32 %v2831, 7
    %v2833 = vsub.s32 0, %v2832
    %v2834 = vrot.slane %v2614, %v2833
    %v2835 = vmul.f32 %v2475, %v2830
    %v2836 = vmul.f32 %v2476, %v2834
    %v2837 = vmul.f32 %v2477, %v2830
    %v2838 = vmul.f32 %v2478, %v2834
    %v2839 = vmul.f32 %v2479, %v2830
    %v2840 = vmul.f32 %v2480, %v2834
    %v2841 = vmul.f32 %v2481, %v2830
    %v2842 = vmul.f32 %v2482, %v2834
    %2843 = vmatprep.subr.mxu0 0.0
    %2844 = vmatpush1.msra.mxu0 %v2810
    %2845 = vmatprep.subr.mxu0 0.0
    %2846 = vmatpush1.msra.mxu0 %v2809
    %2847 = vmatprep.subr.mxu0 0.0
    %2848 = vmatpush1.msra.mxu0 %v2808
    %2849 = vmatprep.subr.mxu0 0.0
    %2850 = vmatpush1.msra.mxu0 %v2807
    %2851 = vmatprep.subr.mxu0 0.0
    %2852 = vmatpush1.msra.mxu0 %v2806
    %2853 = vmatprep.subr.mxu0 0.0
    %2854 = vmatpush1.msra.mxu0 %v2805
    %2855 = vmatprep.subr.mxu0 0.0
    %2856 = vmatpush1.msra.mxu0 %v2804
    %2857 = vmatprep.subr.mxu0 0.0
    %2858 = vmatpush1.msra.mxu0 %v2803
    %2859 = vmatprep.subr.mxu0 0.0
    %2860 = vmatpush1.msra.mxu0 %v2802
    %2861 = vmatprep.subr.mxu0 0.0
    %2862 = vmatpush1.msra.mxu0 %v2801
    %2863 = vmatprep.subr.mxu0 0.0
    %2864 = vmatpush1.msra.mxu0 %v2800
    %2865 = vmatprep.subr.mxu0 0.0
    %2866 = vmatpush1.msra.mxu0 %v2799
    %2867 = vmatprep.subr.mxu0 0.0
    %2868 = vmatpush1.msra.mxu0 %v2798
    %2869 = vmatprep.subr.mxu0 0.0
    %2870 = vmatpush1.msra.mxu0 %v2797
    %2871 = vmatprep.subr.mxu0 0.0
    %2872 = vmatpush1.msra.mxu0 %v2796
    %2873 = vmatprep.subr.mxu0 0.0
    %2874 = vmatpush1.msra.mxu0 %v2795
    %2875 = vmatprep.subr.mxu0 0.0
    %2876 = vmatpush2.msra.mxu0 %v2826
    %2877 = vmatprep.subr.mxu0 0.0
    %2878 = vmatpush2.msra.mxu0 %v2825
    %2879 = vmatprep.subr.mxu0 0.0
    %2880 = vmatpush2.msra.mxu0 %v2824
    %2881 = vmatprep.subr.mxu0 0.0
    %2882 = vmatpush2.msra.mxu0 %v2823
    %2883 = vmatprep.subr.mxu0 0.0
    %2884 = vmatpush2.msra.mxu0 %v2822
    %2885 = vmatprep.subr.mxu0 0.0
    %2886 = vmatpush2.msra.mxu0 %v2821
    %2887 = vmatprep.subr.mxu0 0.0
    %2888 = vmatpush2.msra.mxu0 %v2820
    %2889 = vmatprep.subr.mxu0 0.0
    %2890 = vmatpush2.msra.mxu0 %v2819
    %2891 = vmatprep.subr.mxu0 0.0
    %2892 = vmatpush2.msra.mxu0 %v2818
    %2893 = vmatprep.subr.mxu0 0.0
    %2894 = vmatpush2.msra.mxu0 %v2817
    %2895 = vmatprep.subr.mxu0 0.0
    %2896 = vmatpush2.msra.mxu0 %v2816
    %2897 = vmatprep.subr.mxu0 0.0
    %2898 = vmatpush2.msra.mxu0 %v2815
    %2899 = vmatprep.subr.mxu0 0.0
    %2900 = vmatpush2.msra.mxu0 %v2814
    %2901 = vmatprep.subr.mxu0 0.0
    %2902 = vmatpush2.msra.mxu0 %v2813
    %2903 = vmatprep.subr.mxu0 0.0
    %2904 = vmatpush2.msra.mxu0 %v2812
    %2905 = vmatprep.subr.mxu0 0.0
    %2906 = vmatpush2.msra.mxu0 %v2811
    %2907 = vmatprep.mubr.f32.mxu0 %v2836
    %2908 = vmatmul.mubr.f32.gmra.mxu0 %v2835
    %v2909 = vpop.f32.mrf.mxu0
    %v2910 = vadd.f32 0.0, %v2909
    %v2911 = vpop.f32.mrf.mxu0
    %2912 = vmatprep.mubr.f32.mxu0 %v2838
    %2913 = vmatmul.mubr.f32.gmra.mxu0 %v2837
    %v2914 = vpop.f32.mrf.mxu0
    %v2915 = vadd.f32 0.0, %v2914
    %v2916 = vpop.f32.mrf.mxu0
    %2917 = vmatprep.mubr.f32.mxu0 %v2840
    %2918 = vmatmul.mubr.f32.gmra.mxu0 %v2839
    %v2919 = vpop.f32.mrf.mxu0
    %v2920 = vadd.f32 0.0, %v2919
    %v2921 = vpop.f32.mrf.mxu0
    %2922 = vmatprep.mubr.f32.mxu0 %v2842
    %2923 = vmatmul.mubr.f32.gmra.mxu0 %v2841
    %v2924 = vpop.f32.mrf.mxu0
    %v2925 = vadd.f32 0.0, %v2924
    %v2926 = vpop.f32.mrf.mxu0
    %2927 = vdwg.mxu0
    %v2928 = vmul.f32 %v2910, %v2910
    %v2929 = vmul.f32 %v2915, %v2915
    %v2930 = vmul.f32 %v2920, %v2920
    %v2931 = vmul.f32 %v2925, %v2925
    %vm2932 = vcmask 64512
    %v2933 = vsel %vm2932, %v2928, 0.0
    %v2934 = vsel %vm2932, %v2929, 0.0
    %v2935 = vadd.f32 %v2933, %v2934
    %v2936 = vsel %vm2932, %v2930, 0.0
    %v2937 = vadd.f32 %v2935, %v2936
    %v2938 = vsel %vm2932, %v2931, 0.0
    %v2939 = vadd.f32 %v2937, %v2938
    %v2940 = vrot.slane %v2939, 4
    %v2941 = vadd.f32 %v2939, %v2940
    %v2942 = vrot.slane %v2941, 2
    %v2943 = vadd.f32 %v2941, %v2942
    %v2944 = vrot.slane %v2943, 1
    %v2945 = vadd.f32 %v2943, %v2944
    %v2946 = vmax.f32 %v2945, 1e-24
    %v2947 = vrsqrt.pop %v2946
    %v2948 = vmul.f32 %v2910, %v2947
    %v2949 = vmul.f32 %v2915, %v2947
    %v2950 = vmul.f32 %v2920, %v2947
    %v2951 = vmul.f32 %v2925, %v2947
    %2952 = vst.msk [vmem:[%s6] sm:$0xff] %vm2932, %v2948
    %2953 = vst.msk [vmem:[%s6 + $0x8] sm:$0xff] %vm2932, %v2949
    %2954 = vst.msk [vmem:[%s6 + $0x10] sm:$0xff] %vm2932, %v2950
    %2955 = vst.msk [vmem:[%s6 + $0x18] sm:$0xff] %vm2932, %v2951
    // Predicated region
    $region26: #{mini_spin_net_forward.1} parent=1 // pred_check
      _
    $region27: #{mini_spin_net_forward.1} parent=1 // pred_check_branch
      %2957 = sbr.rel (0) target = $region29
    $region28: #{mini_spin_net_forward.1} parent=1 // pred_region
      _
    $region29: #{mini_spin_net_forward.1} parent=1 // pred_fallthru
      _
    // Predicated region
    $region30: #{mini_spin_net_forward.1} parent=1 // pred_check
      _
    $region31: #{mini_spin_net_forward.1} parent=1 // pred_check_branch
      %2959 = sbr.rel (0) target = $region33
    $region32: #{mini_spin_net_forward.1} parent=1 // pred_region
      _
    $region33: #{mini_spin_net_forward.1} parent=1 // pred_fallthru
      _
    // Predicated region
    $region34: #{mini_spin_net_forward.1} parent=1 // pred_check
      _
    $region35: #{mini_spin_net_forward.1} parent=1 // pred_check_branch
      %2961 = sbr.rel (0) target = $region37
    $region36: #{mini_spin_net_forward.1} parent=1 // pred_region
      _
    $region37: #{mini_spin_net_forward.1} parent=1 // pred_fallthru
      _
    // Predicated region
    $region38: #{mini_spin_net_forward.1} parent=1 // pred_check
      _
    $region39: #{mini_spin_net_forward.1} parent=1 // pred_check_branch
      %2963 = sbr.rel (0) target = $region41
    $region40: #{mini_spin_net_forward.1} parent=1 // pred_region
      _
    $region41: #{mini_spin_net_forward.1} parent=1 // pred_fallthru
      _
    %2964 = vsyncpa [#allocation4], 1

</llo_original>
